<compile_context>
chip_gen: v5e
topology: v5e:2x2
jax: 0.10.0
libtpu: 0.0.40
codegen_flags: <defaults>
</compile_context>

<pallas_src>
import functools

import jax
import jax.numpy as jnp
from jax import lax
from jax.experimental import pallas as pl
from jax.experimental.pallas import tpu as pltpu


# ----------------------------------------------------------------------------
# Fused kernel: stacked GRU layers + attention pooling + fc head.
# ----------------------------------------------------------------------------
def _fused_gru_kernel(num_layers, T, BT, *refs):
    idx = 0
    x_ref = refs[idx]; idx += 1                       # (T*BT, I) time-major rows
    layer_refs = refs[idx:idx + 4 * num_layers]; idx += 4 * num_layers
    wW_ref, bW_ref, u_ref, fcw_ref, fcb_ref = refs[idx:idx + 5]; idx += 5
    out_ref = refs[idx]; idx += 1                     # (BT, Fp) lane-dense
    gxr, gxz, gxn, rnn_scr, logit_scr = refs[idx:]    # VMEM scratch

    f32 = jnp.float32
    H = rnn_scr.shape[-1]
    unroll = True if T <= 16 else 8                   # full unroll for short seqs

    def hoisted_input_gates(inp2d, wih_ref, bgx_ref):
        # One big (T*BT, Din) x (Din, H) matmul per gate, all timesteps at once.
        gxr[...] = jnp.dot(inp2d, wih_ref[0], preferred_element_type=f32) + bgx_ref[0]
        gxz[...] = jnp.dot(inp2d, wih_ref[1], preferred_element_type=f32) + bgx_ref[1]
        gxn[...] = jnp.dot(inp2d, wih_ref[2], preferred_element_type=f32) + bgx_ref[2]

    def run_recurrence(whh_ref, bhn_ref):
        w_r = whh_ref[0]       # (H, H)   hoisted loads, loop-invariant
        w_z = whh_ref[1]
        w_n = whh_ref[2]
        bhn = bhn_ref[...]     # (1, H)

        def step(t, h):
            sl = pl.ds(pl.multiple_of(t * BT, BT), BT)
            gh_r = jnp.dot(h, w_r, preferred_element_type=f32)
            gh_z = jnp.dot(h, w_z, preferred_element_type=f32)
            gh_n = jnp.dot(h, w_n, preferred_element_type=f32)
            r = jax.nn.sigmoid(gxr[sl, :] + gh_r)
            z = jax.nn.sigmoid(gxz[sl, :] + gh_z)
            n = jnp.tanh(gxn[sl, :] + r * (gh_n + bhn))
            h_new = n + z * (h - n)            # == (1-z)*n + z*h
            rnn_scr[sl, :] = h_new
            return h_new

        lax.fori_loop(0, T, step, jnp.zeros((BT, H), f32), unroll=unroll)

    # ---- stacked GRU layers (all VMEM-resident) ----
    layer_input = x_ref[...]
    for l in range(num_layers):
        wih_ref, whh_ref, bgx_ref, bhn_ref = layer_refs[4 * l:4 * l + 4]
        hoisted_input_gates(layer_input, wih_ref, bgx_ref)
        run_recurrence(whh_ref, bhn_ref)
        if l + 1 < num_layers:
            layer_input = rnn_scr[...]   # loaded before the next layer overwrites it
        # TODO(synk): inter-layer dropout omitted (dropout=0.0 default / eval mode).

    # ---- attention pooling over time + fc head ----
    rnn_all = rnn_scr[...]                                          # (T*BT, H)
    laten = jnp.tanh(jnp.dot(rnn_all, wW_ref[...],
                             preferred_element_type=f32) + bW_ref[...])
    logit_scr[...] = jnp.dot(laten, u_ref[...], preferred_element_type=f32)

    def max_step(t, m):
        sl = pl.ds(pl.multiple_of(t * BT, BT), BT)
        return jnp.maximum(m, logit_scr[sl, :])

    m = lax.fori_loop(0, T, max_step,
                      jnp.full((BT, 1), -jnp.inf, f32), unroll=unroll)

    def acc_step(t, carry):
        s, att = carry
        sl = pl.ds(pl.multiple_of(t * BT, BT), BT)
        e = jnp.exp(logit_scr[sl, :] - m)
        return s + e, att + e * rnn_scr[sl, :]

    s, att = lax.fori_loop(
        0, T, acc_step,
        (jnp.zeros((BT, 1), f32), jnp.zeros((BT, H), f32)), unroll=unroll)
    att = att / s                                                   # softmax-weighted sum

    last = rnn_scr[pl.ds((T - 1) * BT, BT), :]                      # rnn_out[:, -1]
    out = (jnp.dot(last, fcw_ref[0], preferred_element_type=f32)    # cat split -> 2 dots
           + jnp.dot(att, fcw_ref[1], preferred_element_type=f32)
           + fcb_ref[...])
    out_ref[...] = out.astype(out_ref.dtype)


# ----------------------------------------------------------------------------
# One-time weight re-pack (PyTorch layout -> kernel-friendly layout).
# ----------------------------------------------------------------------------
def prepare_params(params):
    prep = {"layers": []}
    for layer in params["rnn"]:
        w_ih, w_hh = layer["w_ih"], layer["w_hh"]       # (3H, Din), (3H, H)
        b_ih, b_hh = layer["b_ih"], layer["b_hh"]       # (3H,), (3H,)
        H = w_hh.shape[1]
        din = w_ih.shape[1]
        wih_g = jnp.transpose(w_ih.reshape(3, H, din), (0, 2, 1))   # (3, Din, H)
        whh_g = jnp.transpose(w_hh.reshape(3, H, H), (0, 2, 1))     # (3, H, H)
        b_ih3 = b_ih.reshape(3, 1, H)
        b_hh3 = b_hh.reshape(3, 1, H)
        # folded biases for the hoisted input gates: r,z get b_ih+b_hh, n only b_ih
        bgx = jnp.stack([b_ih3[0] + b_hh3[0],
                         b_ih3[1] + b_hh3[1],
                         b_ih3[2]], axis=0)                          # (3, 1, H)
        bhn = b_hh3[2]                                               # (1, H)
        prep["layers"].append({"wih": wih_g, "whh": whh_g, "bgx": bgx, "bhn": bhn})
    H = params["W_w"].shape[0]
    prep["wW"] = params["W_w"].T                       # (H, H)
    prep["bW"] = params["W_b"].reshape(1, H)           # (1, H)
    prep["u"] = params["u_w"].T                        # (H, 1)
    prep["fcw"] = params["fc_w"].T.reshape(2, H, -1)   # (2, H, F): [0]=last, [1]=att
    prep["fcb"] = params["fc_b"].reshape(1, -1)        # (1, F)
    return prep


# ----------------------------------------------------------------------------
# Full model forward (single pallas_call, batch-tiled "parallel" grid).
# ----------------------------------------------------------------------------
def gru_model_forward(x_bti, prep):
    """x_bti: (B, T, input_size) -> (B, num_factors)."""
    B, T, I = x_bti.shape
    H = prep["wW"].shape[0]
    F = prep["fcb"].shape[-1]
    L = len(prep["layers"])

    # Batch tiling: sublane-aligned tile; large batches split across grid steps
    # (and megacore TCs via "parallel" dimension semantics).
    Bp = max(8, ((B + 7) // 8) * 8)
    if Bp <= 128:
        BT = Bp
    else:
        Bp = ((B + 127) // 128) * 128
        BT = 128
    nBT = Bp // BT

    # Lane-dense fc head: pad num_factors to a multiple of 128 (unmasked stores).
    Fp = max(128, ((F + 127) // 128) * 128)
    fcw = jnp.pad(prep["fcw"], ((0, 0), (0, 0), (0, Fp - F)))
    fcb = jnp.pad(prep["fcb"], ((0, 0), (0, Fp - F)))

    # Host-side repack of x: per batch tile, time-major rows (t*BT + j).
    x_tbi = jnp.swapaxes(x_bti.astype(jnp.float32), 0, 1)           # (T, B, I)
    if Bp != B:
        x_tbi = jnp.pad(x_tbi, ((0, 0), (0, Bp - B), (0, 0)))
    x3 = (x_tbi.reshape(T, nBT, BT, I)
               .transpose(1, 0, 2, 3)
               .reshape(nBT, T * BT, I))                            # (nBT, T*BT, I)

    weight_args = []
    for lyr in prep["layers"]:
        weight_args += [lyr["wih"], lyr["whh"], lyr["bgx"], lyr["bhn"]]
    weight_args += [prep["wW"], prep["bW"], prep["u"], fcw, fcb]

    vmem = pltpu.MemorySpace.VMEM
    in_specs = ([pl.BlockSpec((None, T * BT, I), lambda b: (b, 0, 0))]   # x tile
                + [pl.BlockSpec(memory_space=vmem)] * len(weight_args))  # whole weights
    out_specs = pl.BlockSpec((BT, Fp), lambda b: (b, 0))

    out_pad = pl.pallas_call(
        functools.partial(_fused_gru_kernel, L, T, BT),
        out_shape=jax.ShapeDtypeStruct((Bp, Fp), jnp.float32),
        grid=(nBT,),
        in_specs=in_specs,
        out_specs=out_specs,
        scratch_shapes=[
            pltpu.VMEM((T * BT, H), jnp.float32),      # gx_r (all timesteps)
            pltpu.VMEM((T * BT, H), jnp.float32),      # gx_z
            pltpu.VMEM((T * BT, H), jnp.float32),      # gx_n
            pltpu.VMEM((T * BT, H), jnp.float32),      # rnn outputs (reused per layer)
            pltpu.VMEM((T * BT, 1), jnp.float32),      # attention logits
        ],
        compiler_params=pltpu.CompilerParams(
            dimension_semantics=("parallel",)),
    )(x3, *weight_args)
    return out_pad[:B, :F]


# ----------------------------------------------------------------------------
# Pure-JAX reference (correctness check)
# ----------------------------------------------------------------------------
def gru_model_reference(x_bti, params):
    inp = x_bti
    B = x_bti.shape[0]
    for layer in params["rnn"]:
        w_ih, w_hh, b_ih, b_hh = (layer["w_ih"], layer["w_hh"],
                                  layer["b_ih"], layer["b_hh"])
        H = w_hh.shape[1]

        def step(h, x_t):
            gx = x_t @ w_ih.T + b_ih
            gh = h @ w_hh.T + b_hh
            r = jax.nn.sigmoid(gx[:, :H] + gh[:, :H])
            z = jax.nn.sigmoid(gx[:, H:2 * H] + gh[:, H:2 * H])
            n = jnp.tanh(gx[:, 2 * H:] + r * gh[:, 2 * H:])
            h_new = (1.0 - z) * n + z * h
            return h_new, h_new

        h0 = jnp.zeros((B, H), jnp.float32)
        _, outs = lax.scan(step, h0, jnp.swapaxes(inp, 0, 1))
        inp = jnp.swapaxes(outs, 0, 1)
    rnn_out = inp                                        # (B, T, H)
    last = rnn_out[:, -1]
    laten = jnp.tanh(rnn_out @ params["W_w"].T + params["W_b"])
    scores = jax.nn.softmax(laten @ params["u_w"].T, axis=1)
    att = jnp.sum(rnn_out * scores, axis=1)
    cat = jnp.concatenate([last, att], axis=1)
    return cat @ params["fc_w"].T + params["fc_b"]


# ----------------------------------------------------------------------------
# Deterministic parameter init (PyTorch-style uniform(-1/sqrt(H), 1/sqrt(H)))
# ----------------------------------------------------------------------------
def init_params(key, input_size, hidden_size, num_layers, num_factors):
    k = 1.0 / jnp.sqrt(hidden_size)
    params = {"rnn": []}
    for layer in range(num_layers):
        in_sz = input_size if layer == 0 else hidden_size
        key, k1, k2, k3, k4 = jax.random.split(key, 5)
        params["rnn"].append({
            "w_ih": jax.random.uniform(k1, (3 * hidden_size, in_sz), jnp.float32, -k, k),
            "w_hh": jax.random.uniform(k2, (3 * hidden_size, hidden_size), jnp.float32, -k, k),
            "b_ih": jax.random.uniform(k3, (3 * hidden_size,), jnp.float32, -k, k),
            "b_hh": jax.random.uniform(k4, (3 * hidden_size,), jnp.float32, -k, k),
        })
    key, k1, k2, k3, k4, k5 = jax.random.split(key, 6)
    params["W_w"] = jax.random.uniform(k1, (hidden_size, hidden_size), jnp.float32, -k, k)
    params["W_b"] = jax.random.uniform(k2, (hidden_size,), jnp.float32, -k, k)
    params["u_w"] = jax.random.uniform(k3, (1, hidden_size), jnp.float32, -k, k)
    kf = 1.0 / jnp.sqrt(2 * hidden_size)
    params["fc_w"] = jax.random.uniform(k4, (num_factors, 2 * hidden_size), jnp.float32, -kf, kf)
    params["fc_b"] = jax.random.uniform(k5, (num_factors,), jnp.float32, -kf, kf)
    return params


if __name__ == "__main__":
    B, T, INPUT_SIZE = 4, 8, 16
    HIDDEN, NUM_LAYERS, NUM_FACTORS = 32, 2, 5

    key = jax.random.PRNGKey(0)
    key, pkey, xkey = jax.random.split(key, 3)
    params = init_params(pkey, INPUT_SIZE, HIDDEN, NUM_LAYERS, NUM_FACTORS)
    x = jax.random.normal(xkey, (B, T, INPUT_SIZE), jnp.float32)

    prep = prepare_params(params)              # one-time weight re-pack
    fwd = jax.jit(gru_model_forward)

    out = jax.block_until_ready(fwd(x, prep))
    ref = jax.block_until_ready(gru_model_reference(x, params))

    assert out.shape == (B, NUM_FACTORS), out.shape
    assert jnp.allclose(out, ref, atol=1e-3, rtol=1e-3), (out, ref)
    print("KERNEL_OK")
</pallas_src>

<mosaic_0001>
module attributes {stable_mosaic.version = 11 : i64} {
  func.func @_fused_gru_kernel(%arg0: i32, %arg1: memref<1x64x16xf32, #tpu.memory_space<vmem>>, %arg2: memref<3x16x32xf32, #tpu.memory_space<vmem>>, %arg3: memref<3x32x32xf32, #tpu.memory_space<vmem>>, %arg4: memref<3x1x32xf32, #tpu.memory_space<vmem>>, %arg5: memref<1x32xf32, #tpu.memory_space<vmem>>, %arg6: memref<3x32x32xf32, #tpu.memory_space<vmem>>, %arg7: memref<3x32x32xf32, #tpu.memory_space<vmem>>, %arg8: memref<3x1x32xf32, #tpu.memory_space<vmem>>, %arg9: memref<1x32xf32, #tpu.memory_space<vmem>>, %arg10: memref<32x32xf32, #tpu.memory_space<vmem>>, %arg11: memref<1x32xf32, #tpu.memory_space<vmem>>, %arg12: memref<32x1xf32, #tpu.memory_space<vmem>>, %arg13: memref<2x32x128xf32, #tpu.memory_space<vmem>>, %arg14: memref<1x128xf32, #tpu.memory_space<vmem>>, %arg15: memref<8x128xf32, #tpu.memory_space<vmem>>, %arg16: memref<64x32xf32, #tpu.memory_space<vmem>>, %arg17: memref<64x32xf32, #tpu.memory_space<vmem>>, %arg18: memref<64x32xf32, #tpu.memory_space<vmem>>, %arg19: memref<64x32xf32, #tpu.memory_space<vmem>>, %arg20: memref<64x1xf32, #tpu.memory_space<vmem>>) attributes {dimension_semantics = [#tpu.dimension_semantics<parallel>], iteration_bounds = array<i64: 1>, scalar_prefetch = 0 : i64, scratch_operands = 5 : i64, tpu.core_type = #tpu.core_type<tc>, window_params = [{transform_indices = @transform_0, window_bounds = array<i64: 1, 64, 16>}, {pipeline_mode = #tpu.pipeline_mode<synchronous>, transform_indices = @transform_1, window_bounds = array<i64: 3, 16, 32>}, {pipeline_mode = #tpu.pipeline_mode<synchronous>, transform_indices = @transform_2, window_bounds = array<i64: 3, 32, 32>}, {pipeline_mode = #tpu.pipeline_mode<synchronous>, transform_indices = @transform_3, window_bounds = array<i64: 3, 1, 32>}, {pipeline_mode = #tpu.pipeline_mode<synchronous>, transform_indices = @transform_4, window_bounds = array<i64: 1, 32>}, {pipeline_mode = #tpu.pipeline_mode<synchronous>, transform_indices = @transform_5, window_bounds = array<i64: 3, 32, 32>}, {pipeline_mode = #tpu.pipeline_mode<synchronous>, transform_indices = @transform_6, window_bounds = array<i64: 3, 32, 32>}, {pipeline_mode = #tpu.pipeline_mode<synchronous>, transform_indices = @transform_7, window_bounds = array<i64: 3, 1, 32>}, {pipeline_mode = #tpu.pipeline_mode<synchronous>, transform_indices = @transform_8, window_bounds = array<i64: 1, 32>}, {pipeline_mode = #tpu.pipeline_mode<synchronous>, transform_indices = @transform_9, window_bounds = array<i64: 32, 32>}, {pipeline_mode = #tpu.pipeline_mode<synchronous>, transform_indices = @transform_10, window_bounds = array<i64: 1, 32>}, {pipeline_mode = #tpu.pipeline_mode<synchronous>, transform_indices = @transform_11, window_bounds = array<i64: 32, 1>}, {pipeline_mode = #tpu.pipeline_mode<synchronous>, transform_indices = @transform_12, window_bounds = array<i64: 2, 32, 128>}, {pipeline_mode = #tpu.pipeline_mode<synchronous>, transform_indices = @transform_13, window_bounds = array<i64: 1, 128>}, {transform_indices = @transform_14, window_bounds = array<i64: 8, 128>}]} {
    %c0 = arith.constant 0 : index
    %c0_0 = arith.constant 0 : index
    %c0_1 = arith.constant 0 : index
    %0 = vector.load %arg1[%c0, %c0_0, %c0_1] : memref<1x64x16xf32, #tpu.memory_space<vmem>>, vector<1x64x16xf32>
    %1 = vector.shape_cast %0 : vector<1x64x16xf32> to vector<64x16xf32>
    %c0_2 = arith.constant 0 : index
    %c0_3 = arith.constant 0 : index
    %c0_4 = arith.constant 0 : index
    %2 = vector.load %arg2[%c0_2, %c0_3, %c0_4] : memref<3x16x32xf32, #tpu.memory_space<vmem>>, vector<1x16x32xf32>
    %3 = vector.shape_cast %2 : vector<1x16x32xf32> to vector<16x32xf32>
    %cst = arith.constant dense<0.000000e+00> : vector<64x32xf32>
    %4 = tpu.matmul %1, %3, %cst {dimension_numbers = #tpu.dot_dimension_numbers<[1], [0], [0], [1], [0, 0, 1, 1], [], []>} : vector<64x16xf32>, vector<16x32xf32>, vector<64x32xf32> -> vector<64x32xf32>
    %c0_5 = arith.constant 0 : index
    %c0_6 = arith.constant 0 : index
    %c0_7 = arith.constant 0 : index
    %5 = vector.load %arg4[%c0_5, %c0_6, %c0_7] : memref<3x1x32xf32, #tpu.memory_space<vmem>>, vector<1x1x32xf32>
    %6 = vector.shape_cast %5 : vector<1x1x32xf32> to vector<1x32xf32>
    %7 = vector.broadcast %6 : vector<1x32xf32> to vector<64x32xf32>
    %8 = arith.addf %4, %7 : vector<64x32xf32>
    %c0_8 = arith.constant 0 : index
    %c0_9 = arith.constant 0 : index
    %9 = vector.load %arg16[%c0_8, %c0_9] : memref<64x32xf32, #tpu.memory_space<vmem>>, vector<64x32xf32>
    tpu.vector_store %arg16[%c0_8, %c0_9], %8 {strides = array<i32>} : memref<64x32xf32, #tpu.memory_space<vmem>>, vector<64x32xf32>,
    %c1 = arith.constant 1 : index
    %c0_10 = arith.constant 0 : index
    %c0_11 = arith.constant 0 : index
    %10 = vector.load %arg2[%c1, %c0_10, %c0_11] : memref<3x16x32xf32, #tpu.memory_space<vmem>>, vector<1x16x32xf32>
    %11 = vector.shape_cast %10 : vector<1x16x32xf32> to vector<16x32xf32>
    %cst_12 = arith.constant dense<0.000000e+00> : vector<64x32xf32>
    %12 = tpu.matmul %1, %11, %cst_12 {dimension_numbers = #tpu.dot_dimension_numbers<[1], [0], [0], [1], [0, 0, 1, 1], [], []>} : vector<64x16xf32>, vector<16x32xf32>, vector<64x32xf32> -> vector<64x32xf32>
    %c1_13 = arith.constant 1 : index
    %c0_14 = arith.constant 0 : index
    %c0_15 = arith.constant 0 : index
    %13 = vector.load %arg4[%c1_13, %c0_14, %c0_15] : memref<3x1x32xf32, #tpu.memory_space<vmem>>, vector<1x1x32xf32>
    %14 = vector.shape_cast %13 : vector<1x1x32xf32> to vector<1x32xf32>
    %15 = vector.broadcast %14 : vector<1x32xf32> to vector<64x32xf32>
    %16 = arith.addf %12, %15 : vector<64x32xf32>
    %c0_16 = arith.constant 0 : index
    %c0_17 = arith.constant 0 : index
    %17 = vector.load %arg17[%c0_16, %c0_17] : memref<64x32xf32, #tpu.memory_space<vmem>>, vector<64x32xf32>
    tpu.vector_store %arg17[%c0_16, %c0_17], %16 {strides = array<i32>} : memref<64x32xf32, #tpu.memory_space<vmem>>, vector<64x32xf32>,
    %c2 = arith.constant 2 : index
    %c0_18 = arith.constant 0 : index
    %c0_19 = arith.constant 0 : index
    %18 = vector.load %arg2[%c2, %c0_18, %c0_19] : memref<3x16x32xf32, #tpu.memory_space<vmem>>, vector<1x16x32xf32>
    %19 = vector.shape_cast %18 : vector<1x16x32xf32> to vector<16x32xf32>
    %cst_20 = arith.constant dense<0.000000e+00> : vector<64x32xf32>
    %20 = tpu.matmul %1, %19, %cst_20 {dimension_numbers = #tpu.dot_dimension_numbers<[1], [0], [0], [1], [0, 0, 1, 1], [], []>} : vector<64x16xf32>, vector<16x32xf32>, vector<64x32xf32> -> vector<64x32xf32>
    %c2_21 = arith.constant 2 : index
    %c0_22 = arith.constant 0 : index
    %c0_23 = arith.constant 0 : index
    %21 = vector.load %arg4[%c2_21, %c0_22, %c0_23] : memref<3x1x32xf32, #tpu.memory_space<vmem>>, vector<1x1x32xf32>
    %22 = vector.shape_cast %21 : vector<1x1x32xf32> to vector<1x32xf32>
    %23 = vector.broadcast %22 : vector<1x32xf32> to vector<64x32xf32>
    %24 = arith.addf %20, %23 : vector<64x32xf32>
    %c0_24 = arith.constant 0 : index
    %c0_25 = arith.constant 0 : index
    %25 = vector.load %arg18[%c0_24, %c0_25] : memref<64x32xf32, #tpu.memory_space<vmem>>, vector<64x32xf32>
    tpu.vector_store %arg18[%c0_24, %c0_25], %24 {strides = array<i32>} : memref<64x32xf32, #tpu.memory_space<vmem>>, vector<64x32xf32>,
    %c0_26 = arith.constant 0 : index
    %c0_27 = arith.constant 0 : index
    %c0_28 = arith.constant 0 : index
    %26 = vector.load %arg3[%c0_26, %c0_27, %c0_28] : memref<3x32x32xf32, #tpu.memory_space<vmem>>, vector<1x32x32xf32>
    %27 = vector.shape_cast %26 : vector<1x32x32xf32> to vector<32x32xf32>
    %c1_29 = arith.constant 1 : index
    %c0_30 = arith.constant 0 : index
    %c0_31 = arith.constant 0 : index
    %28 = vector.load %arg3[%c1_29, %c0_30, %c0_31] : memref<3x32x32xf32, #tpu.memory_space<vmem>>, vector<1x32x32xf32>
    %29 = vector.shape_cast %28 : vector<1x32x32xf32> to vector<32x32xf32>
    %c2_32 = arith.constant 2 : index
    %c0_33 = arith.constant 0 : index
    %c0_34 = arith.constant 0 : index
    %30 = vector.load %arg3[%c2_32, %c0_33, %c0_34] : memref<3x32x32xf32, #tpu.memory_space<vmem>>, vector<1x32x32xf32>
    %31 = vector.shape_cast %30 : vector<1x32x32xf32> to vector<32x32xf32>
    %c0_35 = arith.constant 0 : index
    %c0_36 = arith.constant 0 : index
    %32 = vector.load %arg5[%c0_35, %c0_36] : memref<1x32xf32, #tpu.memory_space<vmem>>, vector<1x32xf32>
    %cst_37 = arith.constant 0.000000e+00 : f32
    %33 = vector.broadcast %cst_37 : f32 to vector<8x32xf32>
    %c0_i32 = arith.constant 0 : i32
    %c8_i32 = arith.constant 8 : i32
    %34 = arith.muli %c0_i32, %c8_i32 : i32
    %35 = tpu.assume_multiple %34, 8 : i32
    %cst_38 = arith.constant dense<0.000000e+00> : vector<8x32xf32>
    %36 = tpu.matmul %33, %27, %cst_38 {dimension_numbers = #tpu.dot_dimension_numbers<[1], [0], [0], [1], [0, 0, 1, 1], [], []>} : vector<8x32xf32>, vector<32x32xf32>, vector<8x32xf32> -> vector<8x32xf32>
    %cst_39 = arith.constant dense<0.000000e+00> : vector<8x32xf32>
    %37 = tpu.matmul %33, %29, %cst_39 {dimension_numbers = #tpu.dot_dimension_numbers<[1], [0], [0], [1], [0, 0, 1, 1], [], []>} : vector<8x32xf32>, vector<32x32xf32>, vector<8x32xf32> -> vector<8x32xf32>
    %cst_40 = arith.constant dense<0.000000e+00> : vector<8x32xf32>
    %38 = tpu.matmul %33, %31, %cst_40 {dimension_numbers = #tpu.dot_dimension_numbers<[1], [0], [0], [1], [0, 0, 1, 1], [], []>} : vector<8x32xf32>, vector<32x32xf32>, vector<8x32xf32> -> vector<8x32xf32>
    %39 = arith.index_cast %35 : i32 to index
    %c0_41 = arith.constant 0 : index
    %40 = vector.load %arg16[%39, %c0_41] : memref<64x32xf32, #tpu.memory_space<vmem>>, vector<8x32xf32>
    %41 = arith.addf %40, %36 : vector<8x32xf32>
    %42 = arith.negf %41 : vector<8x32xf32>
    %43 = math.exp %42 : vector<8x32xf32>
    %cst_42 = arith.constant 1.000000e+00 : f32
    %44 = vector.broadcast %cst_42 : f32 to vector<8x32xf32>
    %45 = arith.addf %44, %43 : vector<8x32xf32>
    %46 = arith.divf %44, %45 : vector<8x32xf32>
    %47 = arith.index_cast %35 : i32 to index
    %c0_43 = arith.constant 0 : index
    %48 = vector.load %arg17[%47, %c0_43] : memref<64x32xf32, #tpu.memory_space<vmem>>, vector<8x32xf32>
    %49 = arith.addf %48, %37 : vector<8x32xf32>
    %50 = arith.negf %49 : vector<8x32xf32>
    %51 = math.exp %50 : vector<8x32xf32>
    %cst_44 = arith.constant 1.000000e+00 : f32
    %52 = vector.broadcast %cst_44 : f32 to vector<8x32xf32>
    %53 = arith.addf %52, %51 : vector<8x32xf32>
    %54 = arith.divf %52, %53 : vector<8x32xf32>
    %55 = arith.index_cast %35 : i32 to index
    %c0_45 = arith.constant 0 : index
    %56 = vector.load %arg18[%55, %c0_45] : memref<64x32xf32, #tpu.memory_space<vmem>>, vector<8x32xf32>
    %57 = vector.broadcast %32 : vector<1x32xf32> to vector<8x32xf32>
    %58 = arith.addf %38, %57 : vector<8x32xf32>
    %59 = arith.mulf %46, %58 : vector<8x32xf32>
    %60 = arith.addf %56, %59 : vector<8x32xf32>
    %61 = math.tanh %60 : vector<8x32xf32>
    %62 = arith.subf %33, %61 : vector<8x32xf32>
    %63 = arith.mulf %54, %62 : vector<8x32xf32>
    %64 = arith.addf %61, %63 : vector<8x32xf32>
    %65 = arith.index_cast %35 : i32 to index
    %c0_46 = arith.constant 0 : index
    %66 = vector.load %arg19[%65, %c0_46] : memref<64x32xf32, #tpu.memory_space<vmem>>, vector<8x32xf32>
    tpu.vector_store %arg19[%65, %c0_46], %64 {strides = array<i32>} : memref<64x32xf32, #tpu.memory_space<vmem>>, vector<8x32xf32>,
    %c1_i32 = arith.constant 1 : i32
    %c8_i32_47 = arith.constant 8 : i32
    %67 = arith.muli %c1_i32, %c8_i32_47 : i32
    %68 = tpu.assume_multiple %67, 8 : i32
    %cst_48 = arith.constant dense<0.000000e+00> : vector<8x32xf32>
    %69 = tpu.matmul %64, %27, %cst_48 {dimension_numbers = #tpu.dot_dimension_numbers<[1], [0], [0], [1], [0, 0, 1, 1], [], []>} : vector<8x32xf32>, vector<32x32xf32>, vector<8x32xf32> -> vector<8x32xf32>
    %cst_49 = arith.constant dense<0.000000e+00> : vector<8x32xf32>
    %70 = tpu.matmul %64, %29, %cst_49 {dimension_numbers = #tpu.dot_dimension_numbers<[1], [0], [0], [1], [0, 0, 1, 1], [], []>} : vector<8x32xf32>, vector<32x32xf32>, vector<8x32xf32> -> vector<8x32xf32>
    %cst_50 = arith.constant dense<0.000000e+00> : vector<8x32xf32>
    %71 = tpu.matmul %64, %31, %cst_50 {dimension_numbers = #tpu.dot_dimension_numbers<[1], [0], [0], [1], [0, 0, 1, 1], [], []>} : vector<8x32xf32>, vector<32x32xf32>, vector<8x32xf32> -> vector<8x32xf32>
    %72 = arith.index_cast %68 : i32 to index
    %c0_51 = arith.constant 0 : index
    %73 = vector.load %arg16[%72, %c0_51] : memref<64x32xf32, #tpu.memory_space<vmem>>, vector<8x32xf32>
    %74 = arith.addf %73, %69 : vector<8x32xf32>
    %75 = arith.negf %74 : vector<8x32xf32>
    %76 = math.exp %75 : vector<8x32xf32>
    %cst_52 = arith.constant 1.000000e+00 : f32
    %77 = vector.broadcast %cst_52 : f32 to vector<8x32xf32>
    %78 = arith.addf %77, %76 : vector<8x32xf32>
    %79 = arith.divf %77, %78 : vector<8x32xf32>
    %80 = arith.index_cast %68 : i32 to index
    %c0_53 = arith.constant 0 : index
    %81 = vector.load %arg17[%80, %c0_53] : memref<64x32xf32, #tpu.memory_space<vmem>>, vector<8x32xf32>
    %82 = arith.addf %81, %70 : vector<8x32xf32>
    %83 = arith.negf %82 : vector<8x32xf32>
    %84 = math.exp %83 : vector<8x32xf32>
    %cst_54 = arith.constant 1.000000e+00 : f32
    %85 = vector.broadcast %cst_54 : f32 to vector<8x32xf32>
    %86 = arith.addf %85, %84 : vector<8x32xf32>
    %87 = arith.divf %85, %86 : vector<8x32xf32>
    %88 = arith.index_cast %68 : i32 to index
    %c0_55 = arith.constant 0 : index
    %89 = vector.load %arg18[%88, %c0_55] : memref<64x32xf32, #tpu.memory_space<vmem>>, vector<8x32xf32>
    %90 = vector.broadcast %32 : vector<1x32xf32> to vector<8x32xf32>
    %91 = arith.addf %71, %90 : vector<8x32xf32>
    %92 = arith.mulf %79, %91 : vector<8x32xf32>
    %93 = arith.addf %89, %92 : vector<8x32xf32>
    %94 = math.tanh %93 : vector<8x32xf32>
    %95 = arith.subf %64, %94 : vector<8x32xf32>
    %96 = arith.mulf %87, %95 : vector<8x32xf32>
    %97 = arith.addf %94, %96 : vector<8x32xf32>
    %98 = arith.index_cast %68 : i32 to index
    %c0_56 = arith.constant 0 : index
    %99 = vector.load %arg19[%98, %c0_56] : memref<64x32xf32, #tpu.memory_space<vmem>>, vector<8x32xf32>
    tpu.vector_store %arg19[%98, %c0_56], %97 {strides = array<i32>} : memref<64x32xf32, #tpu.memory_space<vmem>>, vector<8x32xf32>,
    %c2_i32 = arith.constant 2 : i32
    %c8_i32_57 = arith.constant 8 : i32
    %100 = arith.muli %c2_i32, %c8_i32_57 : i32
    %101 = tpu.assume_multiple %100, 8 : i32
    %cst_58 = arith.constant dense<0.000000e+00> : vector<8x32xf32>
    %102 = tpu.matmul %97, %27, %cst_58 {dimension_numbers = #tpu.dot_dimension_numbers<[1], [0], [0], [1], [0, 0, 1, 1], [], []>} : vector<8x32xf32>, vector<32x32xf32>, vector<8x32xf32> -> vector<8x32xf32>
    %cst_59 = arith.constant dense<0.000000e+00> : vector<8x32xf32>
    %103 = tpu.matmul %97, %29, %cst_59 {dimension_numbers = #tpu.dot_dimension_numbers<[1], [0], [0], [1], [0, 0, 1, 1], [], []>} : vector<8x32xf32>, vector<32x32xf32>, vector<8x32xf32> -> vector<8x32xf32>
    %cst_60 = arith.constant dense<0.000000e+00> : vector<8x32xf32>
    %104 = tpu.matmul %97, %31, %cst_60 {dimension_numbers = #tpu.dot_dimension_numbers<[1], [0], [0], [1], [0, 0, 1, 1], [], []>} : vector<8x32xf32>, vector<32x32xf32>, vector<8x32xf32> -> vector<8x32xf32>
    %105 = arith.index_cast %101 : i32 to index
    %c0_61 = arith.constant 0 : index
    %106 = vector.load %arg16[%105, %c0_61] : memref<64x32xf32, #tpu.memory_space<vmem>>, vector<8x32xf32>
    %107 = arith.addf %106, %102 : vector<8x32xf32>
    %108 = arith.negf %107 : vector<8x32xf32>
    %109 = math.exp %108 : vector<8x32xf32>
    %cst_62 = arith.constant 1.000000e+00 : f32
    %110 = vector.broadcast %cst_62 : f32 to vector<8x32xf32>
    %111 = arith.addf %110, %109 : vector<8x32xf32>
    %112 = arith.divf %110, %111 : vector<8x32xf32>
    %113 = arith.index_cast %101 : i32 to index
    %c0_63 = arith.constant 0 : index
    %114 = vector.load %arg17[%113, %c0_63] : memref<64x32xf32, #tpu.memory_space<vmem>>, vector<8x32xf32>
    %115 = arith.addf %114, %103 : vector<8x32xf32>
    %116 = arith.negf %115 : vector<8x32xf32>
    %117 = math.exp %116 : vector<8x32xf32>
    %cst_64 = arith.constant 1.000000e+00 : f32
    %118 = vector.broadcast %cst_64 : f32 to vector<8x32xf32>
    %119 = arith.addf %118, %117 : vector<8x32xf32>
    %120 = arith.divf %118, %119 : vector<8x32xf32>
    %121 = arith.index_cast %101 : i32 to index
    %c0_65 = arith.constant 0 : index
    %122 = vector.load %arg18[%121, %c0_65] : memref<64x32xf32, #tpu.memory_space<vmem>>, vector<8x32xf32>
    %123 = vector.broadcast %32 : vector<1x32xf32> to vector<8x32xf32>
    %124 = arith.addf %104, %123 : vector<8x32xf32>
    %125 = arith.mulf %112, %124 : vector<8x32xf32>
    %126 = arith.addf %122, %125 : vector<8x32xf32>
    %127 = math.tanh %126 : vector<8x32xf32>
    %128 = arith.subf %97, %127 : vector<8x32xf32>
    %129 = arith.mulf %120, %128 : vector<8x32xf32>
    %130 = arith.addf %127, %129 : vector<8x32xf32>
    %131 = arith.index_cast %101 : i32 to index
    %c0_66 = arith.constant 0 : index
    %132 = vector.load %arg19[%131, %c0_66] : memref<64x32xf32, #tpu.memory_space<vmem>>, vector<8x32xf32>
    tpu.vector_store %arg19[%131, %c0_66], %130 {strides = array<i32>} : memref<64x32xf32, #tpu.memory_space<vmem>>, vector<8x32xf32>,
    %c3_i32 = arith.constant 3 : i32
    %c8_i32_67 = arith.constant 8 : i32
    %133 = arith.muli %c3_i32, %c8_i32_67 : i32
    %134 = tpu.assume_multiple %133, 8 : i32
    %cst_68 = arith.constant dense<0.000000e+00> : vector<8x32xf32>
    %135 = tpu.matmul %130, %27, %cst_68 {dimension_numbers = #tpu.dot_dimension_numbers<[1], [0], [0], [1], [0, 0, 1, 1], [], []>} : vector<8x32xf32>, vector<32x32xf32>, vector<8x32xf32> -> vector<8x32xf32>
    %cst_69 = arith.constant dense<0.000000e+00> : vector<8x32xf32>
    %136 = tpu.matmul %130, %29, %cst_69 {dimension_numbers = #tpu.dot_dimension_numbers<[1], [0], [0], [1], [0, 0, 1, 1], [], []>} : vector<8x32xf32>, vector<32x32xf32>, vector<8x32xf32> -> vector<8x32xf32>
    %cst_70 = arith.constant dense<0.000000e+00> : vector<8x32xf32>
    %137 = tpu.matmul %130, %31, %cst_70 {dimension_numbers = #tpu.dot_dimension_numbers<[1], [0], [0], [1], [0, 0, 1, 1], [], []>} : vector<8x32xf32>, vector<32x32xf32>, vector<8x32xf32> -> vector<8x32xf32>
    %138 = arith.index_cast %134 : i32 to index
    %c0_71 = arith.constant 0 : index
    %139 = vector.load %arg16[%138, %c0_71] : memref<64x32xf32, #tpu.memory_space<vmem>>, vector<8x32xf32>
    %140 = arith.addf %139, %135 : vector<8x32xf32>
    %141 = arith.negf %140 : vector<8x32xf32>
    %142 = math.exp %141 : vector<8x32xf32>
    %cst_72 = arith.constant 1.000000e+00 : f32
    %143 = vector.broadcast %cst_72 : f32 to vector<8x32xf32>
    %144 = arith.addf %143, %142 : vector<8x32xf32>
    %145 = arith.divf %143, %144 : vector<8x32xf32>
    %146 = arith.index_cast %134 : i32 to index
    %c0_73 = arith.constant 0 : index
    %147 = vector.load %arg17[%146, %c0_73] : memref<64x32xf32, #tpu.memory_space<vmem>>, vector<8x32xf32>
    %148 = arith.addf %147, %136 : vector<8x32xf32>
    %149 = arith.negf %148 : vector<8x32xf32>
    %150 = math.exp %149 : vector<8x32xf32>
    %cst_74 = arith.constant 1.000000e+00 : f32
    %151 = vector.broadcast %cst_74 : f32 to vector<8x32xf32>
    %152 = arith.addf %151, %150 : vector<8x32xf32>
    %153 = arith.divf %151, %152 : vector<8x32xf32>
    %154 = arith.index_cast %134 : i32 to index
    %c0_75 = arith.constant 0 : index
    %155 = vector.load %arg18[%154, %c0_75] : memref<64x32xf32, #tpu.memory_space<vmem>>, vector<8x32xf32>
    %156 = vector.broadcast %32 : vector<1x32xf32> to vector<8x32xf32>
    %157 = arith.addf %137, %156 : vector<8x32xf32>
    %158 = arith.mulf %145, %157 : vector<8x32xf32>
    %159 = arith.addf %155, %158 : vector<8x32xf32>
    %160 = math.tanh %159 : vector<8x32xf32>
    %161 = arith.subf %130, %160 : vector<8x32xf32>
    %162 = arith.mulf %153, %161 : vector<8x32xf32>
    %163 = arith.addf %160, %162 : vector<8x32xf32>
    %164 = arith.index_cast %134 : i32 to index
    %c0_76 = arith.constant 0 : index
    %165 = vector.load %arg19[%164, %c0_76] : memref<64x32xf32, #tpu.memory_space<vmem>>, vector<8x32xf32>
    tpu.vector_store %arg19[%164, %c0_76], %163 {strides = array<i32>} : memref<64x32xf32, #tpu.memory_space<vmem>>, vector<8x32xf32>,
    %c4_i32 = arith.constant 4 : i32
    %c8_i32_77 = arith.constant 8 : i32
    %166 = arith.muli %c4_i32, %c8_i32_77 : i32
    %167 = tpu.assume_multiple %166, 8 : i32
    %cst_78 = arith.constant dense<0.000000e+00> : vector<8x32xf32>
    %168 = tpu.matmul %163, %27, %cst_78 {dimension_numbers = #tpu.dot_dimension_numbers<[1], [0], [0], [1], [0, 0, 1, 1], [], []>} : vector<8x32xf32>, vector<32x32xf32>, vector<8x32xf32> -> vector<8x32xf32>
    %cst_79 = arith.constant dense<0.000000e+00> : vector<8x32xf32>
    %169 = tpu.matmul %163, %29, %cst_79 {dimension_numbers = #tpu.dot_dimension_numbers<[1], [0], [0], [1], [0, 0, 1, 1], [], []>} : vector<8x32xf32>, vector<32x32xf32>, vector<8x32xf32> -> vector<8x32xf32>
    %cst_80 = arith.constant dense<0.000000e+00> : vector<8x32xf32>
    %170 = tpu.matmul %163, %31, %cst_80 {dimension_numbers = #tpu.dot_dimension_numbers<[1], [0], [0], [1], [0, 0, 1, 1], [], []>} : vector<8x32xf32>, vector<32x32xf32>, vector<8x32xf32> -> vector<8x32xf32>
    %171 = arith.index_cast %167 : i32 to index
    %c0_81 = arith.constant 0 : index
    %172 = vector.load %arg16[%171, %c0_81] : memref<64x32xf32, #tpu.memory_space<vmem>>, vector<8x32xf32>
    %173 = arith.addf %172, %168 : vector<8x32xf32>
    %174 = arith.negf %173 : vector<8x32xf32>
    %175 = math.exp %174 : vector<8x32xf32>
    %cst_82 = arith.constant 1.000000e+00 : f32
    %176 = vector.broadcast %cst_82 : f32 to vector<8x32xf32>
    %177 = arith.addf %176, %175 : vector<8x32xf32>
    %178 = arith.divf %176, %177 : vector<8x32xf32>
    %179 = arith.index_cast %167 : i32 to index
    %c0_83 = arith.constant 0 : index
    %180 = vector.load %arg17[%179, %c0_83] : memref<64x32xf32, #tpu.memory_space<vmem>>, vector<8x32xf32>
    %181 = arith.addf %180, %169 : vector<8x32xf32>
    %182 = arith.negf %181 : vector<8x32xf32>
    %183 = math.exp %182 : vector<8x32xf32>
    %cst_84 = arith.constant 1.000000e+00 : f32
    %184 = vector.broadcast %cst_84 : f32 to vector<8x32xf32>
    %185 = arith.addf %184, %183 : vector<8x32xf32>
    %186 = arith.divf %184, %185 : vector<8x32xf32>
    %187 = arith.index_cast %167 : i32 to index
    %c0_85 = arith.constant 0 : index
    %188 = vector.load %arg18[%187, %c0_85] : memref<64x32xf32, #tpu.memory_space<vmem>>, vector<8x32xf32>
    %189 = vector.broadcast %32 : vector<1x32xf32> to vector<8x32xf32>
    %190 = arith.addf %170, %189 : vector<8x32xf32>
    %191 = arith.mulf %178, %190 : vector<8x32xf32>
    %192 = arith.addf %188, %191 : vector<8x32xf32>
    %193 = math.tanh %192 : vector<8x32xf32>
    %194 = arith.subf %163, %193 : vector<8x32xf32>
    %195 = arith.mulf %186, %194 : vector<8x32xf32>
    %196 = arith.addf %193, %195 : vector<8x32xf32>
    %197 = arith.index_cast %167 : i32 to index
    %c0_86 = arith.constant 0 : index
    %198 = vector.load %arg19[%197, %c0_86] : memref<64x32xf32, #tpu.memory_space<vmem>>, vector<8x32xf32>
    tpu.vector_store %arg19[%197, %c0_86], %196 {strides = array<i32>} : memref<64x32xf32, #tpu.memory_space<vmem>>, vector<8x32xf32>,
    %c5_i32 = arith.constant 5 : i32
    %c8_i32_87 = arith.constant 8 : i32
    %199 = arith.muli %c5_i32, %c8_i32_87 : i32
    %200 = tpu.assume_multiple %199, 8 : i32
    %cst_88 = arith.constant dense<0.000000e+00> : vector<8x32xf32>
    %201 = tpu.matmul %196, %27, %cst_88 {dimension_numbers = #tpu.dot_dimension_numbers<[1], [0], [0], [1], [0, 0, 1, 1], [], []>} : vector<8x32xf32>, vector<32x32xf32>, vector<8x32xf32> -> vector<8x32xf32>
    %cst_89 = arith.constant dense<0.000000e+00> : vector<8x32xf32>
    %202 = tpu.matmul %196, %29, %cst_89 {dimension_numbers = #tpu.dot_dimension_numbers<[1], [0], [0], [1], [0, 0, 1, 1], [], []>} : vector<8x32xf32>, vector<32x32xf32>, vector<8x32xf32> -> vector<8x32xf32>
    %cst_90 = arith.constant dense<0.000000e+00> : vector<8x32xf32>
    %203 = tpu.matmul %196, %31, %cst_90 {dimension_numbers = #tpu.dot_dimension_numbers<[1], [0], [0], [1], [0, 0, 1, 1], [], []>} : vector<8x32xf32>, vector<32x32xf32>, vector<8x32xf32> -> vector<8x32xf32>
    %204 = arith.index_cast %200 : i32 to index
    %c0_91 = arith.constant 0 : index
    %205 = vector.load %arg16[%204, %c0_91] : memref<64x32xf32, #tpu.memory_space<vmem>>, vector<8x32xf32>
    %206 = arith.addf %205, %201 : vector<8x32xf32>
    %207 = arith.negf %206 : vector<8x32xf32>
    %208 = math.exp %207 : vector<8x32xf32>
    %cst_92 = arith.constant 1.000000e+00 : f32
    %209 = vector.broadcast %cst_92 : f32 to vector<8x32xf32>
    %210 = arith.addf %209, %208 : vector<8x32xf32>
    %211 = arith.divf %209, %210 : vector<8x32xf32>
    %212 = arith.index_cast %200 : i32 to index
    %c0_93 = arith.constant 0 : index
    %213 = vector.load %arg17[%212, %c0_93] : memref<64x32xf32, #tpu.memory_space<vmem>>, vector<8x32xf32>
    %214 = arith.addf %213, %202 : vector<8x32xf32>
    %215 = arith.negf %214 : vector<8x32xf32>
    %216 = math.exp %215 : vector<8x32xf32>
    %cst_94 = arith.constant 1.000000e+00 : f32
    %217 = vector.broadcast %cst_94 : f32 to vector<8x32xf32>
    %218 = arith.addf %217, %216 : vector<8x32xf32>
    %219 = arith.divf %217, %218 : vector<8x32xf32>
    %220 = arith.index_cast %200 : i32 to index
    %c0_95 = arith.constant 0 : index
    %221 = vector.load %arg18[%220, %c0_95] : memref<64x32xf32, #tpu.memory_space<vmem>>, vector<8x32xf32>
    %222 = vector.broadcast %32 : vector<1x32xf32> to vector<8x32xf32>
    %223 = arith.addf %203, %222 : vector<8x32xf32>
    %224 = arith.mulf %211, %223 : vector<8x32xf32>
    %225 = arith.addf %221, %224 : vector<8x32xf32>
    %226 = math.tanh %225 : vector<8x32xf32>
    %227 = arith.subf %196, %226 : vector<8x32xf32>
    %228 = arith.mulf %219, %227 : vector<8x32xf32>
    %229 = arith.addf %226, %228 : vector<8x32xf32>
    %230 = arith.index_cast %200 : i32 to index
    %c0_96 = arith.constant 0 : index
    %231 = vector.load %arg19[%230, %c0_96] : memref<64x32xf32, #tpu.memory_space<vmem>>, vector<8x32xf32>
    tpu.vector_store %arg19[%230, %c0_96], %229 {strides = array<i32>} : memref<64x32xf32, #tpu.memory_space<vmem>>, vector<8x32xf32>,
    %c6_i32 = arith.constant 6 : i32
    %c8_i32_97 = arith.constant 8 : i32
    %232 = arith.muli %c6_i32, %c8_i32_97 : i32
    %233 = tpu.assume_multiple %232, 8 : i32
    %cst_98 = arith.constant dense<0.000000e+00> : vector<8x32xf32>
    %234 = tpu.matmul %229, %27, %cst_98 {dimension_numbers = #tpu.dot_dimension_numbers<[1], [0], [0], [1], [0, 0, 1, 1], [], []>} : vector<8x32xf32>, vector<32x32xf32>, vector<8x32xf32> -> vector<8x32xf32>
    %cst_99 = arith.constant dense<0.000000e+00> : vector<8x32xf32>
    %235 = tpu.matmul %229, %29, %cst_99 {dimension_numbers = #tpu.dot_dimension_numbers<[1], [0], [0], [1], [0, 0, 1, 1], [], []>} : vector<8x32xf32>, vector<32x32xf32>, vector<8x32xf32> -> vector<8x32xf32>
    %cst_100 = arith.constant dense<0.000000e+00> : vector<8x32xf32>
    %236 = tpu.matmul %229, %31, %cst_100 {dimension_numbers = #tpu.dot_dimension_numbers<[1], [0], [0], [1], [0, 0, 1, 1], [], []>} : vector<8x32xf32>, vector<32x32xf32>, vector<8x32xf32> -> vector<8x32xf32>
    %237 = arith.index_cast %233 : i32 to index
    %c0_101 = arith.constant 0 : index
    %238 = vector.load %arg16[%237, %c0_101] : memref<64x32xf32, #tpu.memory_space<vmem>>, vector<8x32xf32>
    %239 = arith.addf %238, %234 : vector<8x32xf32>
    %240 = arith.negf %239 : vector<8x32xf32>
    %241 = math.exp %240 : vector<8x32xf32>
    %cst_102 = arith.constant 1.000000e+00 : f32
    %242 = vector.broadcast %cst_102 : f32 to vector<8x32xf32>
    %243 = arith.addf %242, %241 : vector<8x32xf32>
    %244 = arith.divf %242, %243 : vector<8x32xf32>
    %245 = arith.index_cast %233 : i32 to index
    %c0_103 = arith.constant 0 : index
    %246 = vector.load %arg17[%245, %c0_103] : memref<64x32xf32, #tpu.memory_space<vmem>>, vector<8x32xf32>
    %247 = arith.addf %246, %235 : vector<8x32xf32>
    %248 = arith.negf %247 : vector<8x32xf32>
    %249 = math.exp %248 : vector<8x32xf32>
    %cst_104 = arith.constant 1.000000e+00 : f32
    %250 = vector.broadcast %cst_104 : f32 to vector<8x32xf32>
    %251 = arith.addf %250, %249 : vector<8x32xf32>
    %252 = arith.divf %250, %251 : vector<8x32xf32>
    %253 = arith.index_cast %233 : i32 to index
    %c0_105 = arith.constant 0 : index
    %254 = vector.load %arg18[%253, %c0_105] : memref<64x32xf32, #tpu.memory_space<vmem>>, vector<8x32xf32>
    %255 = vector.broadcast %32 : vector<1x32xf32> to vector<8x32xf32>
    %256 = arith.addf %236, %255 : vector<8x32xf32>
    %257 = arith.mulf %244, %256 : vector<8x32xf32>
    %258 = arith.addf %254, %257 : vector<8x32xf32>
    %259 = math.tanh %258 : vector<8x32xf32>
    %260 = arith.subf %229, %259 : vector<8x32xf32>
    %261 = arith.mulf %252, %260 : vector<8x32xf32>
    %262 = arith.addf %259, %261 : vector<8x32xf32>
    %263 = arith.index_cast %233 : i32 to index
    %c0_106 = arith.constant 0 : index
    %264 = vector.load %arg19[%263, %c0_106] : memref<64x32xf32, #tpu.memory_space<vmem>>, vector<8x32xf32>
    tpu.vector_store %arg19[%263, %c0_106], %262 {strides = array<i32>} : memref<64x32xf32, #tpu.memory_space<vmem>>, vector<8x32xf32>,
    %c7_i32 = arith.constant 7 : i32
    %c8_i32_107 = arith.constant 8 : i32
    %265 = arith.muli %c7_i32, %c8_i32_107 : i32
    %266 = tpu.assume_multiple %265, 8 : i32
    %cst_108 = arith.constant dense<0.000000e+00> : vector<8x32xf32>
    %267 = tpu.matmul %262, %27, %cst_108 {dimension_numbers = #tpu.dot_dimension_numbers<[1], [0], [0], [1], [0, 0, 1, 1], [], []>} : vector<8x32xf32>, vector<32x32xf32>, vector<8x32xf32> -> vector<8x32xf32>
    %cst_109 = arith.constant dense<0.000000e+00> : vector<8x32xf32>
    %268 = tpu.matmul %262, %29, %cst_109 {dimension_numbers = #tpu.dot_dimension_numbers<[1], [0], [0], [1], [0, 0, 1, 1], [], []>} : vector<8x32xf32>, vector<32x32xf32>, vector<8x32xf32> -> vector<8x32xf32>
    %cst_110 = arith.constant dense<0.000000e+00> : vector<8x32xf32>
    %269 = tpu.matmul %262, %31, %cst_110 {dimension_numbers = #tpu.dot_dimension_numbers<[1], [0], [0], [1], [0, 0, 1, 1], [], []>} : vector<8x32xf32>, vector<32x32xf32>, vector<8x32xf32> -> vector<8x32xf32>
    %270 = arith.index_cast %266 : i32 to index
    %c0_111 = arith.constant 0 : index
    %271 = vector.load %arg16[%270, %c0_111] : memref<64x32xf32, #tpu.memory_space<vmem>>, vector<8x32xf32>
    %272 = arith.addf %271, %267 : vector<8x32xf32>
    %273 = arith.negf %272 : vector<8x32xf32>
    %274 = math.exp %273 : vector<8x32xf32>
    %cst_112 = arith.constant 1.000000e+00 : f32
    %275 = vector.broadcast %cst_112 : f32 to vector<8x32xf32>
    %276 = arith.addf %275, %274 : vector<8x32xf32>
    %277 = arith.divf %275, %276 : vector<8x32xf32>
    %278 = arith.index_cast %266 : i32 to index
    %c0_113 = arith.constant 0 : index
    %279 = vector.load %arg17[%278, %c0_113] : memref<64x32xf32, #tpu.memory_space<vmem>>, vector<8x32xf32>
    %280 = arith.addf %279, %268 : vector<8x32xf32>
    %281 = arith.negf %280 : vector<8x32xf32>
    %282 = math.exp %281 : vector<8x32xf32>
    %cst_114 = arith.constant 1.000000e+00 : f32
    %283 = vector.broadcast %cst_114 : f32 to vector<8x32xf32>
    %284 = arith.addf %283, %282 : vector<8x32xf32>
    %285 = arith.divf %283, %284 : vector<8x32xf32>
    %286 = arith.index_cast %266 : i32 to index
    %c0_115 = arith.constant 0 : index
    %287 = vector.load %arg18[%286, %c0_115] : memref<64x32xf32, #tpu.memory_space<vmem>>, vector<8x32xf32>
    %288 = vector.broadcast %32 : vector<1x32xf32> to vector<8x32xf32>
    %289 = arith.addf %269, %288 : vector<8x32xf32>
    %290 = arith.mulf %277, %289 : vector<8x32xf32>
    %291 = arith.addf %287, %290 : vector<8x32xf32>
    %292 = math.tanh %291 : vector<8x32xf32>
    %293 = arith.subf %262, %292 : vector<8x32xf32>
    %294 = arith.mulf %285, %293 : vector<8x32xf32>
    %295 = arith.addf %292, %294 : vector<8x32xf32>
    %296 = arith.index_cast %266 : i32 to index
    %c0_116 = arith.constant 0 : index
    %297 = vector.load %arg19[%296, %c0_116] : memref<64x32xf32, #tpu.memory_space<vmem>>, vector<8x32xf32>
    tpu.vector_store %arg19[%296, %c0_116], %295 {strides = array<i32>} : memref<64x32xf32, #tpu.memory_space<vmem>>, vector<8x32xf32>,
    %c8_i32_117 = arith.constant 8 : i32
    %c0_118 = arith.constant 0 : index
    %c0_119 = arith.constant 0 : index
    %298 = vector.load %arg19[%c0_118, %c0_119] : memref<64x32xf32, #tpu.memory_space<vmem>>, vector<64x32xf32>
    %c0_120 = arith.constant 0 : index
    %c0_121 = arith.constant 0 : index
    %c0_122 = arith.constant 0 : index
    %299 = vector.load %arg6[%c0_120, %c0_121, %c0_122] : memref<3x32x32xf32, #tpu.memory_space<vmem>>, vector<1x32x32xf32>
    %300 = vector.shape_cast %299 : vector<1x32x32xf32> to vector<32x32xf32>
    %cst_123 = arith.constant dense<0.000000e+00> : vector<64x32xf32>
    %301 = tpu.matmul %298, %300, %cst_123 {dimension_numbers = #tpu.dot_dimension_numbers<[1], [0], [0], [1], [0, 0, 1, 1], [], []>} : vector<64x32xf32>, vector<32x32xf32>, vector<64x32xf32> -> vector<64x32xf32>
    %c0_124 = arith.constant 0 : index
    %c0_125 = arith.constant 0 : index
    %c0_126 = arith.constant 0 : index
    %302 = vector.load %arg8[%c0_124, %c0_125, %c0_126] : memref<3x1x32xf32, #tpu.memory_space<vmem>>, vector<1x1x32xf32>
    %303 = vector.shape_cast %302 : vector<1x1x32xf32> to vector<1x32xf32>
    %304 = vector.broadcast %303 : vector<1x32xf32> to vector<64x32xf32>
    %305 = arith.addf %301, %304 : vector<64x32xf32>
    %c0_127 = arith.constant 0 : index
    %c0_128 = arith.constant 0 : index
    %306 = vector.load %arg16[%c0_127, %c0_128] : memref<64x32xf32, #tpu.memory_space<vmem>>, vector<64x32xf32>
    tpu.vector_store %arg16[%c0_127, %c0_128], %305 {strides = array<i32>} : memref<64x32xf32, #tpu.memory_space<vmem>>, vector<64x32xf32>,
    %c1_129 = arith.constant 1 : index
    %c0_130 = arith.constant 0 : index
    %c0_131 = arith.constant 0 : index
    %307 = vector.load %arg6[%c1_129, %c0_130, %c0_131] : memref<3x32x32xf32, #tpu.memory_space<vmem>>, vector<1x32x32xf32>
    %308 = vector.shape_cast %307 : vector<1x32x32xf32> to vector<32x32xf32>
    %cst_132 = arith.constant dense<0.000000e+00> : vector<64x32xf32>
    %309 = tpu.matmul %298, %308, %cst_132 {dimension_numbers = #tpu.dot_dimension_numbers<[1], [0], [0], [1], [0, 0, 1, 1], [], []>} : vector<64x32xf32>, vector<32x32xf32>, vector<64x32xf32> -> vector<64x32xf32>
    %c1_133 = arith.constant 1 : index
    %c0_134 = arith.constant 0 : index
    %c0_135 = arith.constant 0 : index
    %310 = vector.load %arg8[%c1_133, %c0_134, %c0_135] : memref<3x1x32xf32, #tpu.memory_space<vmem>>, vector<1x1x32xf32>
    %311 = vector.shape_cast %310 : vector<1x1x32xf32> to vector<1x32xf32>
    %312 = vector.broadcast %311 : vector<1x32xf32> to vector<64x32xf32>
    %313 = arith.addf %309, %312 : vector<64x32xf32>
    %c0_136 = arith.constant 0 : index
    %c0_137 = arith.constant 0 : index
    %314 = vector.load %arg17[%c0_136, %c0_137] : memref<64x32xf32, #tpu.memory_space<vmem>>, vector<64x32xf32>
    tpu.vector_store %arg17[%c0_136, %c0_137], %313 {strides = array<i32>} : memref<64x32xf32, #tpu.memory_space<vmem>>, vector<64x32xf32>,
    %c2_138 = arith.constant 2 : index
    %c0_139 = arith.constant 0 : index
    %c0_140 = arith.constant 0 : index
    %315 = vector.load %arg6[%c2_138, %c0_139, %c0_140] : memref<3x32x32xf32, #tpu.memory_space<vmem>>, vector<1x32x32xf32>
    %316 = vector.shape_cast %315 : vector<1x32x32xf32> to vector<32x32xf32>
    %cst_141 = arith.constant dense<0.000000e+00> : vector<64x32xf32>
    %317 = tpu.matmul %298, %316, %cst_141 {dimension_numbers = #tpu.dot_dimension_numbers<[1], [0], [0], [1], [0, 0, 1, 1], [], []>} : vector<64x32xf32>, vector<32x32xf32>, vector<64x32xf32> -> vector<64x32xf32>
    %c2_142 = arith.constant 2 : index
    %c0_143 = arith.constant 0 : index
    %c0_144 = arith.constant 0 : index
    %318 = vector.load %arg8[%c2_142, %c0_143, %c0_144] : memref<3x1x32xf32, #tpu.memory_space<vmem>>, vector<1x1x32xf32>
    %319 = vector.shape_cast %318 : vector<1x1x32xf32> to vector<1x32xf32>
    %320 = vector.broadcast %319 : vector<1x32xf32> to vector<64x32xf32>
    %321 = arith.addf %317, %320 : vector<64x32xf32>
    %c0_145 = arith.constant 0 : index
    %c0_146 = arith.constant 0 : index
    %322 = vector.load %arg18[%c0_145, %c0_146] : memref<64x32xf32, #tpu.memory_space<vmem>>, vector<64x32xf32>
    tpu.vector_store %arg18[%c0_145, %c0_146], %321 {strides = array<i32>} : memref<64x32xf32, #tpu.memory_space<vmem>>, vector<64x32xf32>,
    %c0_147 = arith.constant 0 : index
    %c0_148 = arith.constant 0 : index
    %c0_149 = arith.constant 0 : index
    %323 = vector.load %arg7[%c0_147, %c0_148, %c0_149] : memref<3x32x32xf32, #tpu.memory_space<vmem>>, vector<1x32x32xf32>
    %324 = vector.shape_cast %323 : vector<1x32x32xf32> to vector<32x32xf32>
    %c1_150 = arith.constant 1 : index
    %c0_151 = arith.constant 0 : index
    %c0_152 = arith.constant 0 : index
    %325 = vector.load %arg7[%c1_150, %c0_151, %c0_152] : memref<3x32x32xf32, #tpu.memory_space<vmem>>, vector<1x32x32xf32>
    %326 = vector.shape_cast %325 : vector<1x32x32xf32> to vector<32x32xf32>
    %c2_153 = arith.constant 2 : index
    %c0_154 = arith.constant 0 : index
    %c0_155 = arith.constant 0 : index
    %327 = vector.load %arg7[%c2_153, %c0_154, %c0_155] : memref<3x32x32xf32, #tpu.memory_space<vmem>>, vector<1x32x32xf32>
    %328 = vector.shape_cast %327 : vector<1x32x32xf32> to vector<32x32xf32>
    %c0_156 = arith.constant 0 : index
    %c0_157 = arith.constant 0 : index
    %329 = vector.load %arg9[%c0_156, %c0_157] : memref<1x32xf32, #tpu.memory_space<vmem>>, vector<1x32xf32>
    %cst_158 = arith.constant 0.000000e+00 : f32
    %330 = vector.broadcast %cst_158 : f32 to vector<8x32xf32>
    %c0_i32_159 = arith.constant 0 : i32
    %c8_i32_160 = arith.constant 8 : i32
    %331 = arith.muli %c0_i32_159, %c8_i32_160 : i32
    %332 = tpu.assume_multiple %331, 8 : i32
    %cst_161 = arith.constant dense<0.000000e+00> : vector<8x32xf32>
    %333 = tpu.matmul %330, %324, %cst_161 {dimension_numbers = #tpu.dot_dimension_numbers<[1], [0], [0], [1], [0, 0, 1, 1], [], []>} : vector<8x32xf32>, vector<32x32xf32>, vector<8x32xf32> -> vector<8x32xf32>
    %cst_162 = arith.constant dense<0.000000e+00> : vector<8x32xf32>
    %334 = tpu.matmul %330, %326, %cst_162 {dimension_numbers = #tpu.dot_dimension_numbers<[1], [0], [0], [1], [0, 0, 1, 1], [], []>} : vector<8x32xf32>, vector<32x32xf32>, vector<8x32xf32> -> vector<8x32xf32>
    %cst_163 = arith.constant dense<0.000000e+00> : vector<8x32xf32>
    %335 = tpu.matmul %330, %328, %cst_163 {dimension_numbers = #tpu.dot_dimension_numbers<[1], [0], [0], [1], [0, 0, 1, 1], [], []>} : vector<8x32xf32>, vector<32x32xf32>, vector<8x32xf32> -> vector<8x32xf32>
    %336 = arith.index_cast %332 : i32 to index
    %c0_164 = arith.constant 0 : index
    %337 = vector.load %arg16[%336, %c0_164] : memref<64x32xf32, #tpu.memory_space<vmem>>, vector<8x32xf32>
    %338 = arith.addf %337, %333 : vector<8x32xf32>
    %339 = arith.negf %338 : vector<8x32xf32>
    %340 = math.exp %339 : vector<8x32xf32>
    %cst_165 = arith.constant 1.000000e+00 : f32
    %341 = vector.broadcast %cst_165 : f32 to vector<8x32xf32>
    %342 = arith.addf %341, %340 : vector<8x32xf32>
    %343 = arith.divf %341, %342 : vector<8x32xf32>
    %344 = arith.index_cast %332 : i32 to index
    %c0_166 = arith.constant 0 : index
    %345 = vector.load %arg17[%344, %c0_166] : memref<64x32xf32, #tpu.memory_space<vmem>>, vector<8x32xf32>
    %346 = arith.addf %345, %334 : vector<8x32xf32>
    %347 = arith.negf %346 : vector<8x32xf32>
    %348 = math.exp %347 : vector<8x32xf32>
    %cst_167 = arith.constant 1.000000e+00 : f32
    %349 = vector.broadcast %cst_167 : f32 to vector<8x32xf32>
    %350 = arith.addf %349, %348 : vector<8x32xf32>
    %351 = arith.divf %349, %350 : vector<8x32xf32>
    %352 = arith.index_cast %332 : i32 to index
    %c0_168 = arith.constant 0 : index
    %353 = vector.load %arg18[%352, %c0_168] : memref<64x32xf32, #tpu.memory_space<vmem>>, vector<8x32xf32>
    %354 = vector.broadcast %329 : vector<1x32xf32> to vector<8x32xf32>
    %355 = arith.addf %335, %354 : vector<8x32xf32>
    %356 = arith.mulf %343, %355 : vector<8x32xf32>
    %357 = arith.addf %353, %356 : vector<8x32xf32>
    %358 = math.tanh %357 : vector<8x32xf32>
    %359 = arith.subf %330, %358 : vector<8x32xf32>
    %360 = arith.mulf %351, %359 : vector<8x32xf32>
    %361 = arith.addf %358, %360 : vector<8x32xf32>
    %362 = arith.index_cast %332 : i32 to index
    %c0_169 = arith.constant 0 : index
    %363 = vector.load %arg19[%362, %c0_169] : memref<64x32xf32, #tpu.memory_space<vmem>>, vector<8x32xf32>
    tpu.vector_store %arg19[%362, %c0_169], %361 {strides = array<i32>} : memref<64x32xf32, #tpu.memory_space<vmem>>, vector<8x32xf32>,
    %c1_i32_170 = arith.constant 1 : i32
    %c8_i32_171 = arith.constant 8 : i32
    %364 = arith.muli %c1_i32_170, %c8_i32_171 : i32
    %365 = tpu.assume_multiple %364, 8 : i32
    %cst_172 = arith.constant dense<0.000000e+00> : vector<8x32xf32>
    %366 = tpu.matmul %361, %324, %cst_172 {dimension_numbers = #tpu.dot_dimension_numbers<[1], [0], [0], [1], [0, 0, 1, 1], [], []>} : vector<8x32xf32>, vector<32x32xf32>, vector<8x32xf32> -> vector<8x32xf32>
    %cst_173 = arith.constant dense<0.000000e+00> : vector<8x32xf32>
    %367 = tpu.matmul %361, %326, %cst_173 {dimension_numbers = #tpu.dot_dimension_numbers<[1], [0], [0], [1], [0, 0, 1, 1], [], []>} : vector<8x32xf32>, vector<32x32xf32>, vector<8x32xf32> -> vector<8x32xf32>
    %cst_174 = arith.constant dense<0.000000e+00> : vector<8x32xf32>
    %368 = tpu.matmul %361, %328, %cst_174 {dimension_numbers = #tpu.dot_dimension_numbers<[1], [0], [0], [1], [0, 0, 1, 1], [], []>} : vector<8x32xf32>, vector<32x32xf32>, vector<8x32xf32> -> vector<8x32xf32>
    %369 = arith.index_cast %365 : i32 to index
    %c0_175 = arith.constant 0 : index
    %370 = vector.load %arg16[%369, %c0_175] : memref<64x32xf32, #tpu.memory_space<vmem>>, vector<8x32xf32>
    %371 = arith.addf %370, %366 : vector<8x32xf32>
    %372 = arith.negf %371 : vector<8x32xf32>
    %373 = math.exp %372 : vector<8x32xf32>
    %cst_176 = arith.constant 1.000000e+00 : f32
    %374 = vector.broadcast %cst_176 : f32 to vector<8x32xf32>
    %375 = arith.addf %374, %373 : vector<8x32xf32>
    %376 = arith.divf %374, %375 : vector<8x32xf32>
    %377 = arith.index_cast %365 : i32 to index
    %c0_177 = arith.constant 0 : index
    %378 = vector.load %arg17[%377, %c0_177] : memref<64x32xf32, #tpu.memory_space<vmem>>, vector<8x32xf32>
    %379 = arith.addf %378, %367 : vector<8x32xf32>
    %380 = arith.negf %379 : vector<8x32xf32>
    %381 = math.exp %380 : vector<8x32xf32>
    %cst_178 = arith.constant 1.000000e+00 : f32
    %382 = vector.broadcast %cst_178 : f32 to vector<8x32xf32>
    %383 = arith.addf %382, %381 : vector<8x32xf32>
    %384 = arith.divf %382, %383 : vector<8x32xf32>
    %385 = arith.index_cast %365 : i32 to index
    %c0_179 = arith.constant 0 : index
    %386 = vector.load %arg18[%385, %c0_179] : memref<64x32xf32, #tpu.memory_space<vmem>>, vector<8x32xf32>
    %387 = vector.broadcast %329 : vector<1x32xf32> to vector<8x32xf32>
    %388 = arith.addf %368, %387 : vector<8x32xf32>
    %389 = arith.mulf %376, %388 : vector<8x32xf32>
    %390 = arith.addf %386, %389 : vector<8x32xf32>
    %391 = math.tanh %390 : vector<8x32xf32>
    %392 = arith.subf %361, %391 : vector<8x32xf32>
    %393 = arith.mulf %384, %392 : vector<8x32xf32>
    %394 = arith.addf %391, %393 : vector<8x32xf32>
    %395 = arith.index_cast %365 : i32 to index
    %c0_180 = arith.constant 0 : index
    %396 = vector.load %arg19[%395, %c0_180] : memref<64x32xf32, #tpu.memory_space<vmem>>, vector<8x32xf32>
    tpu.vector_store %arg19[%395, %c0_180], %394 {strides = array<i32>} : memref<64x32xf32, #tpu.memory_space<vmem>>, vector<8x32xf32>,
    %c2_i32_181 = arith.constant 2 : i32
    %c8_i32_182 = arith.constant 8 : i32
    %397 = arith.muli %c2_i32_181, %c8_i32_182 : i32
    %398 = tpu.assume_multiple %397, 8 : i32
    %cst_183 = arith.constant dense<0.000000e+00> : vector<8x32xf32>
    %399 = tpu.matmul %394, %324, %cst_183 {dimension_numbers = #tpu.dot_dimension_numbers<[1], [0], [0], [1], [0, 0, 1, 1], [], []>} : vector<8x32xf32>, vector<32x32xf32>, vector<8x32xf32> -> vector<8x32xf32>
    %cst_184 = arith.constant dense<0.000000e+00> : vector<8x32xf32>
    %400 = tpu.matmul %394, %326, %cst_184 {dimension_numbers = #tpu.dot_dimension_numbers<[1], [0], [0], [1], [0, 0, 1, 1], [], []>} : vector<8x32xf32>, vector<32x32xf32>, vector<8x32xf32> -> vector<8x32xf32>
    %cst_185 = arith.constant dense<0.000000e+00> : vector<8x32xf32>
    %401 = tpu.matmul %394, %328, %cst_185 {dimension_numbers = #tpu.dot_dimension_numbers<[1], [0], [0], [1], [0, 0, 1, 1], [], []>} : vector<8x32xf32>, vector<32x32xf32>, vector<8x32xf32> -> vector<8x32xf32>
    %402 = arith.index_cast %398 : i32 to index
    %c0_186 = arith.constant 0 : index
    %403 = vector.load %arg16[%402, %c0_186] : memref<64x32xf32, #tpu.memory_space<vmem>>, vector<8x32xf32>
    %404 = arith.addf %403, %399 : vector<8x32xf32>
    %405 = arith.negf %404 : vector<8x32xf32>
    %406 = math.exp %405 : vector<8x32xf32>
    %cst_187 = arith.constant 1.000000e+00 : f32
    %407 = vector.broadcast %cst_187 : f32 to vector<8x32xf32>
    %408 = arith.addf %407, %406 : vector<8x32xf32>
    %409 = arith.divf %407, %408 : vector<8x32xf32>
    %410 = arith.index_cast %398 : i32 to index
    %c0_188 = arith.constant 0 : index
    %411 = vector.load %arg17[%410, %c0_188] : memref<64x32xf32, #tpu.memory_space<vmem>>, vector<8x32xf32>
    %412 = arith.addf %411, %400 : vector<8x32xf32>
    %413 = arith.negf %412 : vector<8x32xf32>
    %414 = math.exp %413 : vector<8x32xf32>
    %cst_189 = arith.constant 1.000000e+00 : f32
    %415 = vector.broadcast %cst_189 : f32 to vector<8x32xf32>
    %416 = arith.addf %415, %414 : vector<8x32xf32>
    %417 = arith.divf %415, %416 : vector<8x32xf32>
    %418 = arith.index_cast %398 : i32 to index
    %c0_190 = arith.constant 0 : index
    %419 = vector.load %arg18[%418, %c0_190] : memref<64x32xf32, #tpu.memory_space<vmem>>, vector<8x32xf32>
    %420 = vector.broadcast %329 : vector<1x32xf32> to vector<8x32xf32>
    %421 = arith.addf %401, %420 : vector<8x32xf32>
    %422 = arith.mulf %409, %421 : vector<8x32xf32>
    %423 = arith.addf %419, %422 : vector<8x32xf32>
    %424 = math.tanh %423 : vector<8x32xf32>
    %425 = arith.subf %394, %424 : vector<8x32xf32>
    %426 = arith.mulf %417, %425 : vector<8x32xf32>
    %427 = arith.addf %424, %426 : vector<8x32xf32>
    %428 = arith.index_cast %398 : i32 to index
    %c0_191 = arith.constant 0 : index
    %429 = vector.load %arg19[%428, %c0_191] : memref<64x32xf32, #tpu.memory_space<vmem>>, vector<8x32xf32>
    tpu.vector_store %arg19[%428, %c0_191], %427 {strides = array<i32>} : memref<64x32xf32, #tpu.memory_space<vmem>>, vector<8x32xf32>,
    %c3_i32_192 = arith.constant 3 : i32
    %c8_i32_193 = arith.constant 8 : i32
    %430 = arith.muli %c3_i32_192, %c8_i32_193 : i32
    %431 = tpu.assume_multiple %430, 8 : i32
    %cst_194 = arith.constant dense<0.000000e+00> : vector<8x32xf32>
    %432 = tpu.matmul %427, %324, %cst_194 {dimension_numbers = #tpu.dot_dimension_numbers<[1], [0], [0], [1], [0, 0, 1, 1], [], []>} : vector<8x32xf32>, vector<32x32xf32>, vector<8x32xf32> -> vector<8x32xf32>
    %cst_195 = arith.constant dense<0.000000e+00> : vector<8x32xf32>
    %433 = tpu.matmul %427, %326, %cst_195 {dimension_numbers = #tpu.dot_dimension_numbers<[1], [0], [0], [1], [0, 0, 1, 1], [], []>} : vector<8x32xf32>, vector<32x32xf32>, vector<8x32xf32> -> vector<8x32xf32>
    %cst_196 = arith.constant dense<0.000000e+00> : vector<8x32xf32>
    %434 = tpu.matmul %427, %328, %cst_196 {dimension_numbers = #tpu.dot_dimension_numbers<[1], [0], [0], [1], [0, 0, 1, 1], [], []>} : vector<8x32xf32>, vector<32x32xf32>, vector<8x32xf32> -> vector<8x32xf32>
    %435 = arith.index_cast %431 : i32 to index
    %c0_197 = arith.constant 0 : index
    %436 = vector.load %arg16[%435, %c0_197] : memref<64x32xf32, #tpu.memory_space<vmem>>, vector<8x32xf32>
    %437 = arith.addf %436, %432 : vector<8x32xf32>
    %438 = arith.negf %437 : vector<8x32xf32>
    %439 = math.exp %438 : vector<8x32xf32>
    %cst_198 = arith.constant 1.000000e+00 : f32
    %440 = vector.broadcast %cst_198 : f32 to vector<8x32xf32>
    %441 = arith.addf %440, %439 : vector<8x32xf32>
    %442 = arith.divf %440, %441 : vector<8x32xf32>
    %443 = arith.index_cast %431 : i32 to index
    %c0_199 = arith.constant 0 : index
    %444 = vector.load %arg17[%443, %c0_199] : memref<64x32xf32, #tpu.memory_space<vmem>>, vector<8x32xf32>
    %445 = arith.addf %444, %433 : vector<8x32xf32>
    %446 = arith.negf %445 : vector<8x32xf32>
    %447 = math.exp %446 : vector<8x32xf32>
    %cst_200 = arith.constant 1.000000e+00 : f32
    %448 = vector.broadcast %cst_200 : f32 to vector<8x32xf32>
    %449 = arith.addf %448, %447 : vector<8x32xf32>
    %450 = arith.divf %448, %449 : vector<8x32xf32>
    %451 = arith.index_cast %431 : i32 to index
    %c0_201 = arith.constant 0 : index
    %452 = vector.load %arg18[%451, %c0_201] : memref<64x32xf32, #tpu.memory_space<vmem>>, vector<8x32xf32>
    %453 = vector.broadcast %329 : vector<1x32xf32> to vector<8x32xf32>
    %454 = arith.addf %434, %453 : vector<8x32xf32>
    %455 = arith.mulf %442, %454 : vector<8x32xf32>
    %456 = arith.addf %452, %455 : vector<8x32xf32>
    %457 = math.tanh %456 : vector<8x32xf32>
    %458 = arith.subf %427, %457 : vector<8x32xf32>
    %459 = arith.mulf %450, %458 : vector<8x32xf32>
    %460 = arith.addf %457, %459 : vector<8x32xf32>
    %461 = arith.index_cast %431 : i32 to index
    %c0_202 = arith.constant 0 : index
    %462 = vector.load %arg19[%461, %c0_202] : memref<64x32xf32, #tpu.memory_space<vmem>>, vector<8x32xf32>
    tpu.vector_store %arg19[%461, %c0_202], %460 {strides = array<i32>} : memref<64x32xf32, #tpu.memory_space<vmem>>, vector<8x32xf32>,
    %c4_i32_203 = arith.constant 4 : i32
    %c8_i32_204 = arith.constant 8 : i32
    %463 = arith.muli %c4_i32_203, %c8_i32_204 : i32
    %464 = tpu.assume_multiple %463, 8 : i32
    %cst_205 = arith.constant dense<0.000000e+00> : vector<8x32xf32>
    %465 = tpu.matmul %460, %324, %cst_205 {dimension_numbers = #tpu.dot_dimension_numbers<[1], [0], [0], [1], [0, 0, 1, 1], [], []>} : vector<8x32xf32>, vector<32x32xf32>, vector<8x32xf32> -> vector<8x32xf32>
    %cst_206 = arith.constant dense<0.000000e+00> : vector<8x32xf32>
    %466 = tpu.matmul %460, %326, %cst_206 {dimension_numbers = #tpu.dot_dimension_numbers<[1], [0], [0], [1], [0, 0, 1, 1], [], []>} : vector<8x32xf32>, vector<32x32xf32>, vector<8x32xf32> -> vector<8x32xf32>
    %cst_207 = arith.constant dense<0.000000e+00> : vector<8x32xf32>
    %467 = tpu.matmul %460, %328, %cst_207 {dimension_numbers = #tpu.dot_dimension_numbers<[1], [0], [0], [1], [0, 0, 1, 1], [], []>} : vector<8x32xf32>, vector<32x32xf32>, vector<8x32xf32> -> vector<8x32xf32>
    %468 = arith.index_cast %464 : i32 to index
    %c0_208 = arith.constant 0 : index
    %469 = vector.load %arg16[%468, %c0_208] : memref<64x32xf32, #tpu.memory_space<vmem>>, vector<8x32xf32>
    %470 = arith.addf %469, %465 : vector<8x32xf32>
    %471 = arith.negf %470 : vector<8x32xf32>
    %472 = math.exp %471 : vector<8x32xf32>
    %cst_209 = arith.constant 1.000000e+00 : f32
    %473 = vector.broadcast %cst_209 : f32 to vector<8x32xf32>
    %474 = arith.addf %473, %472 : vector<8x32xf32>
    %475 = arith.divf %473, %474 : vector<8x32xf32>
    %476 = arith.index_cast %464 : i32 to index
    %c0_210 = arith.constant 0 : index
    %477 = vector.load %arg17[%476, %c0_210] : memref<64x32xf32, #tpu.memory_space<vmem>>, vector<8x32xf32>
    %478 = arith.addf %477, %466 : vector<8x32xf32>
    %479 = arith.negf %478 : vector<8x32xf32>
    %480 = math.exp %479 : vector<8x32xf32>
    %cst_211 = arith.constant 1.000000e+00 : f32
    %481 = vector.broadcast %cst_211 : f32 to vector<8x32xf32>
    %482 = arith.addf %481, %480 : vector<8x32xf32>
    %483 = arith.divf %481, %482 : vector<8x32xf32>
    %484 = arith.index_cast %464 : i32 to index
    %c0_212 = arith.constant 0 : index
    %485 = vector.load %arg18[%484, %c0_212] : memref<64x32xf32, #tpu.memory_space<vmem>>, vector<8x32xf32>
    %486 = vector.broadcast %329 : vector<1x32xf32> to vector<8x32xf32>
    %487 = arith.addf %467, %486 : vector<8x32xf32>
    %488 = arith.mulf %475, %487 : vector<8x32xf32>
    %489 = arith.addf %485, %488 : vector<8x32xf32>
    %490 = math.tanh %489 : vector<8x32xf32>
    %491 = arith.subf %460, %490 : vector<8x32xf32>
    %492 = arith.mulf %483, %491 : vector<8x32xf32>
    %493 = arith.addf %490, %492 : vector<8x32xf32>
    %494 = arith.index_cast %464 : i32 to index
    %c0_213 = arith.constant 0 : index
    %495 = vector.load %arg19[%494, %c0_213] : memref<64x32xf32, #tpu.memory_space<vmem>>, vector<8x32xf32>
    tpu.vector_store %arg19[%494, %c0_213], %493 {strides = array<i32>} : memref<64x32xf32, #tpu.memory_space<vmem>>, vector<8x32xf32>,
    %c5_i32_214 = arith.constant 5 : i32
    %c8_i32_215 = arith.constant 8 : i32
    %496 = arith.muli %c5_i32_214, %c8_i32_215 : i32
    %497 = tpu.assume_multiple %496, 8 : i32
    %cst_216 = arith.constant dense<0.000000e+00> : vector<8x32xf32>
    %498 = tpu.matmul %493, %324, %cst_216 {dimension_numbers = #tpu.dot_dimension_numbers<[1], [0], [0], [1], [0, 0, 1, 1], [], []>} : vector<8x32xf32>, vector<32x32xf32>, vector<8x32xf32> -> vector<8x32xf32>
    %cst_217 = arith.constant dense<0.000000e+00> : vector<8x32xf32>
    %499 = tpu.matmul %493, %326, %cst_217 {dimension_numbers = #tpu.dot_dimension_numbers<[1], [0], [0], [1], [0, 0, 1, 1], [], []>} : vector<8x32xf32>, vector<32x32xf32>, vector<8x32xf32> -> vector<8x32xf32>
    %cst_218 = arith.constant dense<0.000000e+00> : vector<8x32xf32>
    %500 = tpu.matmul %493, %328, %cst_218 {dimension_numbers = #tpu.dot_dimension_numbers<[1], [0], [0], [1], [0, 0, 1, 1], [], []>} : vector<8x32xf32>, vector<32x32xf32>, vector<8x32xf32> -> vector<8x32xf32>
    %501 = arith.index_cast %497 : i32 to index
    %c0_219 = arith.constant 0 : index
    %502 = vector.load %arg16[%501, %c0_219] : memref<64x32xf32, #tpu.memory_space<vmem>>, vector<8x32xf32>
    %503 = arith.addf %502, %498 : vector<8x32xf32>
    %504 = arith.negf %503 : vector<8x32xf32>
    %505 = math.exp %504 : vector<8x32xf32>
    %cst_220 = arith.constant 1.000000e+00 : f32
    %506 = vector.broadcast %cst_220 : f32 to vector<8x32xf32>
    %507 = arith.addf %506, %505 : vector<8x32xf32>
    %508 = arith.divf %506, %507 : vector<8x32xf32>
    %509 = arith.index_cast %497 : i32 to index
    %c0_221 = arith.constant 0 : index
    %510 = vector.load %arg17[%509, %c0_221] : memref<64x32xf32, #tpu.memory_space<vmem>>, vector<8x32xf32>
    %511 = arith.addf %510, %499 : vector<8x32xf32>
    %512 = arith.negf %511 : vector<8x32xf32>
    %513 = math.exp %512 : vector<8x32xf32>
    %cst_222 = arith.constant 1.000000e+00 : f32
    %514 = vector.broadcast %cst_222 : f32 to vector<8x32xf32>
    %515 = arith.addf %514, %513 : vector<8x32xf32>
    %516 = arith.divf %514, %515 : vector<8x32xf32>
    %517 = arith.index_cast %497 : i32 to index
    %c0_223 = arith.constant 0 : index
    %518 = vector.load %arg18[%517, %c0_223] : memref<64x32xf32, #tpu.memory_space<vmem>>, vector<8x32xf32>
    %519 = vector.broadcast %329 : vector<1x32xf32> to vector<8x32xf32>
    %520 = arith.addf %500, %519 : vector<8x32xf32>
    %521 = arith.mulf %508, %520 : vector<8x32xf32>
    %522 = arith.addf %518, %521 : vector<8x32xf32>
    %523 = math.tanh %522 : vector<8x32xf32>
    %524 = arith.subf %493, %523 : vector<8x32xf32>
    %525 = arith.mulf %516, %524 : vector<8x32xf32>
    %526 = arith.addf %523, %525 : vector<8x32xf32>
    %527 = arith.index_cast %497 : i32 to index
    %c0_224 = arith.constant 0 : index
    %528 = vector.load %arg19[%527, %c0_224] : memref<64x32xf32, #tpu.memory_space<vmem>>, vector<8x32xf32>
    tpu.vector_store %arg19[%527, %c0_224], %526 {strides = array<i32>} : memref<64x32xf32, #tpu.memory_space<vmem>>, vector<8x32xf32>,
    %c6_i32_225 = arith.constant 6 : i32
    %c8_i32_226 = arith.constant 8 : i32
    %529 = arith.muli %c6_i32_225, %c8_i32_226 : i32
    %530 = tpu.assume_multiple %529, 8 : i32
    %cst_227 = arith.constant dense<0.000000e+00> : vector<8x32xf32>
    %531 = tpu.matmul %526, %324, %cst_227 {dimension_numbers = #tpu.dot_dimension_numbers<[1], [0], [0], [1], [0, 0, 1, 1], [], []>} : vector<8x32xf32>, vector<32x32xf32>, vector<8x32xf32> -> vector<8x32xf32>
    %cst_228 = arith.constant dense<0.000000e+00> : vector<8x32xf32>
    %532 = tpu.matmul %526, %326, %cst_228 {dimension_numbers = #tpu.dot_dimension_numbers<[1], [0], [0], [1], [0, 0, 1, 1], [], []>} : vector<8x32xf32>, vector<32x32xf32>, vector<8x32xf32> -> vector<8x32xf32>
    %cst_229 = arith.constant dense<0.000000e+00> : vector<8x32xf32>
    %533 = tpu.matmul %526, %328, %cst_229 {dimension_numbers = #tpu.dot_dimension_numbers<[1], [0], [0], [1], [0, 0, 1, 1], [], []>} : vector<8x32xf32>, vector<32x32xf32>, vector<8x32xf32> -> vector<8x32xf32>
    %534 = arith.index_cast %530 : i32 to index
    %c0_230 = arith.constant 0 : index
    %535 = vector.load %arg16[%534, %c0_230] : memref<64x32xf32, #tpu.memory_space<vmem>>, vector<8x32xf32>
    %536 = arith.addf %535, %531 : vector<8x32xf32>
    %537 = arith.negf %536 : vector<8x32xf32>
    %538 = math.exp %537 : vector<8x32xf32>
    %cst_231 = arith.constant 1.000000e+00 : f32
    %539 = vector.broadcast %cst_231 : f32 to vector<8x32xf32>
    %540 = arith.addf %539, %538 : vector<8x32xf32>
    %541 = arith.divf %539, %540 : vector<8x32xf32>
    %542 = arith.index_cast %530 : i32 to index
    %c0_232 = arith.constant 0 : index
    %543 = vector.load %arg17[%542, %c0_232] : memref<64x32xf32, #tpu.memory_space<vmem>>, vector<8x32xf32>
    %544 = arith.addf %543, %532 : vector<8x32xf32>
    %545 = arith.negf %544 : vector<8x32xf32>
    %546 = math.exp %545 : vector<8x32xf32>
    %cst_233 = arith.constant 1.000000e+00 : f32
    %547 = vector.broadcast %cst_233 : f32 to vector<8x32xf32>
    %548 = arith.addf %547, %546 : vector<8x32xf32>
    %549 = arith.divf %547, %548 : vector<8x32xf32>
    %550 = arith.index_cast %530 : i32 to index
    %c0_234 = arith.constant 0 : index
    %551 = vector.load %arg18[%550, %c0_234] : memref<64x32xf32, #tpu.memory_space<vmem>>, vector<8x32xf32>
    %552 = vector.broadcast %329 : vector<1x32xf32> to vector<8x32xf32>
    %553 = arith.addf %533, %552 : vector<8x32xf32>
    %554 = arith.mulf %541, %553 : vector<8x32xf32>
    %555 = arith.addf %551, %554 : vector<8x32xf32>
    %556 = math.tanh %555 : vector<8x32xf32>
    %557 = arith.subf %526, %556 : vector<8x32xf32>
    %558 = arith.mulf %549, %557 : vector<8x32xf32>
    %559 = arith.addf %556, %558 : vector<8x32xf32>
    %560 = arith.index_cast %530 : i32 to index
    %c0_235 = arith.constant 0 : index
    %561 = vector.load %arg19[%560, %c0_235] : memref<64x32xf32, #tpu.memory_space<vmem>>, vector<8x32xf32>
    tpu.vector_store %arg19[%560, %c0_235], %559 {strides = array<i32>} : memref<64x32xf32, #tpu.memory_space<vmem>>, vector<8x32xf32>,
    %c7_i32_236 = arith.constant 7 : i32
    %c8_i32_237 = arith.constant 8 : i32
    %562 = arith.muli %c7_i32_236, %c8_i32_237 : i32
    %563 = tpu.assume_multiple %562, 8 : i32
    %cst_238 = arith.constant dense<0.000000e+00> : vector<8x32xf32>
    %564 = tpu.matmul %559, %324, %cst_238 {dimension_numbers = #tpu.dot_dimension_numbers<[1], [0], [0], [1], [0, 0, 1, 1], [], []>} : vector<8x32xf32>, vector<32x32xf32>, vector<8x32xf32> -> vector<8x32xf32>
    %cst_239 = arith.constant dense<0.000000e+00> : vector<8x32xf32>
    %565 = tpu.matmul %559, %326, %cst_239 {dimension_numbers = #tpu.dot_dimension_numbers<[1], [0], [0], [1], [0, 0, 1, 1], [], []>} : vector<8x32xf32>, vector<32x32xf32>, vector<8x32xf32> -> vector<8x32xf32>
    %cst_240 = arith.constant dense<0.000000e+00> : vector<8x32xf32>
    %566 = tpu.matmul %559, %328, %cst_240 {dimension_numbers = #tpu.dot_dimension_numbers<[1], [0], [0], [1], [0, 0, 1, 1], [], []>} : vector<8x32xf32>, vector<32x32xf32>, vector<8x32xf32> -> vector<8x32xf32>
    %567 = arith.index_cast %563 : i32 to index
    %c0_241 = arith.constant 0 : index
    %568 = vector.load %arg16[%567, %c0_241] : memref<64x32xf32, #tpu.memory_space<vmem>>, vector<8x32xf32>
    %569 = arith.addf %568, %564 : vector<8x32xf32>
    %570 = arith.negf %569 : vector<8x32xf32>
    %571 = math.exp %570 : vector<8x32xf32>
    %cst_242 = arith.constant 1.000000e+00 : f32
    %572 = vector.broadcast %cst_242 : f32 to vector<8x32xf32>
    %573 = arith.addf %572, %571 : vector<8x32xf32>
    %574 = arith.divf %572, %573 : vector<8x32xf32>
    %575 = arith.index_cast %563 : i32 to index
    %c0_243 = arith.constant 0 : index
    %576 = vector.load %arg17[%575, %c0_243] : memref<64x32xf32, #tpu.memory_space<vmem>>, vector<8x32xf32>
    %577 = arith.addf %576, %565 : vector<8x32xf32>
    %578 = arith.negf %577 : vector<8x32xf32>
    %579 = math.exp %578 : vector<8x32xf32>
    %cst_244 = arith.constant 1.000000e+00 : f32
    %580 = vector.broadcast %cst_244 : f32 to vector<8x32xf32>
    %581 = arith.addf %580, %579 : vector<8x32xf32>
    %582 = arith.divf %580, %581 : vector<8x32xf32>
    %583 = arith.index_cast %563 : i32 to index
    %c0_245 = arith.constant 0 : index
    %584 = vector.load %arg18[%583, %c0_245] : memref<64x32xf32, #tpu.memory_space<vmem>>, vector<8x32xf32>
    %585 = vector.broadcast %329 : vector<1x32xf32> to vector<8x32xf32>
    %586 = arith.addf %566, %585 : vector<8x32xf32>
    %587 = arith.mulf %574, %586 : vector<8x32xf32>
    %588 = arith.addf %584, %587 : vector<8x32xf32>
    %589 = math.tanh %588 : vector<8x32xf32>
    %590 = arith.subf %559, %589 : vector<8x32xf32>
    %591 = arith.mulf %582, %590 : vector<8x32xf32>
    %592 = arith.addf %589, %591 : vector<8x32xf32>
    %593 = arith.index_cast %563 : i32 to index
    %c0_246 = arith.constant 0 : index
    %594 = vector.load %arg19[%593, %c0_246] : memref<64x32xf32, #tpu.memory_space<vmem>>, vector<8x32xf32>
    tpu.vector_store %arg19[%593, %c0_246], %592 {strides = array<i32>} : memref<64x32xf32, #tpu.memory_space<vmem>>, vector<8x32xf32>,
    %c8_i32_247 = arith.constant 8 : i32
    %c0_248 = arith.constant 0 : index
    %c0_249 = arith.constant 0 : index
    %595 = vector.load %arg19[%c0_248, %c0_249] : memref<64x32xf32, #tpu.memory_space<vmem>>, vector<64x32xf32>
    %c0_250 = arith.constant 0 : index
    %c0_251 = arith.constant 0 : index
    %596 = vector.load %arg10[%c0_250, %c0_251] : memref<32x32xf32, #tpu.memory_space<vmem>>, vector<32x32xf32>
    %cst_252 = arith.constant dense<0.000000e+00> : vector<64x32xf32>
    %597 = tpu.matmul %595, %596, %cst_252 {dimension_numbers = #tpu.dot_dimension_numbers<[1], [0], [0], [1], [0, 0, 1, 1], [], []>} : vector<64x32xf32>, vector<32x32xf32>, vector<64x32xf32> -> vector<64x32xf32>
    %c0_253 = arith.constant 0 : index
    %c0_254 = arith.constant 0 : index
    %598 = vector.load %arg11[%c0_253, %c0_254] : memref<1x32xf32, #tpu.memory_space<vmem>>, vector<1x32xf32>
    %599 = vector.broadcast %598 : vector<1x32xf32> to vector<64x32xf32>
    %600 = arith.addf %597, %599 : vector<64x32xf32>
    %601 = math.tanh %600 : vector<64x32xf32>
    %c0_255 = arith.constant 0 : index
    %c0_256 = arith.constant 0 : index
    %602 = vector.load %arg12[%c0_255, %c0_256] : memref<32x1xf32, #tpu.memory_space<vmem>>, vector<32x1xf32>
    %cst_257 = arith.constant dense<0.000000e+00> : vector<64x1xf32>
    %603 = tpu.matmul %601, %602, %cst_257 {dimension_numbers = #tpu.dot_dimension_numbers<[1], [0], [0], [1], [0, 0, 1, 1], [], []>} : vector<64x32xf32>, vector<32x1xf32>, vector<64x1xf32> -> vector<64x1xf32>
    %c0_258 = arith.constant 0 : index
    %c0_259 = arith.constant 0 : index
    %604 = vector.load %arg20[%c0_258, %c0_259] : memref<64x1xf32, #tpu.memory_space<vmem>>, vector<64x1xf32>
    tpu.vector_store %arg20[%c0_258, %c0_259], %603 {strides = array<i32>} : memref<64x1xf32, #tpu.memory_space<vmem>>, vector<64x1xf32>,
    %cst_260 = arith.constant 0xFF800000 : f32
    %605 = vector.broadcast %cst_260 : f32 to vector<8x1xf32>
    %c0_i32_261 = arith.constant 0 : i32
    %c8_i32_262 = arith.constant 8 : i32
    %606 = arith.muli %c0_i32_261, %c8_i32_262 : i32
    %607 = tpu.assume_multiple %606, 8 : i32
    %608 = arith.index_cast %607 : i32 to index
    %c0_263 = arith.constant 0 : index
    %609 = vector.load %arg20[%608, %c0_263] : memref<64x1xf32, #tpu.memory_space<vmem>>, vector<8x1xf32>
    %610 = arith.maximumf %605, %609 : vector<8x1xf32>
    %c1_i32_264 = arith.constant 1 : i32
    %c8_i32_265 = arith.constant 8 : i32
    %611 = arith.muli %c1_i32_264, %c8_i32_265 : i32
    %612 = tpu.assume_multiple %611, 8 : i32
    %613 = arith.index_cast %612 : i32 to index
    %c0_266 = arith.constant 0 : index
    %614 = vector.load %arg20[%613, %c0_266] : memref<64x1xf32, #tpu.memory_space<vmem>>, vector<8x1xf32>
    %615 = arith.maximumf %610, %614 : vector<8x1xf32>
    %c2_i32_267 = arith.constant 2 : i32
    %c8_i32_268 = arith.constant 8 : i32
    %616 = arith.muli %c2_i32_267, %c8_i32_268 : i32
    %617 = tpu.assume_multiple %616, 8 : i32
    %618 = arith.index_cast %617 : i32 to index
    %c0_269 = arith.constant 0 : index
    %619 = vector.load %arg20[%618, %c0_269] : memref<64x1xf32, #tpu.memory_space<vmem>>, vector<8x1xf32>
    %620 = arith.maximumf %615, %619 : vector<8x1xf32>
    %c3_i32_270 = arith.constant 3 : i32
    %c8_i32_271 = arith.constant 8 : i32
    %621 = arith.muli %c3_i32_270, %c8_i32_271 : i32
    %622 = tpu.assume_multiple %621, 8 : i32
    %623 = arith.index_cast %622 : i32 to index
    %c0_272 = arith.constant 0 : index
    %624 = vector.load %arg20[%623, %c0_272] : memref<64x1xf32, #tpu.memory_space<vmem>>, vector<8x1xf32>
    %625 = arith.maximumf %620, %624 : vector<8x1xf32>
    %c4_i32_273 = arith.constant 4 : i32
    %c8_i32_274 = arith.constant 8 : i32
    %626 = arith.muli %c4_i32_273, %c8_i32_274 : i32
    %627 = tpu.assume_multiple %626, 8 : i32
    %628 = arith.index_cast %627 : i32 to index
    %c0_275 = arith.constant 0 : index
    %629 = vector.load %arg20[%628, %c0_275] : memref<64x1xf32, #tpu.memory_space<vmem>>, vector<8x1xf32>
    %630 = arith.maximumf %625, %629 : vector<8x1xf32>
    %c5_i32_276 = arith.constant 5 : i32
    %c8_i32_277 = arith.constant 8 : i32
    %631 = arith.muli %c5_i32_276, %c8_i32_277 : i32
    %632 = tpu.assume_multiple %631, 8 : i32
    %633 = arith.index_cast %632 : i32 to index
    %c0_278 = arith.constant 0 : index
    %634 = vector.load %arg20[%633, %c0_278] : memref<64x1xf32, #tpu.memory_space<vmem>>, vector<8x1xf32>
    %635 = arith.maximumf %630, %634 : vector<8x1xf32>
    %c6_i32_279 = arith.constant 6 : i32
    %c8_i32_280 = arith.constant 8 : i32
    %636 = arith.muli %c6_i32_279, %c8_i32_280 : i32
    %637 = tpu.assume_multiple %636, 8 : i32
    %638 = arith.index_cast %637 : i32 to index
    %c0_281 = arith.constant 0 : index
    %639 = vector.load %arg20[%638, %c0_281] : memref<64x1xf32, #tpu.memory_space<vmem>>, vector<8x1xf32>
    %640 = arith.maximumf %635, %639 : vector<8x1xf32>
    %c7_i32_282 = arith.constant 7 : i32
    %c8_i32_283 = arith.constant 8 : i32
    %641 = arith.muli %c7_i32_282, %c8_i32_283 : i32
    %642 = tpu.assume_multiple %641, 8 : i32
    %643 = arith.index_cast %642 : i32 to index
    %c0_284 = arith.constant 0 : index
    %644 = vector.load %arg20[%643, %c0_284] : memref<64x1xf32, #tpu.memory_space<vmem>>, vector<8x1xf32>
    %645 = arith.maximumf %640, %644 : vector<8x1xf32>
    %c8_i32_285 = arith.constant 8 : i32
    %cst_286 = arith.constant 0.000000e+00 : f32
    %646 = vector.broadcast %cst_286 : f32 to vector<8x1xf32>
    %cst_287 = arith.constant 0.000000e+00 : f32
    %647 = vector.broadcast %cst_287 : f32 to vector<8x32xf32>
    %c0_i32_288 = arith.constant 0 : i32
    %c8_i32_289 = arith.constant 8 : i32
    %648 = arith.muli %c0_i32_288, %c8_i32_289 : i32
    %649 = tpu.assume_multiple %648, 8 : i32
    %650 = arith.index_cast %649 : i32 to index
    %c0_290 = arith.constant 0 : index
    %651 = vector.load %arg20[%650, %c0_290] : memref<64x1xf32, #tpu.memory_space<vmem>>, vector<8x1xf32>
    %652 = arith.subf %651, %645 : vector<8x1xf32>
    %653 = math.exp %652 : vector<8x1xf32>
    %654 = arith.addf %646, %653 : vector<8x1xf32>
    %655 = arith.index_cast %649 : i32 to index
    %c0_291 = arith.constant 0 : index
    %656 = vector.load %arg19[%655, %c0_291] : memref<64x32xf32, #tpu.memory_space<vmem>>, vector<8x32xf32>
    %657 = vector.broadcast %653 : vector<8x1xf32> to vector<8x32xf32>
    %658 = arith.mulf %657, %656 : vector<8x32xf32>
    %659 = arith.addf %647, %658 : vector<8x32xf32>
    %c1_i32_292 = arith.constant 1 : i32
    %c8_i32_293 = arith.constant 8 : i32
    %660 = arith.muli %c1_i32_292, %c8_i32_293 : i32
    %661 = tpu.assume_multiple %660, 8 : i32
    %662 = arith.index_cast %661 : i32 to index
    %c0_294 = arith.constant 0 : index
    %663 = vector.load %arg20[%662, %c0_294] : memref<64x1xf32, #tpu.memory_space<vmem>>, vector<8x1xf32>
    %664 = arith.subf %663, %645 : vector<8x1xf32>
    %665 = math.exp %664 : vector<8x1xf32>
    %666 = arith.addf %654, %665 : vector<8x1xf32>
    %667 = arith.index_cast %661 : i32 to index
    %c0_295 = arith.constant 0 : index
    %668 = vector.load %arg19[%667, %c0_295] : memref<64x32xf32, #tpu.memory_space<vmem>>, vector<8x32xf32>
    %669 = vector.broadcast %665 : vector<8x1xf32> to vector<8x32xf32>
    %670 = arith.mulf %669, %668 : vector<8x32xf32>
    %671 = arith.addf %659, %670 : vector<8x32xf32>
    %c2_i32_296 = arith.constant 2 : i32
    %c8_i32_297 = arith.constant 8 : i32
    %672 = arith.muli %c2_i32_296, %c8_i32_297 : i32
    %673 = tpu.assume_multiple %672, 8 : i32
    %674 = arith.index_cast %673 : i32 to index
    %c0_298 = arith.constant 0 : index
    %675 = vector.load %arg20[%674, %c0_298] : memref<64x1xf32, #tpu.memory_space<vmem>>, vector<8x1xf32>
    %676 = arith.subf %675, %645 : vector<8x1xf32>
    %677 = math.exp %676 : vector<8x1xf32>
    %678 = arith.addf %666, %677 : vector<8x1xf32>
    %679 = arith.index_cast %673 : i32 to index
    %c0_299 = arith.constant 0 : index
    %680 = vector.load %arg19[%679, %c0_299] : memref<64x32xf32, #tpu.memory_space<vmem>>, vector<8x32xf32>
    %681 = vector.broadcast %677 : vector<8x1xf32> to vector<8x32xf32>
    %682 = arith.mulf %681, %680 : vector<8x32xf32>
    %683 = arith.addf %671, %682 : vector<8x32xf32>
    %c3_i32_300 = arith.constant 3 : i32
    %c8_i32_301 = arith.constant 8 : i32
    %684 = arith.muli %c3_i32_300, %c8_i32_301 : i32
    %685 = tpu.assume_multiple %684, 8 : i32
    %686 = arith.index_cast %685 : i32 to index
    %c0_302 = arith.constant 0 : index
    %687 = vector.load %arg20[%686, %c0_302] : memref<64x1xf32, #tpu.memory_space<vmem>>, vector<8x1xf32>
    %688 = arith.subf %687, %645 : vector<8x1xf32>
    %689 = math.exp %688 : vector<8x1xf32>
    %690 = arith.addf %678, %689 : vector<8x1xf32>
    %691 = arith.index_cast %685 : i32 to index
    %c0_303 = arith.constant 0 : index
    %692 = vector.load %arg19[%691, %c0_303] : memref<64x32xf32, #tpu.memory_space<vmem>>, vector<8x32xf32>
    %693 = vector.broadcast %689 : vector<8x1xf32> to vector<8x32xf32>
    %694 = arith.mulf %693, %692 : vector<8x32xf32>
    %695 = arith.addf %683, %694 : vector<8x32xf32>
    %c4_i32_304 = arith.constant 4 : i32
    %c8_i32_305 = arith.constant 8 : i32
    %696 = arith.muli %c4_i32_304, %c8_i32_305 : i32
    %697 = tpu.assume_multiple %696, 8 : i32
    %698 = arith.index_cast %697 : i32 to index
    %c0_306 = arith.constant 0 : index
    %699 = vector.load %arg20[%698, %c0_306] : memref<64x1xf32, #tpu.memory_space<vmem>>, vector<8x1xf32>
    %700 = arith.subf %699, %645 : vector<8x1xf32>
    %701 = math.exp %700 : vector<8x1xf32>
    %702 = arith.addf %690, %701 : vector<8x1xf32>
    %703 = arith.index_cast %697 : i32 to index
    %c0_307 = arith.constant 0 : index
    %704 = vector.load %arg19[%703, %c0_307] : memref<64x32xf32, #tpu.memory_space<vmem>>, vector<8x32xf32>
    %705 = vector.broadcast %701 : vector<8x1xf32> to vector<8x32xf32>
    %706 = arith.mulf %705, %704 : vector<8x32xf32>
    %707 = arith.addf %695, %706 : vector<8x32xf32>
    %c5_i32_308 = arith.constant 5 : i32
    %c8_i32_309 = arith.constant 8 : i32
    %708 = arith.muli %c5_i32_308, %c8_i32_309 : i32
    %709 = tpu.assume_multiple %708, 8 : i32
    %710 = arith.index_cast %709 : i32 to index
    %c0_310 = arith.constant 0 : index
    %711 = vector.load %arg20[%710, %c0_310] : memref<64x1xf32, #tpu.memory_space<vmem>>, vector<8x1xf32>
    %712 = arith.subf %711, %645 : vector<8x1xf32>
    %713 = math.exp %712 : vector<8x1xf32>
    %714 = arith.addf %702, %713 : vector<8x1xf32>
    %715 = arith.index_cast %709 : i32 to index
    %c0_311 = arith.constant 0 : index
    %716 = vector.load %arg19[%715, %c0_311] : memref<64x32xf32, #tpu.memory_space<vmem>>, vector<8x32xf32>
    %717 = vector.broadcast %713 : vector<8x1xf32> to vector<8x32xf32>
    %718 = arith.mulf %717, %716 : vector<8x32xf32>
    %719 = arith.addf %707, %718 : vector<8x32xf32>
    %c6_i32_312 = arith.constant 6 : i32
    %c8_i32_313 = arith.constant 8 : i32
    %720 = arith.muli %c6_i32_312, %c8_i32_313 : i32
    %721 = tpu.assume_multiple %720, 8 : i32
    %722 = arith.index_cast %721 : i32 to index
    %c0_314 = arith.constant 0 : index
    %723 = vector.load %arg20[%722, %c0_314] : memref<64x1xf32, #tpu.memory_space<vmem>>, vector<8x1xf32>
    %724 = arith.subf %723, %645 : vector<8x1xf32>
    %725 = math.exp %724 : vector<8x1xf32>
    %726 = arith.addf %714, %725 : vector<8x1xf32>
    %727 = arith.index_cast %721 : i32 to index
    %c0_315 = arith.constant 0 : index
    %728 = vector.load %arg19[%727, %c0_315] : memref<64x32xf32, #tpu.memory_space<vmem>>, vector<8x32xf32>
    %729 = vector.broadcast %725 : vector<8x1xf32> to vector<8x32xf32>
    %730 = arith.mulf %729, %728 : vector<8x32xf32>
    %731 = arith.addf %719, %730 : vector<8x32xf32>
    %c7_i32_316 = arith.constant 7 : i32
    %c8_i32_317 = arith.constant 8 : i32
    %732 = arith.muli %c7_i32_316, %c8_i32_317 : i32
    %733 = tpu.assume_multiple %732, 8 : i32
    %734 = arith.index_cast %733 : i32 to index
    %c0_318 = arith.constant 0 : index
    %735 = vector.load %arg20[%734, %c0_318] : memref<64x1xf32, #tpu.memory_space<vmem>>, vector<8x1xf32>
    %736 = arith.subf %735, %645 : vector<8x1xf32>
    %737 = math.exp %736 : vector<8x1xf32>
    %738 = arith.addf %726, %737 : vector<8x1xf32>
    %739 = arith.index_cast %733 : i32 to index
    %c0_319 = arith.constant 0 : index
    %740 = vector.load %arg19[%739, %c0_319] : memref<64x32xf32, #tpu.memory_space<vmem>>, vector<8x32xf32>
    %741 = vector.broadcast %737 : vector<8x1xf32> to vector<8x32xf32>
    %742 = arith.mulf %741, %740 : vector<8x32xf32>
    %743 = arith.addf %731, %742 : vector<8x32xf32>
    %c8_i32_320 = arith.constant 8 : i32
    %744 = vector.broadcast %738 : vector<8x1xf32> to vector<8x32xf32>
    %745 = arith.divf %743, %744 : vector<8x32xf32>
    %c56 = arith.constant 56 : index
    %c0_321 = arith.constant 0 : index
    %746 = vector.load %arg19[%c56, %c0_321] : memref<64x32xf32, #tpu.memory_space<vmem>>, vector<8x32xf32>
    %c0_322 = arith.constant 0 : index
    %c0_323 = arith.constant 0 : index
    %c0_324 = arith.constant 0 : index
    %747 = vector.load %arg13[%c0_322, %c0_323, %c0_324] : memref<2x32x128xf32, #tpu.memory_space<vmem>>, vector<1x32x128xf32>
    %748 = vector.shape_cast %747 : vector<1x32x128xf32> to vector<32x128xf32>
    %cst_325 = arith.constant dense<0.000000e+00> : vector<8x128xf32>
    %749 = tpu.matmul %746, %748, %cst_325 {dimension_numbers = #tpu.dot_dimension_numbers<[1], [0], [0], [1], [0, 0, 1, 1], [], []>} : vector<8x32xf32>, vector<32x128xf32>, vector<8x128xf32> -> vector<8x128xf32>
    %c1_326 = arith.constant 1 : index
    %c0_327 = arith.constant 0 : index
    %c0_328 = arith.constant 0 : index
    %750 = vector.load %arg13[%c1_326, %c0_327, %c0_328] : memref<2x32x128xf32, #tpu.memory_space<vmem>>, vector<1x32x128xf32>
    %751 = vector.shape_cast %750 : vector<1x32x128xf32> to vector<32x128xf32>
    %cst_329 = arith.constant dense<0.000000e+00> : vector<8x128xf32>
    %752 = tpu.matmul %745, %751, %cst_329 {dimension_numbers = #tpu.dot_dimension_numbers<[1], [0], [0], [1], [0, 0, 1, 1], [], []>} : vector<8x32xf32>, vector<32x128xf32>, vector<8x128xf32> -> vector<8x128xf32>
    %753 = arith.addf %749, %752 : vector<8x128xf32>
    %c0_330 = arith.constant 0 : index
    %c0_331 = arith.constant 0 : index
    %754 = vector.load %arg14[%c0_330, %c0_331] : memref<1x128xf32, #tpu.memory_space<vmem>>, vector<1x128xf32>
    %755 = vector.broadcast %754 : vector<1x128xf32> to vector<8x128xf32>
    %756 = arith.addf %753, %755 : vector<8x128xf32>
    %c0_332 = arith.constant 0 : index
    %c0_333 = arith.constant 0 : index
    %757 = vector.load %arg15[%c0_332, %c0_333] : memref<8x128xf32, #tpu.memory_space<vmem>>, vector<8x128xf32>
    tpu.vector_store %arg15[%c0_332, %c0_333], %756 {strides = array<i32>} : memref<8x128xf32, #tpu.memory_space<vmem>>, vector<8x128xf32>,
    return
  }
  func.func @transform_0(%arg0: i32) -> (i32, i32, i32) {
    %c0_i32 = arith.constant 0 : i32
    %c0_i32_0 = arith.constant 0 : i32
    %c0_i32_1 = arith.constant 0 : i32
    return %arg0, %c0_i32, %c0_i32_0 : i32, i32, i32
  }
  func.func @transform_1(%arg0: i32) -> (i32, i32, i32) {
    %c0_i32 = arith.constant 0 : i32
    %c0_i32_0 = arith.constant 0 : i32
    %c0_i32_1 = arith.constant 0 : i32
    %c0_i32_2 = arith.constant 0 : i32
    return %c0_i32, %c0_i32_0, %c0_i32_1 : i32, i32, i32
  }
  func.func @transform_2(%arg0: i32) -> (i32, i32, i32) {
    %c0_i32 = arith.constant 0 : i32
    %c0_i32_0 = arith.constant 0 : i32
    %c0_i32_1 = arith.constant 0 : i32
    %c0_i32_2 = arith.constant 0 : i32
    return %c0_i32, %c0_i32_0, %c0_i32_1 : i32, i32, i32
  }
  func.func @transform_3(%arg0: i32) -> (i32, i32, i32) {
    %c0_i32 = arith.constant 0 : i32
    %c0_i32_0 = arith.constant 0 : i32
    %c0_i32_1 = arith.constant 0 : i32
    %c0_i32_2 = arith.constant 0 : i32
    return %c0_i32, %c0_i32_0, %c0_i32_1 : i32, i32, i32
  }
  func.func @transform_4(%arg0: i32) -> (i32, i32) {
    %c0_i32 = arith.constant 0 : i32
    %c0_i32_0 = arith.constant 0 : i32
    %c0_i32_1 = arith.constant 0 : i32
    return %c0_i32, %c0_i32_0 : i32, i32
  }
  func.func @transform_5(%arg0: i32) -> (i32, i32, i32) {
    %c0_i32 = arith.constant 0 : i32
    %c0_i32_0 = arith.constant 0 : i32
    %c0_i32_1 = arith.constant 0 : i32
    %c0_i32_2 = arith.constant 0 : i32
    return %c0_i32, %c0_i32_0, %c0_i32_1 : i32, i32, i32
  }
  func.func @transform_6(%arg0: i32) -> (i32, i32, i32) {
    %c0_i32 = arith.constant 0 : i32
    %c0_i32_0 = arith.constant 0 : i32
    %c0_i32_1 = arith.constant 0 : i32
    %c0_i32_2 = arith.constant 0 : i32
    return %c0_i32, %c0_i32_0, %c0_i32_1 : i32, i32, i32
  }
  func.func @transform_7(%arg0: i32) -> (i32, i32, i32) {
    %c0_i32 = arith.constant 0 : i32
    %c0_i32_0 = arith.constant 0 : i32
    %c0_i32_1 = arith.constant 0 : i32
    %c0_i32_2 = arith.constant 0 : i32
    return %c0_i32, %c0_i32_0, %c0_i32_1 : i32, i32, i32
  }
  func.func @transform_8(%arg0: i32) -> (i32, i32) {
    %c0_i32 = arith.constant 0 : i32
    %c0_i32_0 = arith.constant 0 : i32
    %c0_i32_1 = arith.constant 0 : i32
    return %c0_i32, %c0_i32_0 : i32, i32
  }
  func.func @transform_9(%arg0: i32) -> (i32, i32) {
    %c0_i32 = arith.constant 0 : i32
    %c0_i32_0 = arith.constant 0 : i32
    %c0_i32_1 = arith.constant 0 : i32
    return %c0_i32, %c0_i32_0 : i32, i32
  }
  func.func @transform_10(%arg0: i32) -> (i32, i32) {
    %c0_i32 = arith.constant 0 : i32
    %c0_i32_0 = arith.constant 0 : i32
    %c0_i32_1 = arith.constant 0 : i32
    return %c0_i32, %c0_i32_0 : i32, i32
  }
  func.func @transform_11(%arg0: i32) -> (i32, i32) {
    %c0_i32 = arith.constant 0 : i32
    %c0_i32_0 = arith.constant 0 : i32
    %c0_i32_1 = arith.constant 0 : i32
    return %c0_i32, %c0_i32_0 : i32, i32
  }
  func.func @transform_12(%arg0: i32) -> (i32, i32, i32) {
    %c0_i32 = arith.constant 0 : i32
    %c0_i32_0 = arith.constant 0 : i32
    %c0_i32_1 = arith.constant 0 : i32
    %c0_i32_2 = arith.constant 0 : i32
    return %c0_i32, %c0_i32_0, %c0_i32_1 : i32, i32, i32
  }
  func.func @transform_13(%arg0: i32) -> (i32, i32) {
    %c0_i32 = arith.constant 0 : i32
    %c0_i32_0 = arith.constant 0 : i32
    %c0_i32_1 = arith.constant 0 : i32
    return %c0_i32, %c0_i32_0 : i32, i32
  }
  func.func @transform_14(%arg0: i32) -> (i32, i32) {
    %c0_i32 = arith.constant 0 : i32
    %c0_i32_0 = arith.constant 0 : i32
    return %arg0, %c0_i32 : i32, i32
  }
}

</mosaic_0001>

<llo_original>
// kernel: gru_model_forward.1
$region0: #{gru_model_forward.1}
  #allocation0 [shape = 'u32[]', space=smem, size = 0x4, offset = 0x4, fixed_abs, tag = 'smem constant byte address 0x4 - core index']
  #allocation1 [shape = 'u32[72,128]{1,0:T(1,128)}', space=vmem, size = 0x9000, scoped, tag = 'internal scratch']
  #allocation2 [shape = 'f32[64,32]{1,0:T(8,128)}', space=vmem, size = 0x8000, scoped, tag = 'scratch operand']
  #allocation3 [shape = 'f32[64,32]{1,0:T(8,128)}', space=vmem, size = 0x8000, scoped, tag = 'scratch operand']
  #allocation4 [shape = 'f32[64,32]{1,0:T(8,128)}', space=vmem, size = 0x8000, scoped, tag = 'scratch operand']
  #allocation5 [shape = 'f32[64,32]{1,0:T(8,128)}', space=vmem, size = 0x8000, scoped, tag = 'scratch operand']
  #allocation6 [shape = 'f32[64,1]{1,0:T(8,128)}', space=vmem, size = 0x8000, scoped, tag = 'scratch operand']
  %s0 = inlined_call_operand.vmem [shape: f32[1,64,16], index: 0, kind: input, shape index: {}]
  %s1 = inlined_call_operand.vmem [shape: f32[3,16,32], index: 1, kind: input, shape index: {}]
  %s2 = inlined_call_operand.vmem [shape: f32[3,32,32], index: 2, kind: input, shape index: {}]
  %s3 = inlined_call_operand.vmem [shape: f32[3,1,32], index: 3, kind: input, shape index: {}]
  %s4 = inlined_call_operand.vmem [shape: f32[1,32], index: 4, kind: input, shape index: {}]
  %s5 = inlined_call_operand.vmem [shape: f32[3,32,32], index: 5, kind: input, shape index: {}]
  %s6 = inlined_call_operand.vmem [shape: f32[3,32,32], index: 6, kind: input, shape index: {}]
  %s7 = inlined_call_operand.vmem [shape: f32[3,1,32], index: 7, kind: input, shape index: {}]
  %s8 = inlined_call_operand.vmem [shape: f32[1,32], index: 8, kind: input, shape index: {}]
  %s9 = inlined_call_operand.hbm [shape: f32[32,32], index: 9, kind: input, shape index: {}]
  %s10 = inlined_call_operand.vmem [shape: f32[1,32], index: 10, kind: input, shape index: {}]
  %s11 = inlined_call_operand.vmem [shape: f32[32,1], index: 11, kind: input, shape index: {}]
  %s12 = inlined_call_operand.vmem [shape: f32[2,32,128], index: 12, kind: input, shape index: {}]
  %s13 = inlined_call_operand.vmem [shape: f32[1,128], index: 13, kind: input, shape index: {}]
  %s14 = inlined_call_operand.vmem [shape: f32[8,128], index: 14, kind: output, shape index: {}]
  %s15 = sld [smem:[#allocation0]]
  $region70: #{gru_model_forward.1} parent=0
    _
  %s17 = ssub.s32 1, %s15
  %s18 = scalar_select 0, %s17, %s15
  $region1: #{gru_model_forward.1} parent=0
    #allocation7 [shape = 'u8[16384]{0}', space=vmem, size = 0x4000, scoped, tag = 'input window, operand 9, single buffered']
    #allocation8 [shape = 's32[1]{0}', space=sflag, size = 0x4, scoped, tag = 'scoped memory for gru_model_forward.1']
    %19 = vsyncpa [#allocation8], 0
    // Predicated region
    $region2: #{gru_model_forward.1} parent=1 // pred_check
      _
    $region3: #{gru_model_forward.1} parent=1 // pred_check_branch
      %21 = sbr.rel (0) target = $region5
    $region4: #{gru_model_forward.1} parent=1 // pred_region
      _
    $region5: #{gru_model_forward.1} parent=1 // pred_fallthru
      _
    // Predicated region
    $region6: #{gru_model_forward.1} parent=1 // pred_check
      _
    $region7: #{gru_model_forward.1} parent=1 // pred_check_branch
      %23 = sbr.rel (0) target = $region9
    $region8: #{gru_model_forward.1} parent=1 // pred_region
      _
    $region9: #{gru_model_forward.1} parent=1 // pred_fallthru
      _
    // Predicated region
    $region10: #{gru_model_forward.1} parent=1 // pred_check
      _
    $region11: #{gru_model_forward.1} parent=1 // pred_check_branch
      %25 = sbr.rel (0) target = $region13
    $region12: #{gru_model_forward.1} parent=1 // pred_region
      _
    $region13: #{gru_model_forward.1} parent=1 // pred_fallthru
      _
    // Predicated region
    $region14: #{gru_model_forward.1} parent=1 // pred_check
      _
    $region15: #{gru_model_forward.1} parent=1 // pred_check_branch
      %27 = sbr.rel (0) target = $region17
    $region16: #{gru_model_forward.1} parent=1 // pred_region
      _
    $region17: #{gru_model_forward.1} parent=1 // pred_fallthru
      _
    // Predicated region
    $region18: #{gru_model_forward.1} parent=1 // pred_check
      _
    $region19: #{gru_model_forward.1} parent=1 // pred_check_branch
      %29 = sbr.rel (0) target = $region21
    $region20: #{gru_model_forward.1} parent=1 // pred_region
      _
    $region21: #{gru_model_forward.1} parent=1 // pred_fallthru
      _
    // Predicated region
    $region22: #{gru_model_forward.1} parent=1 // pred_check
      _
    $region23: #{gru_model_forward.1} parent=1 // pred_check_branch
      %31 = sbr.rel (0) target = $region25
    $region24: #{gru_model_forward.1} parent=1 // pred_region
      _
    $region25: #{gru_model_forward.1} parent=1 // pred_fallthru
      _
    // Predicated region
    $region26: #{gru_model_forward.1} parent=1 // pred_check
      _
    $region27: #{gru_model_forward.1} parent=1 // pred_check_branch
      %33 = sbr.rel (0) target = $region29
    $region28: #{gru_model_forward.1} parent=1 // pred_region
      _
    $region29: #{gru_model_forward.1} parent=1 // pred_fallthru
      _
    // Predicated region
    $region30: #{gru_model_forward.1} parent=1 // pred_check
      _
    $region31: #{gru_model_forward.1} parent=1 // pred_check_branch
      %35 = sbr.rel (0) target = $region33
    $region32: #{gru_model_forward.1} parent=1 // pred_region
      _
    $region33: #{gru_model_forward.1} parent=1 // pred_fallthru
      _
    // Predicated region
    $region34: #{gru_model_forward.1} parent=1 // pred_check
      _
    $region35: #{gru_model_forward.1} parent=1 // pred_check_branch
      %37 = sbr.rel (0) target = $region37
    $region36: #{gru_model_forward.1} parent=1 // pred_region
      _
    $region37: #{gru_model_forward.1} parent=1 // pred_fallthru
      _
    // Predicated region
    $region38: #{gru_model_forward.1} parent=1 // pred_check
      _
    $region39: #{gru_model_forward.1} parent=1 // pred_check_branch
      %39 = sbr.rel (0) target = $region41
    $region40: #{gru_model_forward.1} parent=1 // pred_region
      %41 = vsyncadd [#allocation8], 0
      %s42 = sshll.u32 %s9, 4
      %s43 = int_to_ptr.hbm [resolvable:$true] %s42
      %s44 = sshll.u32 [#allocation7], 4
      %s45 = int_to_ptr.vmem [resolvable:$true] %s44
      %50 = dma.hbm_to_vmem [thread:$0]  %s43, 512, %s45, [#allocation8], 128, 128, 8
    $region41: #{gru_model_forward.1} parent=1 // pred_fallthru
      _
    // Predicated region
    $region42: #{gru_model_forward.1} parent=1 // pred_check
      _
    $region43: #{gru_model_forward.1} parent=1 // pred_check_branch
      %52 = sbr.rel (0) target = $region45
    $region44: #{gru_model_forward.1} parent=1 // pred_region
      _
    $region45: #{gru_model_forward.1} parent=1 // pred_fallthru
      _
    // Predicated region
    $region46: #{gru_model_forward.1} parent=1 // pred_check
      _
    $region47: #{gru_model_forward.1} parent=1 // pred_check_branch
      %54 = sbr.rel (0) target = $region49
    $region48: #{gru_model_forward.1} parent=1 // pred_region
      _
    $region49: #{gru_model_forward.1} parent=1 // pred_fallthru
      _
    // Predicated region
    $region50: #{gru_model_forward.1} parent=1 // pred_check
      _
    $region51: #{gru_model_forward.1} parent=1 // pred_check_branch
      %56 = sbr.rel (0) target = $region53
    $region52: #{gru_model_forward.1} parent=1 // pred_region
      _
    $region53: #{gru_model_forward.1} parent=1 // pred_fallthru
      _
    // Predicated region
    $region54: #{gru_model_forward.1} parent=1 // pred_check
      _
    $region55: #{gru_model_forward.1} parent=1 // pred_check_branch
      %58 = sbr.rel (0) target = $region57
    $region56: #{gru_model_forward.1} parent=1 // pred_region
      _
    $region57: #{gru_model_forward.1} parent=1 // pred_fallthru
      _
    // Predicated region
    $region58: #{gru_model_forward.1} parent=1 // pred_check
      _
    $region59: #{gru_model_forward.1} parent=1 // pred_check_branch
      %60 = sbr.rel (0) target = $region61
    $region60: #{gru_model_forward.1} parent=1 // pred_region
      %62 = dma.done [#allocation8], 512
    $region61: #{gru_model_forward.1} parent=1 // pred_fallthru
      _
    %v63 = vld [vmem:[%s0] sm:$0xff]
    %v64 = vld [vmem:[%s0 + $0x8] sm:$0xff]
    %v65 = vld [vmem:[%s0 + $0x10] sm:$0xff]
    %v66 = vld [vmem:[%s0 + $0x18] sm:$0xff]
    %v67 = vld [vmem:[%s0 + $0x20] sm:$0xff]
    %v68 = vld [vmem:[%s0 + $0x28] sm:$0xff]
    %v69 = vld [vmem:[%s0 + $0x30] sm:$0xff]
    %v70 = vld [vmem:[%s0 + $0x38] sm:$0xff]
    %v71 = vld [vmem:[%s1] sm:$0xff]
    %v72 = vld [vmem:[%s1 + $0x8] sm:$0xff]
    %v73 = vld [vmem:[%s3] sm:$0x1]
    %v75 = vperm.slane %v73, 0
    %vm77 = vcmask 130048
    %v79 = vsel %vm77, %v63, 0
    %v82 = vsel %vm77, %v64, 0
    %v85 = vsel %vm77, %v65, 0
    %v88 = vsel %vm77, %v66, 0
    %v91 = vsel %vm77, %v67, 0
    %v94 = vsel %vm77, %v68, 0
    %v97 = vsel %vm77, %v69, 0
    %v100 = vsel %vm77, %v70, 0
    %102 = vmatpush.msra.mxu0 0.0
    %103 = vmatpush.msra.mxu0 0.0
    %104 = vmatpush.msra.mxu0 0.0
    %105 = vmatpush.msra.mxu0 0.0
    %106 = vmatpush.msra.mxu0 0.0
    %107 = vmatpush.msra.mxu0 0.0
    %108 = vmatpush.msra.mxu0 0.0
    %109 = vmatpush.msra.mxu0 0.0
    %110 = vmatpush.msra.mxu0 0.0
    %111 = vmatpush.msra.mxu0 0.0
    %112 = vmatpush.msra.mxu0 0.0
    %113 = vmatpush.msra.mxu0 0.0
    %114 = vmatpush.msra.mxu0 0.0
    %115 = vmatpush.msra.mxu0 0.0
    %116 = vmatpush.msra.mxu0 %v72
    %117 = vmatpush.msra.mxu0 %v71
    %118 = vmatmul.f32.gmra.mxu0 %v79
    %v119 = vpop.f32.mrf.mxu0
    %v120 = vadd.f32 %v75, %v119
    %121 = vmatmul.f32.gmra.mxu0 %v82
    %v122 = vpop.f32.mrf.mxu0
    %v123 = vadd.f32 %v75, %v122
    %124 = vmatmul.f32.gmra.mxu0 %v85
    %v125 = vpop.f32.mrf.mxu0
    %v126 = vadd.f32 %v75, %v125
    %127 = vmatmul.f32.gmra.mxu0 %v88
    %v128 = vpop.f32.mrf.mxu0
    %v129 = vadd.f32 %v75, %v128
    %130 = vmatmul.f32.gmra.mxu0 %v91
    %v131 = vpop.f32.mrf.mxu0
    %v132 = vadd.f32 %v75, %v131
    %133 = vmatmul.f32.gmra.mxu0 %v94
    %v134 = vpop.f32.mrf.mxu0
    %v135 = vadd.f32 %v75, %v134
    %136 = vmatmul.f32.gmra.mxu0 %v97
    %v137 = vpop.f32.mrf.mxu0
    %v138 = vadd.f32 %v75, %v137
    %139 = vmatmul.f32.gmra.mxu0 %v100
    %v140 = vpop.f32.mrf.mxu0
    %v141 = vadd.f32 %v75, %v140
    %142 = vdwg.mxu0
    %vm143 = vcmask 261120
    %144 = vst.msk [vmem:[#allocation2] sm:$0xff] %vm143, %v120
    %145 = vst.msk [vmem:[#allocation2 + $0x8] sm:$0xff] %vm143, %v123
    %146 = vst.msk [vmem:[#allocation2 + $0x10] sm:$0xff] %vm143, %v126
    %147 = vst.msk [vmem:[#allocation2 + $0x18] sm:$0xff] %vm143, %v129
    %148 = vst.msk [vmem:[#allocation2 + $0x20] sm:$0xff] %vm143, %v132
    %149 = vst.msk [vmem:[#allocation2 + $0x28] sm:$0xff] %vm143, %v135
    %150 = vst.msk [vmem:[#allocation2 + $0x30] sm:$0xff] %vm143, %v138
    %151 = vst.msk [vmem:[#allocation2 + $0x38] sm:$0xff] %vm143, %v141
    %s152 = scalar_lea.vmem %s1, 16
    %v153 = vld [vmem:[%s152] sm:$0xff]
    %v154 = vld [vmem:[%s152 + $0x8] sm:$0xff]
    %s155 = scalar_lea.vmem %s3, 1
    %v156 = vld [vmem:[%s155] sm:$0x1]
    %v158 = vperm.slane %v156, 0
    %160 = vmatpush.msra.mxu0 0.0
    %161 = vmatpush.msra.mxu0 0.0
    %162 = vmatpush.msra.mxu0 0.0
    %163 = vmatpush.msra.mxu0 0.0
    %164 = vmatpush.msra.mxu0 0.0
    %165 = vmatpush.msra.mxu0 0.0
    %166 = vmatpush.msra.mxu0 0.0
    %167 = vmatpush.msra.mxu0 0.0
    %168 = vmatpush.msra.mxu0 0.0
    %169 = vmatpush.msra.mxu0 0.0
    %170 = vmatpush.msra.mxu0 0.0
    %171 = vmatpush.msra.mxu0 0.0
    %172 = vmatpush.msra.mxu0 0.0
    %173 = vmatpush.msra.mxu0 0.0
    %174 = vmatpush.msra.mxu0 %v154
    %175 = vmatpush.msra.mxu0 %v153
    %176 = vmatmul.f32.gmra.mxu0 %v79
    %v177 = vpop.f32.mrf.mxu0
    %v178 = vadd.f32 %v158, %v177
    %179 = vmatmul.f32.gmra.mxu0 %v82
    %v180 = vpop.f32.mrf.mxu0
    %v181 = vadd.f32 %v158, %v180
    %182 = vmatmul.f32.gmra.mxu0 %v85
    %v183 = vpop.f32.mrf.mxu0
    %v184 = vadd.f32 %v158, %v183
    %185 = vmatmul.f32.gmra.mxu0 %v88
    %v186 = vpop.f32.mrf.mxu0
    %v187 = vadd.f32 %v158, %v186
    %188 = vmatmul.f32.gmra.mxu0 %v91
    %v189 = vpop.f32.mrf.mxu0
    %v190 = vadd.f32 %v158, %v189
    %191 = vmatmul.f32.gmra.mxu0 %v94
    %v192 = vpop.f32.mrf.mxu0
    %v193 = vadd.f32 %v158, %v192
    %194 = vmatmul.f32.gmra.mxu0 %v97
    %v195 = vpop.f32.mrf.mxu0
    %v196 = vadd.f32 %v158, %v195
    %197 = vmatmul.f32.gmra.mxu0 %v100
    %v198 = vpop.f32.mrf.mxu0
    %v199 = vadd.f32 %v158, %v198
    %200 = vdwg.mxu0
    %201 = vst.msk [vmem:[#allocation3] sm:$0xff] %vm143, %v178
    %202 = vst.msk [vmem:[#allocation3 + $0x8] sm:$0xff] %vm143, %v181
    %203 = vst.msk [vmem:[#allocation3 + $0x10] sm:$0xff] %vm143, %v184
    %204 = vst.msk [vmem:[#allocation3 + $0x18] sm:$0xff] %vm143, %v187
    %205 = vst.msk [vmem:[#allocation3 + $0x20] sm:$0xff] %vm143, %v190
    %206 = vst.msk [vmem:[#allocation3 + $0x28] sm:$0xff] %vm143, %v193
    %207 = vst.msk [vmem:[#allocation3 + $0x30] sm:$0xff] %vm143, %v196
    %208 = vst.msk [vmem:[#allocation3 + $0x38] sm:$0xff] %vm143, %v199
    %s209 = scalar_lea.vmem %s1, 32
    %v210 = vld [vmem:[%s209] sm:$0xff]
    %v211 = vld [vmem:[%s209 + $0x8] sm:$0xff]
    %s212 = scalar_lea.vmem %s3, 2
    %v213 = vld [vmem:[%s212] sm:$0x1]
    %v215 = vperm.slane %v213, 0
    %217 = vmatpush.msra.mxu0 0.0
    %218 = vmatpush.msra.mxu0 0.0
    %219 = vmatpush.msra.mxu0 0.0
    %220 = vmatpush.msra.mxu0 0.0
    %221 = vmatpush.msra.mxu0 0.0
    %222 = vmatpush.msra.mxu0 0.0
    %223 = vmatpush.msra.mxu0 0.0
    %224 = vmatpush.msra.mxu0 0.0
    %225 = vmatpush.msra.mxu0 0.0
    %226 = vmatpush.msra.mxu0 0.0
    %227 = vmatpush.msra.mxu0 0.0
    %228 = vmatpush.msra.mxu0 0.0
    %229 = vmatpush.msra.mxu0 0.0
    %230 = vmatpush.msra.mxu0 0.0
    %231 = vmatpush.msra.mxu0 %v211
    %232 = vmatpush.msra.mxu0 %v210
    %233 = vmatmul.f32.gmra.mxu0 %v79
    %v234 = vpop.f32.mrf.mxu0
    %v235 = vadd.f32 %v215, %v234
    %236 = vmatmul.f32.gmra.mxu0 %v82
    %v237 = vpop.f32.mrf.mxu0
    %v238 = vadd.f32 %v215, %v237
    %239 = vmatmul.f32.gmra.mxu0 %v85
    %v240 = vpop.f32.mrf.mxu0
    %v241 = vadd.f32 %v215, %v240
    %242 = vmatmul.f32.gmra.mxu0 %v88
    %v243 = vpop.f32.mrf.mxu0
    %v244 = vadd.f32 %v215, %v243
    %245 = vmatmul.f32.gmra.mxu0 %v91
    %v246 = vpop.f32.mrf.mxu0
    %v247 = vadd.f32 %v215, %v246
    %248 = vmatmul.f32.gmra.mxu0 %v94
    %v249 = vpop.f32.mrf.mxu0
    %v250 = vadd.f32 %v215, %v249
    %251 = vmatmul.f32.gmra.mxu0 %v97
    %v252 = vpop.f32.mrf.mxu0
    %v253 = vadd.f32 %v215, %v252
    %254 = vmatmul.f32.gmra.mxu0 %v100
    %v255 = vpop.f32.mrf.mxu0
    %v256 = vadd.f32 %v215, %v255
    %257 = vdwg.mxu0
    %258 = vst.msk [vmem:[#allocation4] sm:$0xff] %vm143, %v235
    %259 = vst.msk [vmem:[#allocation4 + $0x8] sm:$0xff] %vm143, %v238
    %260 = vst.msk [vmem:[#allocation4 + $0x10] sm:$0xff] %vm143, %v241
    %261 = vst.msk [vmem:[#allocation4 + $0x18] sm:$0xff] %vm143, %v244
    %262 = vst.msk [vmem:[#allocation4 + $0x20] sm:$0xff] %vm143, %v247
    %263 = vst.msk [vmem:[#allocation4 + $0x28] sm:$0xff] %vm143, %v250
    %264 = vst.msk [vmem:[#allocation4 + $0x30] sm:$0xff] %vm143, %v253
    %265 = vst.msk [vmem:[#allocation4 + $0x38] sm:$0xff] %vm143, %v256
    %v266 = vld [vmem:[%s2] sm:$0xff]
    %v267 = vld [vmem:[%s2 + $0x8] sm:$0xff]
    %v268 = vld [vmem:[%s2 + $0x10] sm:$0xff]
    %v269 = vld [vmem:[%s2 + $0x18] sm:$0xff]
    %s270 = scalar_lea.vmem %s2, 32
    %v271 = vld [vmem:[%s270] sm:$0xff]
    %v272 = vld [vmem:[%s270 + $0x8] sm:$0xff]
    %v273 = vld [vmem:[%s270 + $0x10] sm:$0xff]
    %v274 = vld [vmem:[%s270 + $0x18] sm:$0xff]
    %s275 = scalar_lea.vmem %s2, 64
    %v276 = vld [vmem:[%s275] sm:$0xff]
    %v277 = vld [vmem:[%s275 + $0x8] sm:$0xff]
    %v278 = vld [vmem:[%s275 + $0x10] sm:$0xff]
    %v279 = vld [vmem:[%s275 + $0x18] sm:$0xff]
    %v280 = vld [vmem:[%s4] sm:$0x1]
    %v282 = vsel %vm143, 0.0, 0
    %284 = vmatpush.msra.mxu0 0.0
    %285 = vmatpush.msra.mxu0 0.0
    %286 = vmatpush.msra.mxu0 0.0
    %287 = vmatpush.msra.mxu0 0.0
    %288 = vmatpush.msra.mxu0 0.0
    %289 = vmatpush.msra.mxu0 0.0
    %290 = vmatpush.msra.mxu0 0.0
    %291 = vmatpush.msra.mxu0 0.0
    %292 = vmatpush.msra.mxu0 0.0
    %293 = vmatpush.msra.mxu0 0.0
    %294 = vmatpush.msra.mxu0 0.0
    %295 = vmatpush.msra.mxu0 0.0
    %296 = vmatpush.msra.mxu0 %v269
    %297 = vmatpush.msra.mxu0 %v268
    %298 = vmatpush.msra.mxu0 %v267
    %299 = vmatpush.msra.mxu0 %v266
    %300 = vmatmul.f32.gmra.mxu0 %v282
    %v301 = vpop.f32.mrf.mxu0
    %v302 = vadd.f32 0.0, %v301
    %303 = vdwg.mxu0
    %304 = vmatpush.msra.mxu0 0.0
    %305 = vmatpush.msra.mxu0 0.0
    %306 = vmatpush.msra.mxu0 0.0
    %307 = vmatpush.msra.mxu0 0.0
    %308 = vmatpush.msra.mxu0 0.0
    %309 = vmatpush.msra.mxu0 0.0
    %310 = vmatpush.msra.mxu0 0.0
    %311 = vmatpush.msra.mxu0 0.0
    %312 = vmatpush.msra.mxu0 0.0
    %313 = vmatpush.msra.mxu0 0.0
    %314 = vmatpush.msra.mxu0 0.0
    %315 = vmatpush.msra.mxu0 0.0
    %316 = vmatpush.msra.mxu0 %v274
    %317 = vmatpush.msra.mxu0 %v273
    %318 = vmatpush.msra.mxu0 %v272
    %319 = vmatpush.msra.mxu0 %v271
    %320 = vmatmul.f32.gmra.mxu0 %v282
    %v321 = vpop.f32.mrf.mxu0
    %v322 = vadd.f32 0.0, %v321
    %323 = vdwg.mxu0
    %v324 = vld [vmem:[#allocation2] sm:$0xff]
    %v325 = vadd.f32 %v324, %v302
    %v326 = vxor.u32 %v325, 2147483648
    %v327 = vmul.f32 %v326, 1.442695
    %v328 = vpow.pop %v327
    %v329 = vadd.f32 %v328, 1.0
    %v330 = vrcp.pop %v329
    %v331 = vmul.f32 %v329, %v330
    %v332 = vsub.f32 1.0, %v331
    %v333 = vmul.f32 %v330, %v332
    %v334 = vadd.f32 %v330, %v333
    %vm335 = vweird.f32 %v329
    %vm336 = vweird.f32 %v330
    %vm337 = vmor %vm335, %vm336
    %v338 = vsel %vm337, %v330, %v334
    %v339 = vand.u32 2147483647, %v329
    %vm340 = vcmp.eq.f32.partialorder %v339, 8.507059e+37
    %v341 = vand.u32 %v329, 2147483648
    %v342 = vor.u32 1.1754944e-38, %v341
    %v343 = vsel %vm340, %v342, %v338
    %v344 = vmul.f32 1.0, %v343
    %v345 = vld [vmem:[#allocation3] sm:$0xff]
    %v346 = vadd.f32 %v345, %v322
    %v347 = vxor.u32 %v346, 2147483648
    %v348 = vmul.f32 %v347, 1.442695
    %v349 = vpow.pop %v348
    %v350 = vadd.f32 %v349, 1.0
    %v351 = vrcp.pop %v350
    %v352 = vmul.f32 %v350, %v351
    %v353 = vsub.f32 1.0, %v352
    %v354 = vmul.f32 %v351, %v353
    %v355 = vadd.f32 %v351, %v354
    %vm356 = vweird.f32 %v350
    %vm357 = vweird.f32 %v351
    %vm358 = vmor %vm356, %vm357
    %v359 = vsel %vm358, %v351, %v355
    %v360 = vand.u32 2147483647, %v350
    %vm361 = vcmp.eq.f32.partialorder %v360, 8.507059e+37
    %v362 = vand.u32 %v350, 2147483648
    %v363 = vor.u32 1.1754944e-38, %v362
    %v364 = vsel %vm361, %v363, %v359
    %v365 = vmul.f32 1.0, %v364
    %v366 = vld [vmem:[#allocation4] sm:$0xff]
    %v368 = vperm.slane %v280, 0
    %370 = vmatpush.msra.mxu0 0.0
    %371 = vmatpush.msra.mxu0 0.0
    %372 = vmatpush.msra.mxu0 0.0
    %373 = vmatpush.msra.mxu0 0.0
    %374 = vmatpush.msra.mxu0 0.0
    %375 = vmatpush.msra.mxu0 0.0
    %376 = vmatpush.msra.mxu0 0.0
    %377 = vmatpush.msra.mxu0 0.0
    %378 = vmatpush.msra.mxu0 0.0
    %379 = vmatpush.msra.mxu0 0.0
    %380 = vmatpush.msra.mxu0 0.0
    %381 = vmatpush.msra.mxu0 0.0
    %382 = vmatpush.msra.mxu0 %v279
    %383 = vmatpush.msra.mxu0 %v278
    %384 = vmatpush.msra.mxu0 %v277
    %385 = vmatpush.msra.mxu0 %v276
    %386 = vmatmul.f32.gmra.mxu0 %v282
    %v387 = vpop.f32.mrf.mxu0
    %v388 = vadd.f32 %v368, %v387
    %389 = vdwg.mxu0
    %v390 = vmul.f32 %v344, %v388
    %v391 = vadd.f32 %v366, %v390
    %v392 = vtanh.pop %v391
    %v393 = vsub.f32 0.0, %v392
    %v394 = vmul.f32 %v365, %v393
    %v395 = vadd.f32 %v392, %v394
    %396 = vst.msk [vmem:[#allocation5] sm:$0xff] %vm143, %v395
    %v398 = vsel %vm143, %v395, 0
    %400 = vmatpush.msra.mxu0 0.0
    %401 = vmatpush.msra.mxu0 0.0
    %402 = vmatpush.msra.mxu0 0.0
    %403 = vmatpush.msra.mxu0 0.0
    %404 = vmatpush.msra.mxu0 0.0
    %405 = vmatpush.msra.mxu0 0.0
    %406 = vmatpush.msra.mxu0 0.0
    %407 = vmatpush.msra.mxu0 0.0
    %408 = vmatpush.msra.mxu0 0.0
    %409 = vmatpush.msra.mxu0 0.0
    %410 = vmatpush.msra.mxu0 0.0
    %411 = vmatpush.msra.mxu0 0.0
    %412 = vmatpush.msra.mxu0 %v269
    %413 = vmatpush.msra.mxu0 %v268
    %414 = vmatpush.msra.mxu0 %v267
    %415 = vmatpush.msra.mxu0 %v266
    %416 = vmatmul.f32.gmra.mxu0 %v398
    %v417 = vpop.f32.mrf.mxu0
    %v418 = vadd.f32 0.0, %v417
    %419 = vdwg.mxu0
    %420 = vmatpush.msra.mxu0 0.0
    %421 = vmatpush.msra.mxu0 0.0
    %422 = vmatpush.msra.mxu0 0.0
    %423 = vmatpush.msra.mxu0 0.0
    %424 = vmatpush.msra.mxu0 0.0
    %425 = vmatpush.msra.mxu0 0.0
    %426 = vmatpush.msra.mxu0 0.0
    %427 = vmatpush.msra.mxu0 0.0
    %428 = vmatpush.msra.mxu0 0.0
    %429 = vmatpush.msra.mxu0 0.0
    %430 = vmatpush.msra.mxu0 0.0
    %431 = vmatpush.msra.mxu0 0.0
    %432 = vmatpush.msra.mxu0 %v274
    %433 = vmatpush.msra.mxu0 %v273
    %434 = vmatpush.msra.mxu0 %v272
    %435 = vmatpush.msra.mxu0 %v271
    %436 = vmatmul.f32.gmra.mxu0 %v398
    %v437 = vpop.f32.mrf.mxu0
    %v438 = vadd.f32 0.0, %v437
    %439 = vdwg.mxu0
    %s440 = scalar_lea.vmem [#allocation2], 8
    %v441 = vld [vmem:[%s440] sm:$0xff]
    %v442 = vadd.f32 %v441, %v418
    %v443 = vxor.u32 %v442, 2147483648
    %v444 = vmul.f32 %v443, 1.442695
    %v445 = vpow.pop %v444
    %v446 = vadd.f32 %v445, 1.0
    %v447 = vrcp.pop %v446
    %v448 = vmul.f32 %v446, %v447
    %v449 = vsub.f32 1.0, %v448
    %v450 = vmul.f32 %v447, %v449
    %v451 = vadd.f32 %v447, %v450
    %vm452 = vweird.f32 %v446
    %vm453 = vweird.f32 %v447
    %vm454 = vmor %vm452, %vm453
    %v455 = vsel %vm454, %v447, %v451
    %v456 = vand.u32 2147483647, %v446
    %vm457 = vcmp.eq.f32.partialorder %v456, 8.507059e+37
    %v458 = vand.u32 %v446, 2147483648
    %v459 = vor.u32 1.1754944e-38, %v458
    %v460 = vsel %vm457, %v459, %v455
    %v461 = vmul.f32 1.0, %v460
    %s462 = scalar_lea.vmem [#allocation3], 8
    %v463 = vld [vmem:[%s462] sm:$0xff]
    %v464 = vadd.f32 %v463, %v438
    %v465 = vxor.u32 %v464, 2147483648
    %v466 = vmul.f32 %v465, 1.442695
    %v467 = vpow.pop %v466
    %v468 = vadd.f32 %v467, 1.0
    %v469 = vrcp.pop %v468
    %v470 = vmul.f32 %v468, %v469
    %v471 = vsub.f32 1.0, %v470
    %v472 = vmul.f32 %v469, %v471
    %v473 = vadd.f32 %v469, %v472
    %vm474 = vweird.f32 %v468
    %vm475 = vweird.f32 %v469
    %vm476 = vmor %vm474, %vm475
    %v477 = vsel %vm476, %v469, %v473
    %v478 = vand.u32 2147483647, %v468
    %vm479 = vcmp.eq.f32.partialorder %v478, 8.507059e+37
    %v480 = vand.u32 %v468, 2147483648
    %v481 = vor.u32 1.1754944e-38, %v480
    %v482 = vsel %vm479, %v481, %v477
    %v483 = vmul.f32 1.0, %v482
    %s484 = scalar_lea.vmem [#allocation4], 8
    %v485 = vld [vmem:[%s484] sm:$0xff]
    %486 = vmatpush.msra.mxu0 0.0
    %487 = vmatpush.msra.mxu0 0.0
    %488 = vmatpush.msra.mxu0 0.0
    %489 = vmatpush.msra.mxu0 0.0
    %490 = vmatpush.msra.mxu0 0.0
    %491 = vmatpush.msra.mxu0 0.0
    %492 = vmatpush.msra.mxu0 0.0
    %493 = vmatpush.msra.mxu0 0.0
    %494 = vmatpush.msra.mxu0 0.0
    %495 = vmatpush.msra.mxu0 0.0
    %496 = vmatpush.msra.mxu0 0.0
    %497 = vmatpush.msra.mxu0 0.0
    %498 = vmatpush.msra.mxu0 %v279
    %499 = vmatpush.msra.mxu0 %v278
    %500 = vmatpush.msra.mxu0 %v277
    %501 = vmatpush.msra.mxu0 %v276
    %502 = vmatmul.f32.gmra.mxu0 %v398
    %v503 = vpop.f32.mrf.mxu0
    %v504 = vadd.f32 %v368, %v503
    %505 = vdwg.mxu0
    %v506 = vmul.f32 %v461, %v504
    %v507 = vadd.f32 %v485, %v506
    %v508 = vtanh.pop %v507
    %v509 = vsub.f32 %v395, %v508
    %v510 = vmul.f32 %v483, %v509
    %v511 = vadd.f32 %v508, %v510
    %s512 = scalar_lea.vmem [#allocation5], 8
    %513 = vst.msk [vmem:[%s512] sm:$0xff] %vm143, %v511
    %v515 = vsel %vm143, %v511, 0
    %517 = vmatpush.msra.mxu0 0.0
    %518 = vmatpush.msra.mxu0 0.0
    %519 = vmatpush.msra.mxu0 0.0
    %520 = vmatpush.msra.mxu0 0.0
    %521 = vmatpush.msra.mxu0 0.0
    %522 = vmatpush.msra.mxu0 0.0
    %523 = vmatpush.msra.mxu0 0.0
    %524 = vmatpush.msra.mxu0 0.0
    %525 = vmatpush.msra.mxu0 0.0
    %526 = vmatpush.msra.mxu0 0.0
    %527 = vmatpush.msra.mxu0 0.0
    %528 = vmatpush.msra.mxu0 0.0
    %529 = vmatpush.msra.mxu0 %v269
    %530 = vmatpush.msra.mxu0 %v268
    %531 = vmatpush.msra.mxu0 %v267
    %532 = vmatpush.msra.mxu0 %v266
    %533 = vmatmul.f32.gmra.mxu0 %v515
    %v534 = vpop.f32.mrf.mxu0
    %v535 = vadd.f32 0.0, %v534
    %536 = vdwg.mxu0
    %537 = vmatpush.msra.mxu0 0.0
    %538 = vmatpush.msra.mxu0 0.0
    %539 = vmatpush.msra.mxu0 0.0
    %540 = vmatpush.msra.mxu0 0.0
    %541 = vmatpush.msra.mxu0 0.0
    %542 = vmatpush.msra.mxu0 0.0
    %543 = vmatpush.msra.mxu0 0.0
    %544 = vmatpush.msra.mxu0 0.0
    %545 = vmatpush.msra.mxu0 0.0
    %546 = vmatpush.msra.mxu0 0.0
    %547 = vmatpush.msra.mxu0 0.0
    %548 = vmatpush.msra.mxu0 0.0
    %549 = vmatpush.msra.mxu0 %v274
    %550 = vmatpush.msra.mxu0 %v273
    %551 = vmatpush.msra.mxu0 %v272
    %552 = vmatpush.msra.mxu0 %v271
    %553 = vmatmul.f32.gmra.mxu0 %v515
    %v554 = vpop.f32.mrf.mxu0
    %v555 = vadd.f32 0.0, %v554
    %556 = vdwg.mxu0
    %s557 = scalar_lea.vmem [#allocation2], 16
    %v558 = vld [vmem:[%s557] sm:$0xff]
    %v559 = vadd.f32 %v558, %v535
    %v560 = vxor.u32 %v559, 2147483648
    %v561 = vmul.f32 %v560, 1.442695
    %v562 = vpow.pop %v561
    %v563 = vadd.f32 %v562, 1.0
    %v564 = vrcp.pop %v563
    %v565 = vmul.f32 %v563, %v564
    %v566 = vsub.f32 1.0, %v565
    %v567 = vmul.f32 %v564, %v566
    %v568 = vadd.f32 %v564, %v567
    %vm569 = vweird.f32 %v563
    %vm570 = vweird.f32 %v564
    %vm571 = vmor %vm569, %vm570
    %v572 = vsel %vm571, %v564, %v568
    %v573 = vand.u32 2147483647, %v563
    %vm574 = vcmp.eq.f32.partialorder %v573, 8.507059e+37
    %v575 = vand.u32 %v563, 2147483648
    %v576 = vor.u32 1.1754944e-38, %v575
    %v577 = vsel %vm574, %v576, %v572
    %v578 = vmul.f32 1.0, %v577
    %s579 = scalar_lea.vmem [#allocation3], 16
    %v580 = vld [vmem:[%s579] sm:$0xff]
    %v581 = vadd.f32 %v580, %v555
    %v582 = vxor.u32 %v581, 2147483648
    %v583 = vmul.f32 %v582, 1.442695
    %v584 = vpow.pop %v583
    %v585 = vadd.f32 %v584, 1.0
    %v586 = vrcp.pop %v585
    %v587 = vmul.f32 %v585, %v586
    %v588 = vsub.f32 1.0, %v587
    %v589 = vmul.f32 %v586, %v588
    %v590 = vadd.f32 %v586, %v589
    %vm591 = vweird.f32 %v585
    %vm592 = vweird.f32 %v586
    %vm593 = vmor %vm591, %vm592
    %v594 = vsel %vm593, %v586, %v590
    %v595 = vand.u32 2147483647, %v585
    %vm596 = vcmp.eq.f32.partialorder %v595, 8.507059e+37
    %v597 = vand.u32 %v585, 2147483648
    %v598 = vor.u32 1.1754944e-38, %v597
    %v599 = vsel %vm596, %v598, %v594
    %v600 = vmul.f32 1.0, %v599
    %s601 = scalar_lea.vmem [#allocation4], 16
    %v602 = vld [vmem:[%s601] sm:$0xff]
    %603 = vmatpush.msra.mxu0 0.0
    %604 = vmatpush.msra.mxu0 0.0
    %605 = vmatpush.msra.mxu0 0.0
    %606 = vmatpush.msra.mxu0 0.0
    %607 = vmatpush.msra.mxu0 0.0
    %608 = vmatpush.msra.mxu0 0.0
    %609 = vmatpush.msra.mxu0 0.0
    %610 = vmatpush.msra.mxu0 0.0
    %611 = vmatpush.msra.mxu0 0.0
    %612 = vmatpush.msra.mxu0 0.0
    %613 = vmatpush.msra.mxu0 0.0
    %614 = vmatpush.msra.mxu0 0.0
    %615 = vmatpush.msra.mxu0 %v279
    %616 = vmatpush.msra.mxu0 %v278
    %617 = vmatpush.msra.mxu0 %v277
    %618 = vmatpush.msra.mxu0 %v276
    %619 = vmatmul.f32.gmra.mxu0 %v515
    %v620 = vpop.f32.mrf.mxu0
    %v621 = vadd.f32 %v368, %v620
    %622 = vdwg.mxu0
    %v623 = vmul.f32 %v578, %v621
    %v624 = vadd.f32 %v602, %v623
    %v625 = vtanh.pop %v624
    %v626 = vsub.f32 %v511, %v625
    %v627 = vmul.f32 %v600, %v626
    %v628 = vadd.f32 %v625, %v627
    %s629 = scalar_lea.vmem [#allocation5], 16
    %630 = vst.msk [vmem:[%s629] sm:$0xff] %vm143, %v628
    %v632 = vsel %vm143, %v628, 0
    %634 = vmatpush.msra.mxu0 0.0
    %635 = vmatpush.msra.mxu0 0.0
    %636 = vmatpush.msra.mxu0 0.0
    %637 = vmatpush.msra.mxu0 0.0
    %638 = vmatpush.msra.mxu0 0.0
    %639 = vmatpush.msra.mxu0 0.0
    %640 = vmatpush.msra.mxu0 0.0
    %641 = vmatpush.msra.mxu0 0.0
    %642 = vmatpush.msra.mxu0 0.0
    %643 = vmatpush.msra.mxu0 0.0
    %644 = vmatpush.msra.mxu0 0.0
    %645 = vmatpush.msra.mxu0 0.0
    %646 = vmatpush.msra.mxu0 %v269
    %647 = vmatpush.msra.mxu0 %v268
    %648 = vmatpush.msra.mxu0 %v267
    %649 = vmatpush.msra.mxu0 %v266
    %650 = vmatmul.f32.gmra.mxu0 %v632
    %v651 = vpop.f32.mrf.mxu0
    %v652 = vadd.f32 0.0, %v651
    %653 = vdwg.mxu0
    %654 = vmatpush.msra.mxu0 0.0
    %655 = vmatpush.msra.mxu0 0.0
    %656 = vmatpush.msra.mxu0 0.0
    %657 = vmatpush.msra.mxu0 0.0
    %658 = vmatpush.msra.mxu0 0.0
    %659 = vmatpush.msra.mxu0 0.0
    %660 = vmatpush.msra.mxu0 0.0
    %661 = vmatpush.msra.mxu0 0.0
    %662 = vmatpush.msra.mxu0 0.0
    %663 = vmatpush.msra.mxu0 0.0
    %664 = vmatpush.msra.mxu0 0.0
    %665 = vmatpush.msra.mxu0 0.0
    %666 = vmatpush.msra.mxu0 %v274
    %667 = vmatpush.msra.mxu0 %v273
    %668 = vmatpush.msra.mxu0 %v272
    %669 = vmatpush.msra.mxu0 %v271
    %670 = vmatmul.f32.gmra.mxu0 %v632
    %v671 = vpop.f32.mrf.mxu0
    %v672 = vadd.f32 0.0, %v671
    %673 = vdwg.mxu0
    %s674 = scalar_lea.vmem [#allocation2], 24
    %v675 = vld [vmem:[%s674] sm:$0xff]
    %v676 = vadd.f32 %v675, %v652
    %v677 = vxor.u32 %v676, 2147483648
    %v678 = vmul.f32 %v677, 1.442695
    %v679 = vpow.pop %v678
    %v680 = vadd.f32 %v679, 1.0
    %v681 = vrcp.pop %v680
    %v682 = vmul.f32 %v680, %v681
    %v683 = vsub.f32 1.0, %v682
    %v684 = vmul.f32 %v681, %v683
    %v685 = vadd.f32 %v681, %v684
    %vm686 = vweird.f32 %v680
    %vm687 = vweird.f32 %v681
    %vm688 = vmor %vm686, %vm687
    %v689 = vsel %vm688, %v681, %v685
    %v690 = vand.u32 2147483647, %v680
    %vm691 = vcmp.eq.f32.partialorder %v690, 8.507059e+37
    %v692 = vand.u32 %v680, 2147483648
    %v693 = vor.u32 1.1754944e-38, %v692
    %v694 = vsel %vm691, %v693, %v689
    %v695 = vmul.f32 1.0, %v694
    %s696 = scalar_lea.vmem [#allocation3], 24
    %v697 = vld [vmem:[%s696] sm:$0xff]
    %v698 = vadd.f32 %v697, %v672
    %v699 = vxor.u32 %v698, 2147483648
    %v700 = vmul.f32 %v699, 1.442695
    %v701 = vpow.pop %v700
    %v702 = vadd.f32 %v701, 1.0
    %v703 = vrcp.pop %v702
    %v704 = vmul.f32 %v702, %v703
    %v705 = vsub.f32 1.0, %v704
    %v706 = vmul.f32 %v703, %v705
    %v707 = vadd.f32 %v703, %v706
    %vm708 = vweird.f32 %v702
    %vm709 = vweird.f32 %v703
    %vm710 = vmor %vm708, %vm709
    %v711 = vsel %vm710, %v703, %v707
    %v712 = vand.u32 2147483647, %v702
    %vm713 = vcmp.eq.f32.partialorder %v712, 8.507059e+37
    %v714 = vand.u32 %v702, 2147483648
    %v715 = vor.u32 1.1754944e-38, %v714
    %v716 = vsel %vm713, %v715, %v711
    %v717 = vmul.f32 1.0, %v716
    %s718 = scalar_lea.vmem [#allocation4], 24
    %v719 = vld [vmem:[%s718] sm:$0xff]
    %720 = vmatpush.msra.mxu0 0.0
    %721 = vmatpush.msra.mxu0 0.0
    %722 = vmatpush.msra.mxu0 0.0
    %723 = vmatpush.msra.mxu0 0.0
    %724 = vmatpush.msra.mxu0 0.0
    %725 = vmatpush.msra.mxu0 0.0
    %726 = vmatpush.msra.mxu0 0.0
    %727 = vmatpush.msra.mxu0 0.0
    %728 = vmatpush.msra.mxu0 0.0
    %729 = vmatpush.msra.mxu0 0.0
    %730 = vmatpush.msra.mxu0 0.0
    %731 = vmatpush.msra.mxu0 0.0
    %732 = vmatpush.msra.mxu0 %v279
    %733 = vmatpush.msra.mxu0 %v278
    %734 = vmatpush.msra.mxu0 %v277
    %735 = vmatpush.msra.mxu0 %v276
    %736 = vmatmul.f32.gmra.mxu0 %v632
    %v737 = vpop.f32.mrf.mxu0
    %v738 = vadd.f32 %v368, %v737
    %739 = vdwg.mxu0
    %v740 = vmul.f32 %v695, %v738
    %v741 = vadd.f32 %v719, %v740
    %v742 = vtanh.pop %v741
    %v743 = vsub.f32 %v628, %v742
    %v744 = vmul.f32 %v717, %v743
    %v745 = vadd.f32 %v742, %v744
    %s746 = scalar_lea.vmem [#allocation5], 24
    %747 = vst.msk [vmem:[%s746] sm:$0xff] %vm143, %v745
    %v749 = vsel %vm143, %v745, 0
    %751 = vmatpush.msra.mxu0 0.0
    %752 = vmatpush.msra.mxu0 0.0
    %753 = vmatpush.msra.mxu0 0.0
    %754 = vmatpush.msra.mxu0 0.0
    %755 = vmatpush.msra.mxu0 0.0
    %756 = vmatpush.msra.mxu0 0.0
    %757 = vmatpush.msra.mxu0 0.0
    %758 = vmatpush.msra.mxu0 0.0
    %759 = vmatpush.msra.mxu0 0.0
    %760 = vmatpush.msra.mxu0 0.0
    %761 = vmatpush.msra.mxu0 0.0
    %762 = vmatpush.msra.mxu0 0.0
    %763 = vmatpush.msra.mxu0 %v269
    %764 = vmatpush.msra.mxu0 %v268
    %765 = vmatpush.msra.mxu0 %v267
    %766 = vmatpush.msra.mxu0 %v266
    %767 = vmatmul.f32.gmra.mxu0 %v749
    %v768 = vpop.f32.mrf.mxu0
    %v769 = vadd.f32 0.0, %v768
    %770 = vdwg.mxu0
    %771 = vmatpush.msra.mxu0 0.0
    %772 = vmatpush.msra.mxu0 0.0
    %773 = vmatpush.msra.mxu0 0.0
    %774 = vmatpush.msra.mxu0 0.0
    %775 = vmatpush.msra.mxu0 0.0
    %776 = vmatpush.msra.mxu0 0.0
    %777 = vmatpush.msra.mxu0 0.0
    %778 = vmatpush.msra.mxu0 0.0
    %779 = vmatpush.msra.mxu0 0.0
    %780 = vmatpush.msra.mxu0 0.0
    %781 = vmatpush.msra.mxu0 0.0
    %782 = vmatpush.msra.mxu0 0.0
    %783 = vmatpush.msra.mxu0 %v274
    %784 = vmatpush.msra.mxu0 %v273
    %785 = vmatpush.msra.mxu0 %v272
    %786 = vmatpush.msra.mxu0 %v271
    %787 = vmatmul.f32.gmra.mxu0 %v749
    %v788 = vpop.f32.mrf.mxu0
    %v789 = vadd.f32 0.0, %v788
    %790 = vdwg.mxu0
    %s791 = scalar_lea.vmem [#allocation2], 32
    %v792 = vld [vmem:[%s791] sm:$0xff]
    %v793 = vadd.f32 %v792, %v769
    %v794 = vxor.u32 %v793, 2147483648
    %v795 = vmul.f32 %v794, 1.442695
    %v796 = vpow.pop %v795
    %v797 = vadd.f32 %v796, 1.0
    %v798 = vrcp.pop %v797
    %v799 = vmul.f32 %v797, %v798
    %v800 = vsub.f32 1.0, %v799
    %v801 = vmul.f32 %v798, %v800
    %v802 = vadd.f32 %v798, %v801
    %vm803 = vweird.f32 %v797
    %vm804 = vweird.f32 %v798
    %vm805 = vmor %vm803, %vm804
    %v806 = vsel %vm805, %v798, %v802
    %v807 = vand.u32 2147483647, %v797
    %vm808 = vcmp.eq.f32.partialorder %v807, 8.507059e+37
    %v809 = vand.u32 %v797, 2147483648
    %v810 = vor.u32 1.1754944e-38, %v809
    %v811 = vsel %vm808, %v810, %v806
    %v812 = vmul.f32 1.0, %v811
    %s813 = scalar_lea.vmem [#allocation3], 32
    %v814 = vld [vmem:[%s813] sm:$0xff]
    %v815 = vadd.f32 %v814, %v789
    %v816 = vxor.u32 %v815, 2147483648
    %v817 = vmul.f32 %v816, 1.442695
    %v818 = vpow.pop %v817
    %v819 = vadd.f32 %v818, 1.0
    %v820 = vrcp.pop %v819
    %v821 = vmul.f32 %v819, %v820
    %v822 = vsub.f32 1.0, %v821
    %v823 = vmul.f32 %v820, %v822
    %v824 = vadd.f32 %v820, %v823
    %vm825 = vweird.f32 %v819
    %vm826 = vweird.f32 %v820
    %vm827 = vmor %vm825, %vm826
    %v828 = vsel %vm827, %v820, %v824
    %v829 = vand.u32 2147483647, %v819
    %vm830 = vcmp.eq.f32.partialorder %v829, 8.507059e+37
    %v831 = vand.u32 %v819, 2147483648
    %v832 = vor.u32 1.1754944e-38, %v831
    %v833 = vsel %vm830, %v832, %v828
    %v834 = vmul.f32 1.0, %v833
    %s835 = scalar_lea.vmem [#allocation4], 32
    %v836 = vld [vmem:[%s835] sm:$0xff]
    %837 = vmatpush.msra.mxu0 0.0
    %838 = vmatpush.msra.mxu0 0.0
    %839 = vmatpush.msra.mxu0 0.0
    %840 = vmatpush.msra.mxu0 0.0
    %841 = vmatpush.msra.mxu0 0.0
    %842 = vmatpush.msra.mxu0 0.0
    %843 = vmatpush.msra.mxu0 0.0
    %844 = vmatpush.msra.mxu0 0.0
    %845 = vmatpush.msra.mxu0 0.0
    %846 = vmatpush.msra.mxu0 0.0
    %847 = vmatpush.msra.mxu0 0.0
    %848 = vmatpush.msra.mxu0 0.0
    %849 = vmatpush.msra.mxu0 %v279
    %850 = vmatpush.msra.mxu0 %v278
    %851 = vmatpush.msra.mxu0 %v277
    %852 = vmatpush.msra.mxu0 %v276
    %853 = vmatmul.f32.gmra.mxu0 %v749
    %v854 = vpop.f32.mrf.mxu0
    %v855 = vadd.f32 %v368, %v854
    %856 = vdwg.mxu0
    %v857 = vmul.f32 %v812, %v855
    %v858 = vadd.f32 %v836, %v857
    %v859 = vtanh.pop %v858
    %v860 = vsub.f32 %v745, %v859
    %v861 = vmul.f32 %v834, %v860
    %v862 = vadd.f32 %v859, %v861
    %s863 = scalar_lea.vmem [#allocation5], 32
    %864 = vst.msk [vmem:[%s863] sm:$0xff] %vm143, %v862
    %v866 = vsel %vm143, %v862, 0
    %868 = vmatpush.msra.mxu0 0.0
    %869 = vmatpush.msra.mxu0 0.0
    %870 = vmatpush.msra.mxu0 0.0
    %871 = vmatpush.msra.mxu0 0.0
    %872 = vmatpush.msra.mxu0 0.0
    %873 = vmatpush.msra.mxu0 0.0
    %874 = vmatpush.msra.mxu0 0.0
    %875 = vmatpush.msra.mxu0 0.0
    %876 = vmatpush.msra.mxu0 0.0
    %877 = vmatpush.msra.mxu0 0.0
    %878 = vmatpush.msra.mxu0 0.0
    %879 = vmatpush.msra.mxu0 0.0
    %880 = vmatpush.msra.mxu0 %v269
    %881 = vmatpush.msra.mxu0 %v268
    %882 = vmatpush.msra.mxu0 %v267
    %883 = vmatpush.msra.mxu0 %v266
    %884 = vmatmul.f32.gmra.mxu0 %v866
    %v885 = vpop.f32.mrf.mxu0
    %v886 = vadd.f32 0.0, %v885
    %887 = vdwg.mxu0
    %888 = vmatpush.msra.mxu0 0.0
    %889 = vmatpush.msra.mxu0 0.0
    %890 = vmatpush.msra.mxu0 0.0
    %891 = vmatpush.msra.mxu0 0.0
    %892 = vmatpush.msra.mxu0 0.0
    %893 = vmatpush.msra.mxu0 0.0
    %894 = vmatpush.msra.mxu0 0.0
    %895 = vmatpush.msra.mxu0 0.0
    %896 = vmatpush.msra.mxu0 0.0
    %897 = vmatpush.msra.mxu0 0.0
    %898 = vmatpush.msra.mxu0 0.0
    %899 = vmatpush.msra.mxu0 0.0
    %900 = vmatpush.msra.mxu0 %v274
    %901 = vmatpush.msra.mxu0 %v273
    %902 = vmatpush.msra.mxu0 %v272
    %903 = vmatpush.msra.mxu0 %v271
    %904 = vmatmul.f32.gmra.mxu0 %v866
    %v905 = vpop.f32.mrf.mxu0
    %v906 = vadd.f32 0.0, %v905
    %907 = vdwg.mxu0
    %s908 = scalar_lea.vmem [#allocation2], 40
    %v909 = vld [vmem:[%s908] sm:$0xff]
    %v910 = vadd.f32 %v909, %v886
    %v911 = vxor.u32 %v910, 2147483648
    %v912 = vmul.f32 %v911, 1.442695
    %v913 = vpow.pop %v912
    %v914 = vadd.f32 %v913, 1.0
    %v915 = vrcp.pop %v914
    %v916 = vmul.f32 %v914, %v915
    %v917 = vsub.f32 1.0, %v916
    %v918 = vmul.f32 %v915, %v917
    %v919 = vadd.f32 %v915, %v918
    %vm920 = vweird.f32 %v914
    %vm921 = vweird.f32 %v915
    %vm922 = vmor %vm920, %vm921
    %v923 = vsel %vm922, %v915, %v919
    %v924 = vand.u32 2147483647, %v914
    %vm925 = vcmp.eq.f32.partialorder %v924, 8.507059e+37
    %v926 = vand.u32 %v914, 2147483648
    %v927 = vor.u32 1.1754944e-38, %v926
    %v928 = vsel %vm925, %v927, %v923
    %v929 = vmul.f32 1.0, %v928
    %s930 = scalar_lea.vmem [#allocation3], 40
    %v931 = vld [vmem:[%s930] sm:$0xff]
    %v932 = vadd.f32 %v931, %v906
    %v933 = vxor.u32 %v932, 2147483648
    %v934 = vmul.f32 %v933, 1.442695
    %v935 = vpow.pop %v934
    %v936 = vadd.f32 %v935, 1.0
    %v937 = vrcp.pop %v936
    %v938 = vmul.f32 %v936, %v937
    %v939 = vsub.f32 1.0, %v938
    %v940 = vmul.f32 %v937, %v939
    %v941 = vadd.f32 %v937, %v940
    %vm942 = vweird.f32 %v936
    %vm943 = vweird.f32 %v937
    %vm944 = vmor %vm942, %vm943
    %v945 = vsel %vm944, %v937, %v941
    %v946 = vand.u32 2147483647, %v936
    %vm947 = vcmp.eq.f32.partialorder %v946, 8.507059e+37
    %v948 = vand.u32 %v936, 2147483648
    %v949 = vor.u32 1.1754944e-38, %v948
    %v950 = vsel %vm947, %v949, %v945
    %v951 = vmul.f32 1.0, %v950
    %s952 = scalar_lea.vmem [#allocation4], 40
    %v953 = vld [vmem:[%s952] sm:$0xff]
    %954 = vmatpush.msra.mxu0 0.0
    %955 = vmatpush.msra.mxu0 0.0
    %956 = vmatpush.msra.mxu0 0.0
    %957 = vmatpush.msra.mxu0 0.0
    %958 = vmatpush.msra.mxu0 0.0
    %959 = vmatpush.msra.mxu0 0.0
    %960 = vmatpush.msra.mxu0 0.0
    %961 = vmatpush.msra.mxu0 0.0
    %962 = vmatpush.msra.mxu0 0.0
    %963 = vmatpush.msra.mxu0 0.0
    %964 = vmatpush.msra.mxu0 0.0
    %965 = vmatpush.msra.mxu0 0.0
    %966 = vmatpush.msra.mxu0 %v279
    %967 = vmatpush.msra.mxu0 %v278
    %968 = vmatpush.msra.mxu0 %v277
    %969 = vmatpush.msra.mxu0 %v276
    %970 = vmatmul.f32.gmra.mxu0 %v866
    %v971 = vpop.f32.mrf.mxu0
    %v972 = vadd.f32 %v368, %v971
    %973 = vdwg.mxu0
    %v974 = vmul.f32 %v929, %v972
    %v975 = vadd.f32 %v953, %v974
    %v976 = vtanh.pop %v975
    %v977 = vsub.f32 %v862, %v976
    %v978 = vmul.f32 %v951, %v977
    %v979 = vadd.f32 %v976, %v978
    %s980 = scalar_lea.vmem [#allocation5], 40
    %981 = vst.msk [vmem:[%s980] sm:$0xff] %vm143, %v979
    %v983 = vsel %vm143, %v979, 0
    %985 = vmatpush.msra.mxu0 0.0
    %986 = vmatpush.msra.mxu0 0.0
    %987 = vmatpush.msra.mxu0 0.0
    %988 = vmatpush.msra.mxu0 0.0
    %989 = vmatpush.msra.mxu0 0.0
    %990 = vmatpush.msra.mxu0 0.0
    %991 = vmatpush.msra.mxu0 0.0
    %992 = vmatpush.msra.mxu0 0.0
    %993 = vmatpush.msra.mxu0 0.0
    %994 = vmatpush.msra.mxu0 0.0
    %995 = vmatpush.msra.mxu0 0.0
    %996 = vmatpush.msra.mxu0 0.0
    %997 = vmatpush.msra.mxu0 %v269
    %998 = vmatpush.msra.mxu0 %v268
    %999 = vmatpush.msra.mxu0 %v267
    %1000 = vmatpush.msra.mxu0 %v266
    %1001 = vmatmul.f32.gmra.mxu0 %v983
    %v1002 = vpop.f32.mrf.mxu0
    %v1003 = vadd.f32 0.0, %v1002
    %1004 = vdwg.mxu0
    %1005 = vmatpush.msra.mxu0 0.0
    %1006 = vmatpush.msra.mxu0 0.0
    %1007 = vmatpush.msra.mxu0 0.0
    %1008 = vmatpush.msra.mxu0 0.0
    %1009 = vmatpush.msra.mxu0 0.0
    %1010 = vmatpush.msra.mxu0 0.0
    %1011 = vmatpush.msra.mxu0 0.0
    %1012 = vmatpush.msra.mxu0 0.0
    %1013 = vmatpush.msra.mxu0 0.0
    %1014 = vmatpush.msra.mxu0 0.0
    %1015 = vmatpush.msra.mxu0 0.0
    %1016 = vmatpush.msra.mxu0 0.0
    %1017 = vmatpush.msra.mxu0 %v274
    %1018 = vmatpush.msra.mxu0 %v273
    %1019 = vmatpush.msra.mxu0 %v272
    %1020 = vmatpush.msra.mxu0 %v271
    %1021 = vmatmul.f32.gmra.mxu0 %v983
    %v1022 = vpop.f32.mrf.mxu0
    %v1023 = vadd.f32 0.0, %v1022
    %1024 = vdwg.mxu0
    %s1025 = scalar_lea.vmem [#allocation2], 48
    %v1026 = vld [vmem:[%s1025] sm:$0xff]
    %v1027 = vadd.f32 %v1026, %v1003
    %v1028 = vxor.u32 %v1027, 2147483648
    %v1029 = vmul.f32 %v1028, 1.442695
    %v1030 = vpow.pop %v1029
    %v1031 = vadd.f32 %v1030, 1.0
    %v1032 = vrcp.pop %v1031
    %v1033 = vmul.f32 %v1031, %v1032
    %v1034 = vsub.f32 1.0, %v1033
    %v1035 = vmul.f32 %v1032, %v1034
    %v1036 = vadd.f32 %v1032, %v1035
    %vm1037 = vweird.f32 %v1031
    %vm1038 = vweird.f32 %v1032
    %vm1039 = vmor %vm1037, %vm1038
    %v1040 = vsel %vm1039, %v1032, %v1036
    %v1041 = vand.u32 2147483647, %v1031
    %vm1042 = vcmp.eq.f32.partialorder %v1041, 8.507059e+37
    %v1043 = vand.u32 %v1031, 2147483648
    %v1044 = vor.u32 1.1754944e-38, %v1043
    %v1045 = vsel %vm1042, %v1044, %v1040
    %v1046 = vmul.f32 1.0, %v1045
    %s1047 = scalar_lea.vmem [#allocation3], 48
    %v1048 = vld [vmem:[%s1047] sm:$0xff]
    %v1049 = vadd.f32 %v1048, %v1023
    %v1050 = vxor.u32 %v1049, 2147483648
    %v1051 = vmul.f32 %v1050, 1.442695
    %v1052 = vpow.pop %v1051
    %v1053 = vadd.f32 %v1052, 1.0
    %v1054 = vrcp.pop %v1053
    %v1055 = vmul.f32 %v1053, %v1054
    %v1056 = vsub.f32 1.0, %v1055
    %v1057 = vmul.f32 %v1054, %v1056
    %v1058 = vadd.f32 %v1054, %v1057
    %vm1059 = vweird.f32 %v1053
    %vm1060 = vweird.f32 %v1054
    %vm1061 = vmor %vm1059, %vm1060
    %v1062 = vsel %vm1061, %v1054, %v1058
    %v1063 = vand.u32 2147483647, %v1053
    %vm1064 = vcmp.eq.f32.partialorder %v1063, 8.507059e+37
    %v1065 = vand.u32 %v1053, 2147483648
    %v1066 = vor.u32 1.1754944e-38, %v1065
    %v1067 = vsel %vm1064, %v1066, %v1062
    %v1068 = vmul.f32 1.0, %v1067
    %s1069 = scalar_lea.vmem [#allocation4], 48
    %v1070 = vld [vmem:[%s1069] sm:$0xff]
    %1071 = vmatpush.msra.mxu0 0.0
    %1072 = vmatpush.msra.mxu0 0.0
    %1073 = vmatpush.msra.mxu0 0.0
    %1074 = vmatpush.msra.mxu0 0.0
    %1075 = vmatpush.msra.mxu0 0.0
    %1076 = vmatpush.msra.mxu0 0.0
    %1077 = vmatpush.msra.mxu0 0.0
    %1078 = vmatpush.msra.mxu0 0.0
    %1079 = vmatpush.msra.mxu0 0.0
    %1080 = vmatpush.msra.mxu0 0.0
    %1081 = vmatpush.msra.mxu0 0.0
    %1082 = vmatpush.msra.mxu0 0.0
    %1083 = vmatpush.msra.mxu0 %v279
    %1084 = vmatpush.msra.mxu0 %v278
    %1085 = vmatpush.msra.mxu0 %v277
    %1086 = vmatpush.msra.mxu0 %v276
    %1087 = vmatmul.f32.gmra.mxu0 %v983
    %v1088 = vpop.f32.mrf.mxu0
    %v1089 = vadd.f32 %v368, %v1088
    %1090 = vdwg.mxu0
    %v1091 = vmul.f32 %v1046, %v1089
    %v1092 = vadd.f32 %v1070, %v1091
    %v1093 = vtanh.pop %v1092
    %v1094 = vsub.f32 %v979, %v1093
    %v1095 = vmul.f32 %v1068, %v1094
    %v1096 = vadd.f32 %v1093, %v1095
    %s1097 = scalar_lea.vmem [#allocation5], 48
    %1098 = vst.msk [vmem:[%s1097] sm:$0xff] %vm143, %v1096
    %v1100 = vsel %vm143, %v1096, 0
    %1102 = vmatpush.msra.mxu0 0.0
    %1103 = vmatpush.msra.mxu0 0.0
    %1104 = vmatpush.msra.mxu0 0.0
    %1105 = vmatpush.msra.mxu0 0.0
    %1106 = vmatpush.msra.mxu0 0.0
    %1107 = vmatpush.msra.mxu0 0.0
    %1108 = vmatpush.msra.mxu0 0.0
    %1109 = vmatpush.msra.mxu0 0.0
    %1110 = vmatpush.msra.mxu0 0.0
    %1111 = vmatpush.msra.mxu0 0.0
    %1112 = vmatpush.msra.mxu0 0.0
    %1113 = vmatpush.msra.mxu0 0.0
    %1114 = vmatpush.msra.mxu0 %v269
    %1115 = vmatpush.msra.mxu0 %v268
    %1116 = vmatpush.msra.mxu0 %v267
    %1117 = vmatpush.msra.mxu0 %v266
    %1118 = vmatmul.f32.gmra.mxu0 %v1100
    %v1119 = vpop.f32.mrf.mxu0
    %v1120 = vadd.f32 0.0, %v1119
    %1121 = vdwg.mxu0
    %1122 = vmatpush.msra.mxu0 0.0
    %1123 = vmatpush.msra.mxu0 0.0
    %1124 = vmatpush.msra.mxu0 0.0
    %1125 = vmatpush.msra.mxu0 0.0
    %1126 = vmatpush.msra.mxu0 0.0
    %1127 = vmatpush.msra.mxu0 0.0
    %1128 = vmatpush.msra.mxu0 0.0
    %1129 = vmatpush.msra.mxu0 0.0
    %1130 = vmatpush.msra.mxu0 0.0
    %1131 = vmatpush.msra.mxu0 0.0
    %1132 = vmatpush.msra.mxu0 0.0
    %1133 = vmatpush.msra.mxu0 0.0
    %1134 = vmatpush.msra.mxu0 %v274
    %1135 = vmatpush.msra.mxu0 %v273
    %1136 = vmatpush.msra.mxu0 %v272
    %1137 = vmatpush.msra.mxu0 %v271
    %1138 = vmatmul.f32.gmra.mxu0 %v1100
    %v1139 = vpop.f32.mrf.mxu0
    %v1140 = vadd.f32 0.0, %v1139
    %1141 = vdwg.mxu0
    %s1142 = scalar_lea.vmem [#allocation2], 56
    %v1143 = vld [vmem:[%s1142] sm:$0xff]
    %v1144 = vadd.f32 %v1143, %v1120
    %v1145 = vxor.u32 %v1144, 2147483648
    %v1146 = vmul.f32 %v1145, 1.442695
    %v1147 = vpow.pop %v1146
    %v1148 = vadd.f32 %v1147, 1.0
    %v1149 = vrcp.pop %v1148
    %v1150 = vmul.f32 %v1148, %v1149
    %v1151 = vsub.f32 1.0, %v1150
    %v1152 = vmul.f32 %v1149, %v1151
    %v1153 = vadd.f32 %v1149, %v1152
    %vm1154 = vweird.f32 %v1148
    %vm1155 = vweird.f32 %v1149
    %vm1156 = vmor %vm1154, %vm1155
    %v1157 = vsel %vm1156, %v1149, %v1153
    %v1158 = vand.u32 2147483647, %v1148
    %vm1159 = vcmp.eq.f32.partialorder %v1158, 8.507059e+37
    %v1160 = vand.u32 %v1148, 2147483648
    %v1161 = vor.u32 1.1754944e-38, %v1160
    %v1162 = vsel %vm1159, %v1161, %v1157
    %v1163 = vmul.f32 1.0, %v1162
    %s1164 = scalar_lea.vmem [#allocation3], 56
    %v1165 = vld [vmem:[%s1164] sm:$0xff]
    %v1166 = vadd.f32 %v1165, %v1140
    %v1167 = vxor.u32 %v1166, 2147483648
    %v1168 = vmul.f32 %v1167, 1.442695
    %v1169 = vpow.pop %v1168
    %v1170 = vadd.f32 %v1169, 1.0
    %v1171 = vrcp.pop %v1170
    %v1172 = vmul.f32 %v1170, %v1171
    %v1173 = vsub.f32 1.0, %v1172
    %v1174 = vmul.f32 %v1171, %v1173
    %v1175 = vadd.f32 %v1171, %v1174
    %vm1176 = vweird.f32 %v1170
    %vm1177 = vweird.f32 %v1171
    %vm1178 = vmor %vm1176, %vm1177
    %v1179 = vsel %vm1178, %v1171, %v1175
    %v1180 = vand.u32 2147483647, %v1170
    %vm1181 = vcmp.eq.f32.partialorder %v1180, 8.507059e+37
    %v1182 = vand.u32 %v1170, 2147483648
    %v1183 = vor.u32 1.1754944e-38, %v1182
    %v1184 = vsel %vm1181, %v1183, %v1179
    %v1185 = vmul.f32 1.0, %v1184
    %s1186 = scalar_lea.vmem [#allocation4], 56
    %v1187 = vld [vmem:[%s1186] sm:$0xff]
    %1188 = vmatpush.msra.mxu0 0.0
    %1189 = vmatpush.msra.mxu0 0.0
    %1190 = vmatpush.msra.mxu0 0.0
    %1191 = vmatpush.msra.mxu0 0.0
    %1192 = vmatpush.msra.mxu0 0.0
    %1193 = vmatpush.msra.mxu0 0.0
    %1194 = vmatpush.msra.mxu0 0.0
    %1195 = vmatpush.msra.mxu0 0.0
    %1196 = vmatpush.msra.mxu0 0.0
    %1197 = vmatpush.msra.mxu0 0.0
    %1198 = vmatpush.msra.mxu0 0.0
    %1199 = vmatpush.msra.mxu0 0.0
    %1200 = vmatpush.msra.mxu0 %v279
    %1201 = vmatpush.msra.mxu0 %v278
    %1202 = vmatpush.msra.mxu0 %v277
    %1203 = vmatpush.msra.mxu0 %v276
    %1204 = vmatmul.f32.gmra.mxu0 %v1100
    %v1205 = vpop.f32.mrf.mxu0
    %v1206 = vadd.f32 %v368, %v1205
    %1207 = vdwg.mxu0
    %v1208 = vmul.f32 %v1163, %v1206
    %v1209 = vadd.f32 %v1187, %v1208
    %v1210 = vtanh.pop %v1209
    %v1211 = vsub.f32 %v1096, %v1210
    %v1212 = vmul.f32 %v1185, %v1211
    %v1213 = vadd.f32 %v1210, %v1212
    %s1214 = scalar_lea.vmem [#allocation5], 56
    %1215 = vst.msk [vmem:[%s1214] sm:$0xff] %vm143, %v1213
    %v1216 = vld [vmem:[#allocation5] sm:$0xff]
    %v1217 = vld [vmem:[#allocation5 + $0x8] sm:$0xff]
    %v1218 = vld [vmem:[#allocation5 + $0x10] sm:$0xff]
    %v1219 = vld [vmem:[#allocation5 + $0x18] sm:$0xff]
    %v1220 = vld [vmem:[#allocation5 + $0x20] sm:$0xff]
    %v1221 = vld [vmem:[#allocation5 + $0x28] sm:$0xff]
    %v1222 = vld [vmem:[#allocation5 + $0x30] sm:$0xff]
    %v1223 = vld [vmem:[#allocation5 + $0x38] sm:$0xff]
    %v1224 = vld [vmem:[%s5] sm:$0xff]
    %v1225 = vld [vmem:[%s5 + $0x8] sm:$0xff]
    %v1226 = vld [vmem:[%s5 + $0x10] sm:$0xff]
    %v1227 = vld [vmem:[%s5 + $0x18] sm:$0xff]
    %v1228 = vld [vmem:[%s7] sm:$0x1]
    %v1230 = vperm.slane %v1228, 0
    %v1233 = vsel %vm143, %v1216, 0
    %v1236 = vsel %vm143, %v1217, 0
    %v1239 = vsel %vm143, %v1218, 0
    %v1242 = vsel %vm143, %v1219, 0
    %v1245 = vsel %vm143, %v1220, 0
    %v1248 = vsel %vm143, %v1221, 0
    %v1251 = vsel %vm143, %v1222, 0
    %v1254 = vsel %vm143, %v1223, 0
    %1256 = vmatpush.msra.mxu0 0.0
    %1257 = vmatpush.msra.mxu0 0.0
    %1258 = vmatpush.msra.mxu0 0.0
    %1259 = vmatpush.msra.mxu0 0.0
    %1260 = vmatpush.msra.mxu0 0.0
    %1261 = vmatpush.msra.mxu0 0.0
    %1262 = vmatpush.msra.mxu0 0.0
    %1263 = vmatpush.msra.mxu0 0.0
    %1264 = vmatpush.msra.mxu0 0.0
    %1265 = vmatpush.msra.mxu0 0.0
    %1266 = vmatpush.msra.mxu0 0.0
    %1267 = vmatpush.msra.mxu0 0.0
    %1268 = vmatpush.msra.mxu0 %v1227
    %1269 = vmatpush.msra.mxu0 %v1226
    %1270 = vmatpush.msra.mxu0 %v1225
    %1271 = vmatpush.msra.mxu0 %v1224
    %1272 = vmatmul.f32.gmra.mxu0 %v1233
    %v1273 = vpop.f32.mrf.mxu0
    %v1274 = vadd.f32 %v1230, %v1273
    %1275 = vmatmul.f32.gmra.mxu0 %v1236
    %v1276 = vpop.f32.mrf.mxu0
    %v1277 = vadd.f32 %v1230, %v1276
    %1278 = vmatmul.f32.gmra.mxu0 %v1239
    %v1279 = vpop.f32.mrf.mxu0
    %v1280 = vadd.f32 %v1230, %v1279
    %1281 = vmatmul.f32.gmra.mxu0 %v1242
    %v1282 = vpop.f32.mrf.mxu0
    %v1283 = vadd.f32 %v1230, %v1282
    %1284 = vmatmul.f32.gmra.mxu0 %v1245
    %v1285 = vpop.f32.mrf.mxu0
    %v1286 = vadd.f32 %v1230, %v1285
    %1287 = vmatmul.f32.gmra.mxu0 %v1248
    %v1288 = vpop.f32.mrf.mxu0
    %v1289 = vadd.f32 %v1230, %v1288
    %1290 = vmatmul.f32.gmra.mxu0 %v1251
    %v1291 = vpop.f32.mrf.mxu0
    %v1292 = vadd.f32 %v1230, %v1291
    %1293 = vmatmul.f32.gmra.mxu0 %v1254
    %v1294 = vpop.f32.mrf.mxu0
    %v1295 = vadd.f32 %v1230, %v1294
    %1296 = vdwg.mxu0
    %1297 = vst.msk [vmem:[#allocation2] sm:$0xff] %vm143, %v1274
    %1298 = vst.msk [vmem:[#allocation2 + $0x8] sm:$0xff] %vm143, %v1277
    %1299 = vst.msk [vmem:[#allocation2 + $0x10] sm:$0xff] %vm143, %v1280
    %1300 = vst.msk [vmem:[#allocation2 + $0x18] sm:$0xff] %vm143, %v1283
    %1301 = vst.msk [vmem:[#allocation2 + $0x20] sm:$0xff] %vm143, %v1286
    %1302 = vst.msk [vmem:[#allocation2 + $0x28] sm:$0xff] %vm143, %v1289
    %1303 = vst.msk [vmem:[#allocation2 + $0x30] sm:$0xff] %vm143, %v1292
    %1304 = vst.msk [vmem:[#allocation2 + $0x38] sm:$0xff] %vm143, %v1295
    %s1305 = scalar_lea.vmem %s5, 32
    %v1306 = vld [vmem:[%s1305] sm:$0xff]
    %v1307 = vld [vmem:[%s1305 + $0x8] sm:$0xff]
    %v1308 = vld [vmem:[%s1305 + $0x10] sm:$0xff]
    %v1309 = vld [vmem:[%s1305 + $0x18] sm:$0xff]
    %s1310 = scalar_lea.vmem %s7, 1
    %v1311 = vld [vmem:[%s1310] sm:$0x1]
    %v1313 = vperm.slane %v1311, 0
    %1315 = vmatpush.msra.mxu0 0.0
    %1316 = vmatpush.msra.mxu0 0.0
    %1317 = vmatpush.msra.mxu0 0.0
    %1318 = vmatpush.msra.mxu0 0.0
    %1319 = vmatpush.msra.mxu0 0.0
    %1320 = vmatpush.msra.mxu0 0.0
    %1321 = vmatpush.msra.mxu0 0.0
    %1322 = vmatpush.msra.mxu0 0.0
    %1323 = vmatpush.msra.mxu0 0.0
    %1324 = vmatpush.msra.mxu0 0.0
    %1325 = vmatpush.msra.mxu0 0.0
    %1326 = vmatpush.msra.mxu0 0.0
    %1327 = vmatpush.msra.mxu0 %v1309
    %1328 = vmatpush.msra.mxu0 %v1308
    %1329 = vmatpush.msra.mxu0 %v1307
    %1330 = vmatpush.msra.mxu0 %v1306
    %1331 = vmatmul.f32.gmra.mxu0 %v1233
    %v1332 = vpop.f32.mrf.mxu0
    %v1333 = vadd.f32 %v1313, %v1332
    %1334 = vmatmul.f32.gmra.mxu0 %v1236
    %v1335 = vpop.f32.mrf.mxu0
    %v1336 = vadd.f32 %v1313, %v1335
    %1337 = vmatmul.f32.gmra.mxu0 %v1239
    %v1338 = vpop.f32.mrf.mxu0
    %v1339 = vadd.f32 %v1313, %v1338
    %1340 = vmatmul.f32.gmra.mxu0 %v1242
    %v1341 = vpop.f32.mrf.mxu0
    %v1342 = vadd.f32 %v1313, %v1341
    %1343 = vmatmul.f32.gmra.mxu0 %v1245
    %v1344 = vpop.f32.mrf.mxu0
    %v1345 = vadd.f32 %v1313, %v1344
    %1346 = vmatmul.f32.gmra.mxu0 %v1248
    %v1347 = vpop.f32.mrf.mxu0
    %v1348 = vadd.f32 %v1313, %v1347
    %1349 = vmatmul.f32.gmra.mxu0 %v1251
    %v1350 = vpop.f32.mrf.mxu0
    %v1351 = vadd.f32 %v1313, %v1350
    %1352 = vmatmul.f32.gmra.mxu0 %v1254
    %v1353 = vpop.f32.mrf.mxu0
    %v1354 = vadd.f32 %v1313, %v1353
    %1355 = vdwg.mxu0
    %1356 = vst.msk [vmem:[#allocation3] sm:$0xff] %vm143, %v1333
    %1357 = vst.msk [vmem:[#allocation3 + $0x8] sm:$0xff] %vm143, %v1336
    %1358 = vst.msk [vmem:[#allocation3 + $0x10] sm:$0xff] %vm143, %v1339
    %1359 = vst.msk [vmem:[#allocation3 + $0x18] sm:$0xff] %vm143, %v1342
    %1360 = vst.msk [vmem:[#allocation3 + $0x20] sm:$0xff] %vm143, %v1345
    %1361 = vst.msk [vmem:[#allocation3 + $0x28] sm:$0xff] %vm143, %v1348
    %1362 = vst.msk [vmem:[#allocation3 + $0x30] sm:$0xff] %vm143, %v1351
    %1363 = vst.msk [vmem:[#allocation3 + $0x38] sm:$0xff] %vm143, %v1354
    %s1364 = scalar_lea.vmem %s5, 64
    %v1365 = vld [vmem:[%s1364] sm:$0xff]
    %v1366 = vld [vmem:[%s1364 + $0x8] sm:$0xff]
    %v1367 = vld [vmem:[%s1364 + $0x10] sm:$0xff]
    %v1368 = vld [vmem:[%s1364 + $0x18] sm:$0xff]
    %s1369 = scalar_lea.vmem %s7, 2
    %v1370 = vld [vmem:[%s1369] sm:$0x1]
    %v1372 = vperm.slane %v1370, 0
    %1374 = vmatpush.msra.mxu0 0.0
    %1375 = vmatpush.msra.mxu0 0.0
    %1376 = vmatpush.msra.mxu0 0.0
    %1377 = vmatpush.msra.mxu0 0.0
    %1378 = vmatpush.msra.mxu0 0.0
    %1379 = vmatpush.msra.mxu0 0.0
    %1380 = vmatpush.msra.mxu0 0.0
    %1381 = vmatpush.msra.mxu0 0.0
    %1382 = vmatpush.msra.mxu0 0.0
    %1383 = vmatpush.msra.mxu0 0.0
    %1384 = vmatpush.msra.mxu0 0.0
    %1385 = vmatpush.msra.mxu0 0.0
    %1386 = vmatpush.msra.mxu0 %v1368
    %1387 = vmatpush.msra.mxu0 %v1367
    %1388 = vmatpush.msra.mxu0 %v1366
    %1389 = vmatpush.msra.mxu0 %v1365
    %1390 = vmatmul.f32.gmra.mxu0 %v1233
    %v1391 = vpop.f32.mrf.mxu0
    %v1392 = vadd.f32 %v1372, %v1391
    %1393 = vmatmul.f32.gmra.mxu0 %v1236
    %v1394 = vpop.f32.mrf.mxu0
    %v1395 = vadd.f32 %v1372, %v1394
    %1396 = vmatmul.f32.gmra.mxu0 %v1239
    %v1397 = vpop.f32.mrf.mxu0
    %v1398 = vadd.f32 %v1372, %v1397
    %1399 = vmatmul.f32.gmra.mxu0 %v1242
    %v1400 = vpop.f32.mrf.mxu0
    %v1401 = vadd.f32 %v1372, %v1400
    %1402 = vmatmul.f32.gmra.mxu0 %v1245
    %v1403 = vpop.f32.mrf.mxu0
    %v1404 = vadd.f32 %v1372, %v1403
    %1405 = vmatmul.f32.gmra.mxu0 %v1248
    %v1406 = vpop.f32.mrf.mxu0
    %v1407 = vadd.f32 %v1372, %v1406
    %1408 = vmatmul.f32.gmra.mxu0 %v1251
    %v1409 = vpop.f32.mrf.mxu0
    %v1410 = vadd.f32 %v1372, %v1409
    %1411 = vmatmul.f32.gmra.mxu0 %v1254
    %v1412 = vpop.f32.mrf.mxu0
    %v1413 = vadd.f32 %v1372, %v1412
    %1414 = vdwg.mxu0
    %1415 = vst.msk [vmem:[#allocation4] sm:$0xff] %vm143, %v1392
    %1416 = vst.msk [vmem:[#allocation4 + $0x8] sm:$0xff] %vm143, %v1395
    %1417 = vst.msk [vmem:[#allocation4 + $0x10] sm:$0xff] %vm143, %v1398
    %1418 = vst.msk [vmem:[#allocation4 + $0x18] sm:$0xff] %vm143, %v1401
    %1419 = vst.msk [vmem:[#allocation4 + $0x20] sm:$0xff] %vm143, %v1404
    %1420 = vst.msk [vmem:[#allocation4 + $0x28] sm:$0xff] %vm143, %v1407
    %1421 = vst.msk [vmem:[#allocation4 + $0x30] sm:$0xff] %vm143, %v1410
    %1422 = vst.msk [vmem:[#allocation4 + $0x38] sm:$0xff] %vm143, %v1413
    %v1423 = vld [vmem:[%s6] sm:$0xff]
    %v1424 = vld [vmem:[%s6 + $0x8] sm:$0xff]
    %v1425 = vld [vmem:[%s6 + $0x10] sm:$0xff]
    %v1426 = vld [vmem:[%s6 + $0x18] sm:$0xff]
    %s1427 = scalar_lea.vmem %s6, 32
    %v1428 = vld [vmem:[%s1427] sm:$0xff]
    %v1429 = vld [vmem:[%s1427 + $0x8] sm:$0xff]
    %v1430 = vld [vmem:[%s1427 + $0x10] sm:$0xff]
    %v1431 = vld [vmem:[%s1427 + $0x18] sm:$0xff]
    %s1432 = scalar_lea.vmem %s6, 64
    %v1433 = vld [vmem:[%s1432] sm:$0xff]
    %v1434 = vld [vmem:[%s1432 + $0x8] sm:$0xff]
    %v1435 = vld [vmem:[%s1432 + $0x10] sm:$0xff]
    %v1436 = vld [vmem:[%s1432 + $0x18] sm:$0xff]
    %v1437 = vld [vmem:[%s8] sm:$0x1]
    %1438 = vmatpush.msra.mxu0 0.0
    %1439 = vmatpush.msra.mxu0 0.0
    %1440 = vmatpush.msra.mxu0 0.0
    %1441 = vmatpush.msra.mxu0 0.0
    %1442 = vmatpush.msra.mxu0 0.0
    %1443 = vmatpush.msra.mxu0 0.0
    %1444 = vmatpush.msra.mxu0 0.0
    %1445 = vmatpush.msra.mxu0 0.0
    %1446 = vmatpush.msra.mxu0 0.0
    %1447 = vmatpush.msra.mxu0 0.0
    %1448 = vmatpush.msra.mxu0 0.0
    %1449 = vmatpush.msra.mxu0 0.0
    %1450 = vmatpush.msra.mxu0 %v1426
    %1451 = vmatpush.msra.mxu0 %v1425
    %1452 = vmatpush.msra.mxu0 %v1424
    %1453 = vmatpush.msra.mxu0 %v1423
    %1454 = vmatmul.f32.gmra.mxu0 %v282
    %v1455 = vpop.f32.mrf.mxu0
    %v1456 = vadd.f32 0.0, %v1455
    %1457 = vdwg.mxu0
    %1458 = vmatpush.msra.mxu0 0.0
    %1459 = vmatpush.msra.mxu0 0.0
    %1460 = vmatpush.msra.mxu0 0.0
    %1461 = vmatpush.msra.mxu0 0.0
    %1462 = vmatpush.msra.mxu0 0.0
    %1463 = vmatpush.msra.mxu0 0.0
    %1464 = vmatpush.msra.mxu0 0.0
    %1465 = vmatpush.msra.mxu0 0.0
    %1466 = vmatpush.msra.mxu0 0.0
    %1467 = vmatpush.msra.mxu0 0.0
    %1468 = vmatpush.msra.mxu0 0.0
    %1469 = vmatpush.msra.mxu0 0.0
    %1470 = vmatpush.msra.mxu0 %v1431
    %1471 = vmatpush.msra.mxu0 %v1430
    %1472 = vmatpush.msra.mxu0 %v1429
    %1473 = vmatpush.msra.mxu0 %v1428
    %1474 = vmatmul.f32.gmra.mxu0 %v282
    %v1475 = vpop.f32.mrf.mxu0
    %v1476 = vadd.f32 0.0, %v1475
    %1477 = vdwg.mxu0
    %v1478 = vld [vmem:[#allocation2] sm:$0xff]
    %v1479 = vadd.f32 %v1478, %v1456
    %v1480 = vxor.u32 %v1479, 2147483648
    %v1481 = vmul.f32 %v1480, 1.442695
    %v1482 = vpow.pop %v1481
    %v1483 = vadd.f32 %v1482, 1.0
    %v1484 = vrcp.pop %v1483
    %v1485 = vmul.f32 %v1483, %v1484
    %v1486 = vsub.f32 1.0, %v1485
    %v1487 = vmul.f32 %v1484, %v1486
    %v1488 = vadd.f32 %v1484, %v1487
    %vm1489 = vweird.f32 %v1483
    %vm1490 = vweird.f32 %v1484
    %vm1491 = vmor %vm1489, %vm1490
    %v1492 = vsel %vm1491, %v1484, %v1488
    %v1493 = vand.u32 2147483647, %v1483
    %vm1494 = vcmp.eq.f32.partialorder %v1493, 8.507059e+37
    %v1495 = vand.u32 %v1483, 2147483648
    %v1496 = vor.u32 1.1754944e-38, %v1495
    %v1497 = vsel %vm1494, %v1496, %v1492
    %v1498 = vmul.f32 1.0, %v1497
    %v1499 = vld [vmem:[#allocation3] sm:$0xff]
    %v1500 = vadd.f32 %v1499, %v1476
    %v1501 = vxor.u32 %v1500, 2147483648
    %v1502 = vmul.f32 %v1501, 1.442695
    %v1503 = vpow.pop %v1502
    %v1504 = vadd.f32 %v1503, 1.0
    %v1505 = vrcp.pop %v1504
    %v1506 = vmul.f32 %v1504, %v1505
    %v1507 = vsub.f32 1.0, %v1506
    %v1508 = vmul.f32 %v1505, %v1507
    %v1509 = vadd.f32 %v1505, %v1508
    %vm1510 = vweird.f32 %v1504
    %vm1511 = vweird.f32 %v1505
    %vm1512 = vmor %vm1510, %vm1511
    %v1513 = vsel %vm1512, %v1505, %v1509
    %v1514 = vand.u32 2147483647, %v1504
    %vm1515 = vcmp.eq.f32.partialorder %v1514, 8.507059e+37
    %v1516 = vand.u32 %v1504, 2147483648
    %v1517 = vor.u32 1.1754944e-38, %v1516
    %v1518 = vsel %vm1515, %v1517, %v1513
    %v1519 = vmul.f32 1.0, %v1518
    %v1520 = vld [vmem:[#allocation4] sm:$0xff]
    %v1522 = vperm.slane %v1437, 0
    %1524 = vmatpush.msra.mxu0 0.0
    %1525 = vmatpush.msra.mxu0 0.0
    %1526 = vmatpush.msra.mxu0 0.0
    %1527 = vmatpush.msra.mxu0 0.0
    %1528 = vmatpush.msra.mxu0 0.0
    %1529 = vmatpush.msra.mxu0 0.0
    %1530 = vmatpush.msra.mxu0 0.0
    %1531 = vmatpush.msra.mxu0 0.0
    %1532 = vmatpush.msra.mxu0 0.0
    %1533 = vmatpush.msra.mxu0 0.0
    %1534 = vmatpush.msra.mxu0 0.0
    %1535 = vmatpush.msra.mxu0 0.0
    %1536 = vmatpush.msra.mxu0 %v1436
    %1537 = vmatpush.msra.mxu0 %v1435
    %1538 = vmatpush.msra.mxu0 %v1434
    %1539 = vmatpush.msra.mxu0 %v1433
    %1540 = vmatmul.f32.gmra.mxu0 %v282
    %v1541 = vpop.f32.mrf.mxu0
    %v1542 = vadd.f32 %v1522, %v1541
    %1543 = vdwg.mxu0
    %v1544 = vmul.f32 %v1498, %v1542
    %v1545 = vadd.f32 %v1520, %v1544
    %v1546 = vtanh.pop %v1545
    %v1547 = vsub.f32 0.0, %v1546
    %v1548 = vmul.f32 %v1519, %v1547
    %v1549 = vadd.f32 %v1546, %v1548
    %1550 = vst.msk [vmem:[#allocation5] sm:$0xff] %vm143, %v1549
    %v1552 = vsel %vm143, %v1549, 0
    %1554 = vmatpush.msra.mxu0 0.0
    %1555 = vmatpush.msra.mxu0 0.0
    %1556 = vmatpush.msra.mxu0 0.0
    %1557 = vmatpush.msra.mxu0 0.0
    %1558 = vmatpush.msra.mxu0 0.0
    %1559 = vmatpush.msra.mxu0 0.0
    %1560 = vmatpush.msra.mxu0 0.0
    %1561 = vmatpush.msra.mxu0 0.0
    %1562 = vmatpush.msra.mxu0 0.0
    %1563 = vmatpush.msra.mxu0 0.0
    %1564 = vmatpush.msra.mxu0 0.0
    %1565 = vmatpush.msra.mxu0 0.0
    %1566 = vmatpush.msra.mxu0 %v1426
    %1567 = vmatpush.msra.mxu0 %v1425
    %1568 = vmatpush.msra.mxu0 %v1424
    %1569 = vmatpush.msra.mxu0 %v1423
    %1570 = vmatmul.f32.gmra.mxu0 %v1552
    %v1571 = vpop.f32.mrf.mxu0
    %v1572 = vadd.f32 0.0, %v1571
    %1573 = vdwg.mxu0
    %1574 = vmatpush.msra.mxu0 0.0
    %1575 = vmatpush.msra.mxu0 0.0
    %1576 = vmatpush.msra.mxu0 0.0
    %1577 = vmatpush.msra.mxu0 0.0
    %1578 = vmatpush.msra.mxu0 0.0
    %1579 = vmatpush.msra.mxu0 0.0
    %1580 = vmatpush.msra.mxu0 0.0
    %1581 = vmatpush.msra.mxu0 0.0
    %1582 = vmatpush.msra.mxu0 0.0
    %1583 = vmatpush.msra.mxu0 0.0
    %1584 = vmatpush.msra.mxu0 0.0
    %1585 = vmatpush.msra.mxu0 0.0
    %1586 = vmatpush.msra.mxu0 %v1431
    %1587 = vmatpush.msra.mxu0 %v1430
    %1588 = vmatpush.msra.mxu0 %v1429
    %1589 = vmatpush.msra.mxu0 %v1428
    %1590 = vmatmul.f32.gmra.mxu0 %v1552
    %v1591 = vpop.f32.mrf.mxu0
    %v1592 = vadd.f32 0.0, %v1591
    %1593 = vdwg.mxu0
    %v1594 = vld [vmem:[%s440] sm:$0xff]
    %v1595 = vadd.f32 %v1594, %v1572
    %v1596 = vxor.u32 %v1595, 2147483648
    %v1597 = vmul.f32 %v1596, 1.442695
    %v1598 = vpow.pop %v1597
    %v1599 = vadd.f32 %v1598, 1.0
    %v1600 = vrcp.pop %v1599
    %v1601 = vmul.f32 %v1599, %v1600
    %v1602 = vsub.f32 1.0, %v1601
    %v1603 = vmul.f32 %v1600, %v1602
    %v1604 = vadd.f32 %v1600, %v1603
    %vm1605 = vweird.f32 %v1599
    %vm1606 = vweird.f32 %v1600
    %vm1607 = vmor %vm1605, %vm1606
    %v1608 = vsel %vm1607, %v1600, %v1604
    %v1609 = vand.u32 2147483647, %v1599
    %vm1610 = vcmp.eq.f32.partialorder %v1609, 8.507059e+37
    %v1611 = vand.u32 %v1599, 2147483648
    %v1612 = vor.u32 1.1754944e-38, %v1611
    %v1613 = vsel %vm1610, %v1612, %v1608
    %v1614 = vmul.f32 1.0, %v1613
    %v1615 = vld [vmem:[%s462] sm:$0xff]
    %v1616 = vadd.f32 %v1615, %v1592
    %v1617 = vxor.u32 %v1616, 2147483648
    %v1618 = vmul.f32 %v1617, 1.442695
    %v1619 = vpow.pop %v1618
    %v1620 = vadd.f32 %v1619, 1.0
    %v1621 = vrcp.pop %v1620
    %v1622 = vmul.f32 %v1620, %v1621
    %v1623 = vsub.f32 1.0, %v1622
    %v1624 = vmul.f32 %v1621, %v1623
    %v1625 = vadd.f32 %v1621, %v1624
    %vm1626 = vweird.f32 %v1620
    %vm1627 = vweird.f32 %v1621
    %vm1628 = vmor %vm1626, %vm1627
    %v1629 = vsel %vm1628, %v1621, %v1625
    %v1630 = vand.u32 2147483647, %v1620
    %vm1631 = vcmp.eq.f32.partialorder %v1630, 8.507059e+37
    %v1632 = vand.u32 %v1620, 2147483648
    %v1633 = vor.u32 1.1754944e-38, %v1632
    %v1634 = vsel %vm1631, %v1633, %v1629
    %v1635 = vmul.f32 1.0, %v1634
    %v1636 = vld [vmem:[%s484] sm:$0xff]
    %1637 = vmatpush.msra.mxu0 0.0
    %1638 = vmatpush.msra.mxu0 0.0
    %1639 = vmatpush.msra.mxu0 0.0
    %1640 = vmatpush.msra.mxu0 0.0
    %1641 = vmatpush.msra.mxu0 0.0
    %1642 = vmatpush.msra.mxu0 0.0
    %1643 = vmatpush.msra.mxu0 0.0
    %1644 = vmatpush.msra.mxu0 0.0
    %1645 = vmatpush.msra.mxu0 0.0
    %1646 = vmatpush.msra.mxu0 0.0
    %1647 = vmatpush.msra.mxu0 0.0
    %1648 = vmatpush.msra.mxu0 0.0
    %1649 = vmatpush.msra.mxu0 %v1436
    %1650 = vmatpush.msra.mxu0 %v1435
    %1651 = vmatpush.msra.mxu0 %v1434
    %1652 = vmatpush.msra.mxu0 %v1433
    %1653 = vmatmul.f32.gmra.mxu0 %v1552
    %v1654 = vpop.f32.mrf.mxu0
    %v1655 = vadd.f32 %v1522, %v1654
    %1656 = vdwg.mxu0
    %v1657 = vmul.f32 %v1614, %v1655
    %v1658 = vadd.f32 %v1636, %v1657
    %v1659 = vtanh.pop %v1658
    %v1660 = vsub.f32 %v1549, %v1659
    %v1661 = vmul.f32 %v1635, %v1660
    %v1662 = vadd.f32 %v1659, %v1661
    %1663 = vst.msk [vmem:[%s512] sm:$0xff] %vm143, %v1662
    %v1665 = vsel %vm143, %v1662, 0
    %1667 = vmatpush.msra.mxu0 0.0
    %1668 = vmatpush.msra.mxu0 0.0
    %1669 = vmatpush.msra.mxu0 0.0
    %1670 = vmatpush.msra.mxu0 0.0
    %1671 = vmatpush.msra.mxu0 0.0
    %1672 = vmatpush.msra.mxu0 0.0
    %1673 = vmatpush.msra.mxu0 0.0
    %1674 = vmatpush.msra.mxu0 0.0
    %1675 = vmatpush.msra.mxu0 0.0
    %1676 = vmatpush.msra.mxu0 0.0
    %1677 = vmatpush.msra.mxu0 0.0
    %1678 = vmatpush.msra.mxu0 0.0
    %1679 = vmatpush.msra.mxu0 %v1426
    %1680 = vmatpush.msra.mxu0 %v1425
    %1681 = vmatpush.msra.mxu0 %v1424
    %1682 = vmatpush.msra.mxu0 %v1423
    %1683 = vmatmul.f32.gmra.mxu0 %v1665
    %v1684 = vpop.f32.mrf.mxu0
    %v1685 = vadd.f32 0.0, %v1684
    %1686 = vdwg.mxu0
    %1687 = vmatpush.msra.mxu0 0.0
    %1688 = vmatpush.msra.mxu0 0.0
    %1689 = vmatpush.msra.mxu0 0.0
    %1690 = vmatpush.msra.mxu0 0.0
    %1691 = vmatpush.msra.mxu0 0.0
    %1692 = vmatpush.msra.mxu0 0.0
    %1693 = vmatpush.msra.mxu0 0.0
    %1694 = vmatpush.msra.mxu0 0.0
    %1695 = vmatpush.msra.mxu0 0.0
    %1696 = vmatpush.msra.mxu0 0.0
    %1697 = vmatpush.msra.mxu0 0.0
    %1698 = vmatpush.msra.mxu0 0.0
    %1699 = vmatpush.msra.mxu0 %v1431
    %1700 = vmatpush.msra.mxu0 %v1430
    %1701 = vmatpush.msra.mxu0 %v1429
    %1702 = vmatpush.msra.mxu0 %v1428
    %1703 = vmatmul.f32.gmra.mxu0 %v1665
    %v1704 = vpop.f32.mrf.mxu0
    %v1705 = vadd.f32 0.0, %v1704
    %1706 = vdwg.mxu0
    %v1707 = vld [vmem:[%s557] sm:$0xff]
    %v1708 = vadd.f32 %v1707, %v1685
    %v1709 = vxor.u32 %v1708, 2147483648
    %v1710 = vmul.f32 %v1709, 1.442695
    %v1711 = vpow.pop %v1710
    %v1712 = vadd.f32 %v1711, 1.0
    %v1713 = vrcp.pop %v1712
    %v1714 = vmul.f32 %v1712, %v1713
    %v1715 = vsub.f32 1.0, %v1714
    %v1716 = vmul.f32 %v1713, %v1715
    %v1717 = vadd.f32 %v1713, %v1716
    %vm1718 = vweird.f32 %v1712
    %vm1719 = vweird.f32 %v1713
    %vm1720 = vmor %vm1718, %vm1719
    %v1721 = vsel %vm1720, %v1713, %v1717
    %v1722 = vand.u32 2147483647, %v1712
    %vm1723 = vcmp.eq.f32.partialorder %v1722, 8.507059e+37
    %v1724 = vand.u32 %v1712, 2147483648
    %v1725 = vor.u32 1.1754944e-38, %v1724
    %v1726 = vsel %vm1723, %v1725, %v1721
    %v1727 = vmul.f32 1.0, %v1726
    %v1728 = vld [vmem:[%s579] sm:$0xff]
    %v1729 = vadd.f32 %v1728, %v1705
    %v1730 = vxor.u32 %v1729, 2147483648
    %v1731 = vmul.f32 %v1730, 1.442695
    %v1732 = vpow.pop %v1731
    %v1733 = vadd.f32 %v1732, 1.0
    %v1734 = vrcp.pop %v1733
    %v1735 = vmul.f32 %v1733, %v1734
    %v1736 = vsub.f32 1.0, %v1735
    %v1737 = vmul.f32 %v1734, %v1736
    %v1738 = vadd.f32 %v1734, %v1737
    %vm1739 = vweird.f32 %v1733
    %vm1740 = vweird.f32 %v1734
    %vm1741 = vmor %vm1739, %vm1740
    %v1742 = vsel %vm1741, %v1734, %v1738
    %v1743 = vand.u32 2147483647, %v1733
    %vm1744 = vcmp.eq.f32.partialorder %v1743, 8.507059e+37
    %v1745 = vand.u32 %v1733, 2147483648
    %v1746 = vor.u32 1.1754944e-38, %v1745
    %v1747 = vsel %vm1744, %v1746, %v1742
    %v1748 = vmul.f32 1.0, %v1747
    %v1749 = vld [vmem:[%s601] sm:$0xff]
    %1750 = vmatpush.msra.mxu0 0.0
    %1751 = vmatpush.msra.mxu0 0.0
    %1752 = vmatpush.msra.mxu0 0.0
    %1753 = vmatpush.msra.mxu0 0.0
    %1754 = vmatpush.msra.mxu0 0.0
    %1755 = vmatpush.msra.mxu0 0.0
    %1756 = vmatpush.msra.mxu0 0.0
    %1757 = vmatpush.msra.mxu0 0.0
    %1758 = vmatpush.msra.mxu0 0.0
    %1759 = vmatpush.msra.mxu0 0.0
    %1760 = vmatpush.msra.mxu0 0.0
    %1761 = vmatpush.msra.mxu0 0.0
    %1762 = vmatpush.msra.mxu0 %v1436
    %1763 = vmatpush.msra.mxu0 %v1435
    %1764 = vmatpush.msra.mxu0 %v1434
    %1765 = vmatpush.msra.mxu0 %v1433
    %1766 = vmatmul.f32.gmra.mxu0 %v1665
    %v1767 = vpop.f32.mrf.mxu0
    %v1768 = vadd.f32 %v1522, %v1767
    %1769 = vdwg.mxu0
    %v1770 = vmul.f32 %v1727, %v1768
    %v1771 = vadd.f32 %v1749, %v1770
    %v1772 = vtanh.pop %v1771
    %v1773 = vsub.f32 %v1662, %v1772
    %v1774 = vmul.f32 %v1748, %v1773
    %v1775 = vadd.f32 %v1772, %v1774
    %1776 = vst.msk [vmem:[%s629] sm:$0xff] %vm143, %v1775
    %v1778 = vsel %vm143, %v1775, 0
    %1780 = vmatpush.msra.mxu0 0.0
    %1781 = vmatpush.msra.mxu0 0.0
    %1782 = vmatpush.msra.mxu0 0.0
    %1783 = vmatpush.msra.mxu0 0.0
    %1784 = vmatpush.msra.mxu0 0.0
    %1785 = vmatpush.msra.mxu0 0.0
    %1786 = vmatpush.msra.mxu0 0.0
    %1787 = vmatpush.msra.mxu0 0.0
    %1788 = vmatpush.msra.mxu0 0.0
    %1789 = vmatpush.msra.mxu0 0.0
    %1790 = vmatpush.msra.mxu0 0.0
    %1791 = vmatpush.msra.mxu0 0.0
    %1792 = vmatpush.msra.mxu0 %v1426
    %1793 = vmatpush.msra.mxu0 %v1425
    %1794 = vmatpush.msra.mxu0 %v1424
    %1795 = vmatpush.msra.mxu0 %v1423
    %1796 = vmatmul.f32.gmra.mxu0 %v1778
    %v1797 = vpop.f32.mrf.mxu0
    %v1798 = vadd.f32 0.0, %v1797
    %1799 = vdwg.mxu0
    %1800 = vmatpush.msra.mxu0 0.0
    %1801 = vmatpush.msra.mxu0 0.0
    %1802 = vmatpush.msra.mxu0 0.0
    %1803 = vmatpush.msra.mxu0 0.0
    %1804 = vmatpush.msra.mxu0 0.0
    %1805 = vmatpush.msra.mxu0 0.0
    %1806 = vmatpush.msra.mxu0 0.0
    %1807 = vmatpush.msra.mxu0 0.0
    %1808 = vmatpush.msra.mxu0 0.0
    %1809 = vmatpush.msra.mxu0 0.0
    %1810 = vmatpush.msra.mxu0 0.0
    %1811 = vmatpush.msra.mxu0 0.0
    %1812 = vmatpush.msra.mxu0 %v1431
    %1813 = vmatpush.msra.mxu0 %v1430
    %1814 = vmatpush.msra.mxu0 %v1429
    %1815 = vmatpush.msra.mxu0 %v1428
    %1816 = vmatmul.f32.gmra.mxu0 %v1778
    %v1817 = vpop.f32.mrf.mxu0
    %v1818 = vadd.f32 0.0, %v1817
    %1819 = vdwg.mxu0
    %v1820 = vld [vmem:[%s674] sm:$0xff]
    %v1821 = vadd.f32 %v1820, %v1798
    %v1822 = vxor.u32 %v1821, 2147483648
    %v1823 = vmul.f32 %v1822, 1.442695
    %v1824 = vpow.pop %v1823
    %v1825 = vadd.f32 %v1824, 1.0
    %v1826 = vrcp.pop %v1825
    %v1827 = vmul.f32 %v1825, %v1826
    %v1828 = vsub.f32 1.0, %v1827
    %v1829 = vmul.f32 %v1826, %v1828
    %v1830 = vadd.f32 %v1826, %v1829
    %vm1831 = vweird.f32 %v1825
    %vm1832 = vweird.f32 %v1826
    %vm1833 = vmor %vm1831, %vm1832
    %v1834 = vsel %vm1833, %v1826, %v1830
    %v1835 = vand.u32 2147483647, %v1825
    %vm1836 = vcmp.eq.f32.partialorder %v1835, 8.507059e+37
    %v1837 = vand.u32 %v1825, 2147483648
    %v1838 = vor.u32 1.1754944e-38, %v1837
    %v1839 = vsel %vm1836, %v1838, %v1834
    %v1840 = vmul.f32 1.0, %v1839
    %v1841 = vld [vmem:[%s696] sm:$0xff]
    %v1842 = vadd.f32 %v1841, %v1818
    %v1843 = vxor.u32 %v1842, 2147483648
    %v1844 = vmul.f32 %v1843, 1.442695
    %v1845 = vpow.pop %v1844
    %v1846 = vadd.f32 %v1845, 1.0
    %v1847 = vrcp.pop %v1846
    %v1848 = vmul.f32 %v1846, %v1847
    %v1849 = vsub.f32 1.0, %v1848
    %v1850 = vmul.f32 %v1847, %v1849
    %v1851 = vadd.f32 %v1847, %v1850
    %vm1852 = vweird.f32 %v1846
    %vm1853 = vweird.f32 %v1847
    %vm1854 = vmor %vm1852, %vm1853
    %v1855 = vsel %vm1854, %v1847, %v1851
    %v1856 = vand.u32 2147483647, %v1846
    %vm1857 = vcmp.eq.f32.partialorder %v1856, 8.507059e+37
    %v1858 = vand.u32 %v1846, 2147483648
    %v1859 = vor.u32 1.1754944e-38, %v1858
    %v1860 = vsel %vm1857, %v1859, %v1855
    %v1861 = vmul.f32 1.0, %v1860
    %v1862 = vld [vmem:[%s718] sm:$0xff]
    %1863 = vmatpush.msra.mxu0 0.0
    %1864 = vmatpush.msra.mxu0 0.0
    %1865 = vmatpush.msra.mxu0 0.0
    %1866 = vmatpush.msra.mxu0 0.0
    %1867 = vmatpush.msra.mxu0 0.0
    %1868 = vmatpush.msra.mxu0 0.0
    %1869 = vmatpush.msra.mxu0 0.0
    %1870 = vmatpush.msra.mxu0 0.0
    %1871 = vmatpush.msra.mxu0 0.0
    %1872 = vmatpush.msra.mxu0 0.0
    %1873 = vmatpush.msra.mxu0 0.0
    %1874 = vmatpush.msra.mxu0 0.0
    %1875 = vmatpush.msra.mxu0 %v1436
    %1876 = vmatpush.msra.mxu0 %v1435
    %1877 = vmatpush.msra.mxu0 %v1434
    %1878 = vmatpush.msra.mxu0 %v1433
    %1879 = vmatmul.f32.gmra.mxu0 %v1778
    %v1880 = vpop.f32.mrf.mxu0
    %v1881 = vadd.f32 %v1522, %v1880
    %1882 = vdwg.mxu0
    %v1883 = vmul.f32 %v1840, %v1881
    %v1884 = vadd.f32 %v1862, %v1883
    %v1885 = vtanh.pop %v1884
    %v1886 = vsub.f32 %v1775, %v1885
    %v1887 = vmul.f32 %v1861, %v1886
    %v1888 = vadd.f32 %v1885, %v1887
    %1889 = vst.msk [vmem:[%s746] sm:$0xff] %vm143, %v1888
    %v1891 = vsel %vm143, %v1888, 0
    %1893 = vmatpush.msra.mxu0 0.0
    %1894 = vmatpush.msra.mxu0 0.0
    %1895 = vmatpush.msra.mxu0 0.0
    %1896 = vmatpush.msra.mxu0 0.0
    %1897 = vmatpush.msra.mxu0 0.0
    %1898 = vmatpush.msra.mxu0 0.0
    %1899 = vmatpush.msra.mxu0 0.0
    %1900 = vmatpush.msra.mxu0 0.0
    %1901 = vmatpush.msra.mxu0 0.0
    %1902 = vmatpush.msra.mxu0 0.0
    %1903 = vmatpush.msra.mxu0 0.0
    %1904 = vmatpush.msra.mxu0 0.0
    %1905 = vmatpush.msra.mxu0 %v1426
    %1906 = vmatpush.msra.mxu0 %v1425
    %1907 = vmatpush.msra.mxu0 %v1424
    %1908 = vmatpush.msra.mxu0 %v1423
    %1909 = vmatmul.f32.gmra.mxu0 %v1891
    %v1910 = vpop.f32.mrf.mxu0
    %v1911 = vadd.f32 0.0, %v1910
    %1912 = vdwg.mxu0
    %1913 = vmatpush.msra.mxu0 0.0
    %1914 = vmatpush.msra.mxu0 0.0
    %1915 = vmatpush.msra.mxu0 0.0
    %1916 = vmatpush.msra.mxu0 0.0
    %1917 = vmatpush.msra.mxu0 0.0
    %1918 = vmatpush.msra.mxu0 0.0
    %1919 = vmatpush.msra.mxu0 0.0
    %1920 = vmatpush.msra.mxu0 0.0
    %1921 = vmatpush.msra.mxu0 0.0
    %1922 = vmatpush.msra.mxu0 0.0
    %1923 = vmatpush.msra.mxu0 0.0
    %1924 = vmatpush.msra.mxu0 0.0
    %1925 = vmatpush.msra.mxu0 %v1431
    %1926 = vmatpush.msra.mxu0 %v1430
    %1927 = vmatpush.msra.mxu0 %v1429
    %1928 = vmatpush.msra.mxu0 %v1428
    %1929 = vmatmul.f32.gmra.mxu0 %v1891
    %v1930 = vpop.f32.mrf.mxu0
    %v1931 = vadd.f32 0.0, %v1930
    %1932 = vdwg.mxu0
    %v1933 = vld [vmem:[%s791] sm:$0xff]
    %v1934 = vadd.f32 %v1933, %v1911
    %v1935 = vxor.u32 %v1934, 2147483648
    %v1936 = vmul.f32 %v1935, 1.442695
    %v1937 = vpow.pop %v1936
    %v1938 = vadd.f32 %v1937, 1.0
    %v1939 = vrcp.pop %v1938
    %v1940 = vmul.f32 %v1938, %v1939
    %v1941 = vsub.f32 1.0, %v1940
    %v1942 = vmul.f32 %v1939, %v1941
    %v1943 = vadd.f32 %v1939, %v1942
    %vm1944 = vweird.f32 %v1938
    %vm1945 = vweird.f32 %v1939
    %vm1946 = vmor %vm1944, %vm1945
    %v1947 = vsel %vm1946, %v1939, %v1943
    %v1948 = vand.u32 2147483647, %v1938
    %vm1949 = vcmp.eq.f32.partialorder %v1948, 8.507059e+37
    %v1950 = vand.u32 %v1938, 2147483648
    %v1951 = vor.u32 1.1754944e-38, %v1950
    %v1952 = vsel %vm1949, %v1951, %v1947
    %v1953 = vmul.f32 1.0, %v1952
    %v1954 = vld [vmem:[%s813] sm:$0xff]
    %v1955 = vadd.f32 %v1954, %v1931
    %v1956 = vxor.u32 %v1955, 2147483648
    %v1957 = vmul.f32 %v1956, 1.442695
    %v1958 = vpow.pop %v1957
    %v1959 = vadd.f32 %v1958, 1.0
    %v1960 = vrcp.pop %v1959
    %v1961 = vmul.f32 %v1959, %v1960
    %v1962 = vsub.f32 1.0, %v1961
    %v1963 = vmul.f32 %v1960, %v1962
    %v1964 = vadd.f32 %v1960, %v1963
    %vm1965 = vweird.f32 %v1959
    %vm1966 = vweird.f32 %v1960
    %vm1967 = vmor %vm1965, %vm1966
    %v1968 = vsel %vm1967, %v1960, %v1964
    %v1969 = vand.u32 2147483647, %v1959
    %vm1970 = vcmp.eq.f32.partialorder %v1969, 8.507059e+37
    %v1971 = vand.u32 %v1959, 2147483648
    %v1972 = vor.u32 1.1754944e-38, %v1971
    %v1973 = vsel %vm1970, %v1972, %v1968
    %v1974 = vmul.f32 1.0, %v1973
    %v1975 = vld [vmem:[%s835] sm:$0xff]
    %1976 = vmatpush.msra.mxu0 0.0
    %1977 = vmatpush.msra.mxu0 0.0
    %1978 = vmatpush.msra.mxu0 0.0
    %1979 = vmatpush.msra.mxu0 0.0
    %1980 = vmatpush.msra.mxu0 0.0
    %1981 = vmatpush.msra.mxu0 0.0
    %1982 = vmatpush.msra.mxu0 0.0
    %1983 = vmatpush.msra.mxu0 0.0
    %1984 = vmatpush.msra.mxu0 0.0
    %1985 = vmatpush.msra.mxu0 0.0
    %1986 = vmatpush.msra.mxu0 0.0
    %1987 = vmatpush.msra.mxu0 0.0
    %1988 = vmatpush.msra.mxu0 %v1436
    %1989 = vmatpush.msra.mxu0 %v1435
    %1990 = vmatpush.msra.mxu0 %v1434
    %1991 = vmatpush.msra.mxu0 %v1433
    %1992 = vmatmul.f32.gmra.mxu0 %v1891
    %v1993 = vpop.f32.mrf.mxu0
    %v1994 = vadd.f32 %v1522, %v1993
    %1995 = vdwg.mxu0
    %v1996 = vmul.f32 %v1953, %v1994
    %v1997 = vadd.f32 %v1975, %v1996
    %v1998 = vtanh.pop %v1997
    %v1999 = vsub.f32 %v1888, %v1998
    %v2000 = vmul.f32 %v1974, %v1999
    %v2001 = vadd.f32 %v1998, %v2000
    %2002 = vst.msk [vmem:[%s863] sm:$0xff] %vm143, %v2001
    %v2004 = vsel %vm143, %v2001, 0
    %2006 = vmatpush.msra.mxu0 0.0
    %2007 = vmatpush.msra.mxu0 0.0
    %2008 = vmatpush.msra.mxu0 0.0
    %2009 = vmatpush.msra.mxu0 0.0
    %2010 = vmatpush.msra.mxu0 0.0
    %2011 = vmatpush.msra.mxu0 0.0
    %2012 = vmatpush.msra.mxu0 0.0
    %2013 = vmatpush.msra.mxu0 0.0
    %2014 = vmatpush.msra.mxu0 0.0
    %2015 = vmatpush.msra.mxu0 0.0
    %2016 = vmatpush.msra.mxu0 0.0
    %2017 = vmatpush.msra.mxu0 0.0
    %2018 = vmatpush.msra.mxu0 %v1426
    %2019 = vmatpush.msra.mxu0 %v1425
    %2020 = vmatpush.msra.mxu0 %v1424
    %2021 = vmatpush.msra.mxu0 %v1423
    %2022 = vmatmul.f32.gmra.mxu0 %v2004
    %v2023 = vpop.f32.mrf.mxu0
    %v2024 = vadd.f32 0.0, %v2023
    %2025 = vdwg.mxu0
    %2026 = vmatpush.msra.mxu0 0.0
    %2027 = vmatpush.msra.mxu0 0.0
    %2028 = vmatpush.msra.mxu0 0.0
    %2029 = vmatpush.msra.mxu0 0.0
    %2030 = vmatpush.msra.mxu0 0.0
    %2031 = vmatpush.msra.mxu0 0.0
    %2032 = vmatpush.msra.mxu0 0.0
    %2033 = vmatpush.msra.mxu0 0.0
    %2034 = vmatpush.msra.mxu0 0.0
    %2035 = vmatpush.msra.mxu0 0.0
    %2036 = vmatpush.msra.mxu0 0.0
    %2037 = vmatpush.msra.mxu0 0.0
    %2038 = vmatpush.msra.mxu0 %v1431
    %2039 = vmatpush.msra.mxu0 %v1430
    %2040 = vmatpush.msra.mxu0 %v1429
    %2041 = vmatpush.msra.mxu0 %v1428
    %2042 = vmatmul.f32.gmra.mxu0 %v2004
    %v2043 = vpop.f32.mrf.mxu0
    %v2044 = vadd.f32 0.0, %v2043
    %2045 = vdwg.mxu0
    %v2046 = vld [vmem:[%s908] sm:$0xff]
    %v2047 = vadd.f32 %v2046, %v2024
    %v2048 = vxor.u32 %v2047, 2147483648
    %v2049 = vmul.f32 %v2048, 1.442695
    %v2050 = vpow.pop %v2049
    %v2051 = vadd.f32 %v2050, 1.0
    %v2052 = vrcp.pop %v2051
    %v2053 = vmul.f32 %v2051, %v2052
    %v2054 = vsub.f32 1.0, %v2053
    %v2055 = vmul.f32 %v2052, %v2054
    %v2056 = vadd.f32 %v2052, %v2055
    %vm2057 = vweird.f32 %v2051
    %vm2058 = vweird.f32 %v2052
    %vm2059 = vmor %vm2057, %vm2058
    %v2060 = vsel %vm2059, %v2052, %v2056
    %v2061 = vand.u32 2147483647, %v2051
    %vm2062 = vcmp.eq.f32.partialorder %v2061, 8.507059e+37
    %v2063 = vand.u32 %v2051, 2147483648
    %v2064 = vor.u32 1.1754944e-38, %v2063
    %v2065 = vsel %vm2062, %v2064, %v2060
    %v2066 = vmul.f32 1.0, %v2065
    %v2067 = vld [vmem:[%s930] sm:$0xff]
    %v2068 = vadd.f32 %v2067, %v2044
    %v2069 = vxor.u32 %v2068, 2147483648
    %v2070 = vmul.f32 %v2069, 1.442695
    %v2071 = vpow.pop %v2070
    %v2072 = vadd.f32 %v2071, 1.0
    %v2073 = vrcp.pop %v2072
    %v2074 = vmul.f32 %v2072, %v2073
    %v2075 = vsub.f32 1.0, %v2074
    %v2076 = vmul.f32 %v2073, %v2075
    %v2077 = vadd.f32 %v2073, %v2076
    %vm2078 = vweird.f32 %v2072
    %vm2079 = vweird.f32 %v2073
    %vm2080 = vmor %vm2078, %vm2079
    %v2081 = vsel %vm2080, %v2073, %v2077
    %v2082 = vand.u32 2147483647, %v2072
    %vm2083 = vcmp.eq.f32.partialorder %v2082, 8.507059e+37
    %v2084 = vand.u32 %v2072, 2147483648
    %v2085 = vor.u32 1.1754944e-38, %v2084
    %v2086 = vsel %vm2083, %v2085, %v2081
    %v2087 = vmul.f32 1.0, %v2086
    %v2088 = vld [vmem:[%s952] sm:$0xff]
    %2089 = vmatpush.msra.mxu0 0.0
    %2090 = vmatpush.msra.mxu0 0.0
    %2091 = vmatpush.msra.mxu0 0.0
    %2092 = vmatpush.msra.mxu0 0.0
    %2093 = vmatpush.msra.mxu0 0.0
    %2094 = vmatpush.msra.mxu0 0.0
    %2095 = vmatpush.msra.mxu0 0.0
    %2096 = vmatpush.msra.mxu0 0.0
    %2097 = vmatpush.msra.mxu0 0.0
    %2098 = vmatpush.msra.mxu0 0.0
    %2099 = vmatpush.msra.mxu0 0.0
    %2100 = vmatpush.msra.mxu0 0.0
    %2101 = vmatpush.msra.mxu0 %v1436
    %2102 = vmatpush.msra.mxu0 %v1435
    %2103 = vmatpush.msra.mxu0 %v1434
    %2104 = vmatpush.msra.mxu0 %v1433
    %2105 = vmatmul.f32.gmra.mxu0 %v2004
    %v2106 = vpop.f32.mrf.mxu0
    %v2107 = vadd.f32 %v1522, %v2106
    %2108 = vdwg.mxu0
    %v2109 = vmul.f32 %v2066, %v2107
    %v2110 = vadd.f32 %v2088, %v2109
    %v2111 = vtanh.pop %v2110
    %v2112 = vsub.f32 %v2001, %v2111
    %v2113 = vmul.f32 %v2087, %v2112
    %v2114 = vadd.f32 %v2111, %v2113
    %2115 = vst.msk [vmem:[%s980] sm:$0xff] %vm143, %v2114
    %v2117 = vsel %vm143, %v2114, 0
    %2119 = vmatpush.msra.mxu0 0.0
    %2120 = vmatpush.msra.mxu0 0.0
    %2121 = vmatpush.msra.mxu0 0.0
    %2122 = vmatpush.msra.mxu0 0.0
    %2123 = vmatpush.msra.mxu0 0.0
    %2124 = vmatpush.msra.mxu0 0.0
    %2125 = vmatpush.msra.mxu0 0.0
    %2126 = vmatpush.msra.mxu0 0.0
    %2127 = vmatpush.msra.mxu0 0.0
    %2128 = vmatpush.msra.mxu0 0.0
    %2129 = vmatpush.msra.mxu0 0.0
    %2130 = vmatpush.msra.mxu0 0.0
    %2131 = vmatpush.msra.mxu0 %v1426
    %2132 = vmatpush.msra.mxu0 %v1425
    %2133 = vmatpush.msra.mxu0 %v1424
    %2134 = vmatpush.msra.mxu0 %v1423
    %2135 = vmatmul.f32.gmra.mxu0 %v2117
    %v2136 = vpop.f32.mrf.mxu0
    %v2137 = vadd.f32 0.0, %v2136
    %2138 = vdwg.mxu0
    %2139 = vmatpush.msra.mxu0 0.0
    %2140 = vmatpush.msra.mxu0 0.0
    %2141 = vmatpush.msra.mxu0 0.0
    %2142 = vmatpush.msra.mxu0 0.0
    %2143 = vmatpush.msra.mxu0 0.0
    %2144 = vmatpush.msra.mxu0 0.0
    %2145 = vmatpush.msra.mxu0 0.0
    %2146 = vmatpush.msra.mxu0 0.0
    %2147 = vmatpush.msra.mxu0 0.0
    %2148 = vmatpush.msra.mxu0 0.0
    %2149 = vmatpush.msra.mxu0 0.0
    %2150 = vmatpush.msra.mxu0 0.0
    %2151 = vmatpush.msra.mxu0 %v1431
    %2152 = vmatpush.msra.mxu0 %v1430
    %2153 = vmatpush.msra.mxu0 %v1429
    %2154 = vmatpush.msra.mxu0 %v1428
    %2155 = vmatmul.f32.gmra.mxu0 %v2117
    %v2156 = vpop.f32.mrf.mxu0
    %v2157 = vadd.f32 0.0, %v2156
    %2158 = vdwg.mxu0
    %v2159 = vld [vmem:[%s1025] sm:$0xff]
    %v2160 = vadd.f32 %v2159, %v2137
    %v2161 = vxor.u32 %v2160, 2147483648
    %v2162 = vmul.f32 %v2161, 1.442695
    %v2163 = vpow.pop %v2162
    %v2164 = vadd.f32 %v2163, 1.0
    %v2165 = vrcp.pop %v2164
    %v2166 = vmul.f32 %v2164, %v2165
    %v2167 = vsub.f32 1.0, %v2166
    %v2168 = vmul.f32 %v2165, %v2167
    %v2169 = vadd.f32 %v2165, %v2168
    %vm2170 = vweird.f32 %v2164
    %vm2171 = vweird.f32 %v2165
    %vm2172 = vmor %vm2170, %vm2171
    %v2173 = vsel %vm2172, %v2165, %v2169
    %v2174 = vand.u32 2147483647, %v2164
    %vm2175 = vcmp.eq.f32.partialorder %v2174, 8.507059e+37
    %v2176 = vand.u32 %v2164, 2147483648
    %v2177 = vor.u32 1.1754944e-38, %v2176
    %v2178 = vsel %vm2175, %v2177, %v2173
    %v2179 = vmul.f32 1.0, %v2178
    %v2180 = vld [vmem:[%s1047] sm:$0xff]
    %v2181 = vadd.f32 %v2180, %v2157
    %v2182 = vxor.u32 %v2181, 2147483648
    %v2183 = vmul.f32 %v2182, 1.442695
    %v2184 = vpow.pop %v2183
    %v2185 = vadd.f32 %v2184, 1.0
    %v2186 = vrcp.pop %v2185
    %v2187 = vmul.f32 %v2185, %v2186
    %v2188 = vsub.f32 1.0, %v2187
    %v2189 = vmul.f32 %v2186, %v2188
    %v2190 = vadd.f32 %v2186, %v2189
    %vm2191 = vweird.f32 %v2185
    %vm2192 = vweird.f32 %v2186
    %vm2193 = vmor %vm2191, %vm2192
    %v2194 = vsel %vm2193, %v2186, %v2190
    %v2195 = vand.u32 2147483647, %v2185
    %vm2196 = vcmp.eq.f32.partialorder %v2195, 8.507059e+37
    %v2197 = vand.u32 %v2185, 2147483648
    %v2198 = vor.u32 1.1754944e-38, %v2197
    %v2199 = vsel %vm2196, %v2198, %v2194
    %v2200 = vmul.f32 1.0, %v2199
    %v2201 = vld [vmem:[%s1069] sm:$0xff]
    %2202 = vmatpush.msra.mxu0 0.0
    %2203 = vmatpush.msra.mxu0 0.0
    %2204 = vmatpush.msra.mxu0 0.0
    %2205 = vmatpush.msra.mxu0 0.0
    %2206 = vmatpush.msra.mxu0 0.0
    %2207 = vmatpush.msra.mxu0 0.0
    %2208 = vmatpush.msra.mxu0 0.0
    %2209 = vmatpush.msra.mxu0 0.0
    %2210 = vmatpush.msra.mxu0 0.0
    %2211 = vmatpush.msra.mxu0 0.0
    %2212 = vmatpush.msra.mxu0 0.0
    %2213 = vmatpush.msra.mxu0 0.0
    %2214 = vmatpush.msra.mxu0 %v1436
    %2215 = vmatpush.msra.mxu0 %v1435
    %2216 = vmatpush.msra.mxu0 %v1434
    %2217 = vmatpush.msra.mxu0 %v1433
    %2218 = vmatmul.f32.gmra.mxu0 %v2117
    %v2219 = vpop.f32.mrf.mxu0
    %v2220 = vadd.f32 %v1522, %v2219
    %2221 = vdwg.mxu0
    %v2222 = vmul.f32 %v2179, %v2220
    %v2223 = vadd.f32 %v2201, %v2222
    %v2224 = vtanh.pop %v2223
    %v2225 = vsub.f32 %v2114, %v2224
    %v2226 = vmul.f32 %v2200, %v2225
    %v2227 = vadd.f32 %v2224, %v2226
    %2228 = vst.msk [vmem:[%s1097] sm:$0xff] %vm143, %v2227
    %v2230 = vsel %vm143, %v2227, 0
    %2232 = vmatpush.msra.mxu0 0.0
    %2233 = vmatpush.msra.mxu0 0.0
    %2234 = vmatpush.msra.mxu0 0.0
    %2235 = vmatpush.msra.mxu0 0.0
    %2236 = vmatpush.msra.mxu0 0.0
    %2237 = vmatpush.msra.mxu0 0.0
    %2238 = vmatpush.msra.mxu0 0.0
    %2239 = vmatpush.msra.mxu0 0.0
    %2240 = vmatpush.msra.mxu0 0.0
    %2241 = vmatpush.msra.mxu0 0.0
    %2242 = vmatpush.msra.mxu0 0.0
    %2243 = vmatpush.msra.mxu0 0.0
    %2244 = vmatpush.msra.mxu0 %v1426
    %2245 = vmatpush.msra.mxu0 %v1425
    %2246 = vmatpush.msra.mxu0 %v1424
    %2247 = vmatpush.msra.mxu0 %v1423
    %2248 = vmatmul.f32.gmra.mxu0 %v2230
    %v2249 = vpop.f32.mrf.mxu0
    %v2250 = vadd.f32 0.0, %v2249
    %2251 = vdwg.mxu0
    %2252 = vmatpush.msra.mxu0 0.0
    %2253 = vmatpush.msra.mxu0 0.0
    %2254 = vmatpush.msra.mxu0 0.0
    %2255 = vmatpush.msra.mxu0 0.0
    %2256 = vmatpush.msra.mxu0 0.0
    %2257 = vmatpush.msra.mxu0 0.0
    %2258 = vmatpush.msra.mxu0 0.0
    %2259 = vmatpush.msra.mxu0 0.0
    %2260 = vmatpush.msra.mxu0 0.0
    %2261 = vmatpush.msra.mxu0 0.0
    %2262 = vmatpush.msra.mxu0 0.0
    %2263 = vmatpush.msra.mxu0 0.0
    %2264 = vmatpush.msra.mxu0 %v1431
    %2265 = vmatpush.msra.mxu0 %v1430
    %2266 = vmatpush.msra.mxu0 %v1429
    %2267 = vmatpush.msra.mxu0 %v1428
    %2268 = vmatmul.f32.gmra.mxu0 %v2230
    %v2269 = vpop.f32.mrf.mxu0
    %v2270 = vadd.f32 0.0, %v2269
    %2271 = vdwg.mxu0
    %v2272 = vld [vmem:[%s1142] sm:$0xff]
    %v2273 = vadd.f32 %v2272, %v2250
    %v2274 = vxor.u32 %v2273, 2147483648
    %v2275 = vmul.f32 %v2274, 1.442695
    %v2276 = vpow.pop %v2275
    %v2277 = vadd.f32 %v2276, 1.0
    %v2278 = vrcp.pop %v2277
    %v2279 = vmul.f32 %v2277, %v2278
    %v2280 = vsub.f32 1.0, %v2279
    %v2281 = vmul.f32 %v2278, %v2280
    %v2282 = vadd.f32 %v2278, %v2281
    %vm2283 = vweird.f32 %v2277
    %vm2284 = vweird.f32 %v2278
    %vm2285 = vmor %vm2283, %vm2284
    %v2286 = vsel %vm2285, %v2278, %v2282
    %v2287 = vand.u32 2147483647, %v2277
    %vm2288 = vcmp.eq.f32.partialorder %v2287, 8.507059e+37
    %v2289 = vand.u32 %v2277, 2147483648
    %v2290 = vor.u32 1.1754944e-38, %v2289
    %v2291 = vsel %vm2288, %v2290, %v2286
    %v2292 = vmul.f32 1.0, %v2291
    %v2293 = vld [vmem:[%s1164] sm:$0xff]
    %v2294 = vadd.f32 %v2293, %v2270
    %v2295 = vxor.u32 %v2294, 2147483648
    %v2296 = vmul.f32 %v2295, 1.442695
    %v2297 = vpow.pop %v2296
    %v2298 = vadd.f32 %v2297, 1.0
    %v2299 = vrcp.pop %v2298
    %v2300 = vmul.f32 %v2298, %v2299
    %v2301 = vsub.f32 1.0, %v2300
    %v2302 = vmul.f32 %v2299, %v2301
    %v2303 = vadd.f32 %v2299, %v2302
    %vm2304 = vweird.f32 %v2298
    %vm2305 = vweird.f32 %v2299
    %vm2306 = vmor %vm2304, %vm2305
    %v2307 = vsel %vm2306, %v2299, %v2303
    %v2308 = vand.u32 2147483647, %v2298
    %vm2309 = vcmp.eq.f32.partialorder %v2308, 8.507059e+37
    %v2310 = vand.u32 %v2298, 2147483648
    %v2311 = vor.u32 1.1754944e-38, %v2310
    %v2312 = vsel %vm2309, %v2311, %v2307
    %v2313 = vmul.f32 1.0, %v2312
    %v2314 = vld [vmem:[%s1186] sm:$0xff]
    %2315 = vmatpush.msra.mxu0 0.0
    %2316 = vmatpush.msra.mxu0 0.0
    %2317 = vmatpush.msra.mxu0 0.0
    %2318 = vmatpush.msra.mxu0 0.0
    %2319 = vmatpush.msra.mxu0 0.0
    %2320 = vmatpush.msra.mxu0 0.0
    %2321 = vmatpush.msra.mxu0 0.0
    %2322 = vmatpush.msra.mxu0 0.0
    %2323 = vmatpush.msra.mxu0 0.0
    %2324 = vmatpush.msra.mxu0 0.0
    %2325 = vmatpush.msra.mxu0 0.0
    %2326 = vmatpush.msra.mxu0 0.0
    %2327 = vmatpush.msra.mxu0 %v1436
    %2328 = vmatpush.msra.mxu0 %v1435
    %2329 = vmatpush.msra.mxu0 %v1434
    %2330 = vmatpush.msra.mxu0 %v1433
    %2331 = vmatmul.f32.gmra.mxu0 %v2230
    %v2332 = vpop.f32.mrf.mxu0
    %v2333 = vadd.f32 %v1522, %v2332
    %2334 = vdwg.mxu0
    %v2335 = vmul.f32 %v2292, %v2333
    %v2336 = vadd.f32 %v2314, %v2335
    %v2337 = vtanh.pop %v2336
    %v2338 = vsub.f32 %v2227, %v2337
    %v2339 = vmul.f32 %v2313, %v2338
    %v2340 = vadd.f32 %v2337, %v2339
    %2341 = vst.msk [vmem:[%s1214] sm:$0xff] %vm143, %v2340
    %v2342 = vld [vmem:[#allocation5] sm:$0xff]
    %v2343 = vld [vmem:[#allocation5 + $0x8] sm:$0xff]
    %v2344 = vld [vmem:[#allocation5 + $0x10] sm:$0xff]
    %v2345 = vld [vmem:[#allocation5 + $0x18] sm:$0xff]
    %v2346 = vld [vmem:[#allocation5 + $0x20] sm:$0xff]
    %v2347 = vld [vmem:[#allocation5 + $0x28] sm:$0xff]
    %v2348 = vld [vmem:[#allocation5 + $0x30] sm:$0xff]
    %v2349 = vld [vmem:[#allocation5 + $0x38] sm:$0xff]
    %v2350 = vld [vmem:[#allocation7] sm:$0xff]
    %v2351 = vld [vmem:[#allocation7 + $0x8] sm:$0xff]
    %v2352 = vld [vmem:[#allocation7 + $0x10] sm:$0xff]
    %v2353 = vld [vmem:[#allocation7 + $0x18] sm:$0xff]
    %v2354 = vld [vmem:[%s10] sm:$0x1]
    %v2356 = vperm.slane %v2354, 0
    %v2359 = vsel %vm143, %v2342, 0
    %v2362 = vsel %vm143, %v2343, 0
    %v2365 = vsel %vm143, %v2344, 0
    %v2368 = vsel %vm143, %v2345, 0
    %v2371 = vsel %vm143, %v2346, 0
    %v2374 = vsel %vm143, %v2347, 0
    %v2377 = vsel %vm143, %v2348, 0
    %v2380 = vsel %vm143, %v2349, 0
    %2382 = vmatpush.msra.mxu0 0.0
    %2383 = vmatpush.msra.mxu0 0.0
    %2384 = vmatpush.msra.mxu0 0.0
    %2385 = vmatpush.msra.mxu0 0.0
    %2386 = vmatpush.msra.mxu0 0.0
    %2387 = vmatpush.msra.mxu0 0.0
    %2388 = vmatpush.msra.mxu0 0.0
    %2389 = vmatpush.msra.mxu0 0.0
    %2390 = vmatpush.msra.mxu0 0.0
    %2391 = vmatpush.msra.mxu0 0.0
    %2392 = vmatpush.msra.mxu0 0.0
    %2393 = vmatpush.msra.mxu0 0.0
    %2394 = vmatpush.msra.mxu0 %v2353
    %2395 = vmatpush.msra.mxu0 %v2352
    %2396 = vmatpush.msra.mxu0 %v2351
    %2397 = vmatpush.msra.mxu0 %v2350
    %2398 = vmatmul.f32.gmra.mxu0 %v2359
    %v2399 = vpop.f32.mrf.mxu0
    %v2400 = vadd.f32 %v2356, %v2399
    %2401 = vmatmul.f32.gmra.mxu0 %v2362
    %v2402 = vpop.f32.mrf.mxu0
    %v2403 = vadd.f32 %v2356, %v2402
    %2404 = vmatmul.f32.gmra.mxu0 %v2365
    %v2405 = vpop.f32.mrf.mxu0
    %v2406 = vadd.f32 %v2356, %v2405
    %2407 = vmatmul.f32.gmra.mxu0 %v2368
    %v2408 = vpop.f32.mrf.mxu0
    %v2409 = vadd.f32 %v2356, %v2408
    %2410 = vmatmul.f32.gmra.mxu0 %v2371
    %v2411 = vpop.f32.mrf.mxu0
    %v2412 = vadd.f32 %v2356, %v2411
    %2413 = vmatmul.f32.gmra.mxu0 %v2374
    %v2414 = vpop.f32.mrf.mxu0
    %v2415 = vadd.f32 %v2356, %v2414
    %2416 = vmatmul.f32.gmra.mxu0 %v2377
    %v2417 = vpop.f32.mrf.mxu0
    %v2418 = vadd.f32 %v2356, %v2417
    %2419 = vmatmul.f32.gmra.mxu0 %v2380
    %v2420 = vpop.f32.mrf.mxu0
    %v2421 = vadd.f32 %v2356, %v2420
    %2422 = vdwg.mxu0
    %v2423 = vtanh.pop %v2400
    %v2424 = vtanh.pop %v2403
    %v2425 = vtanh.pop %v2406
    %v2426 = vtanh.pop %v2409
    %v2427 = vtanh.pop %v2412
    %v2428 = vtanh.pop %v2415
    %v2429 = vtanh.pop %v2418
    %v2430 = vtanh.pop %v2421
    %v2431 = vld [vmem:[%s11] sm:$0xff]
    %v2432 = vld [vmem:[%s11 + $0x8] sm:$0xff]
    %v2433 = vld [vmem:[%s11 + $0x10] sm:$0xff]
    %v2434 = vld [vmem:[%s11 + $0x18] sm:$0xff]
    %v2436 = vsel %vm143, %v2423, 0
    %v2439 = vsel %vm143, %v2424, 0
    %v2442 = vsel %vm143, %v2425, 0
    %v2445 = vsel %vm143, %v2426, 0
    %v2448 = vsel %vm143, %v2427, 0
    %v2451 = vsel %vm143, %v2428, 0
    %v2454 = vsel %vm143, %v2429, 0
    %v2457 = vsel %vm143, %v2430, 0
    %2459 = vmatpush.msra.mxu0 0.0
    %2460 = vmatpush.msra.mxu0 0.0
    %2461 = vmatpush.msra.mxu0 0.0
    %2462 = vmatpush.msra.mxu0 0.0
    %2463 = vmatpush.msra.mxu0 0.0
    %2464 = vmatpush.msra.mxu0 0.0
    %2465 = vmatpush.msra.mxu0 0.0
    %2466 = vmatpush.msra.mxu0 0.0
    %2467 = vmatpush.msra.mxu0 0.0
    %2468 = vmatpush.msra.mxu0 0.0
    %2469 = vmatpush.msra.mxu0 0.0
    %2470 = vmatpush.msra.mxu0 0.0
    %2471 = vmatpush.msra.mxu0 %v2434
    %2472 = vmatpush.msra.mxu0 %v2433
    %2473 = vmatpush.msra.mxu0 %v2432
    %2474 = vmatpush.msra.mxu0 %v2431
    %2475 = vmatmul.f32.gmra.mxu0 %v2436
    %v2476 = vpop.f32.mrf.mxu0
    %v2477 = vadd.f32 0.0, %v2476
    %2478 = vmatmul.f32.gmra.mxu0 %v2439
    %v2479 = vpop.f32.mrf.mxu0
    %v2480 = vadd.f32 0.0, %v2479
    %2481 = vmatmul.f32.gmra.mxu0 %v2442
    %v2482 = vpop.f32.mrf.mxu0
    %v2483 = vadd.f32 0.0, %v2482
    %2484 = vmatmul.f32.gmra.mxu0 %v2445
    %v2485 = vpop.f32.mrf.mxu0
    %v2486 = vadd.f32 0.0, %v2485
    %2487 = vmatmul.f32.gmra.mxu0 %v2448
    %v2488 = vpop.f32.mrf.mxu0
    %v2489 = vadd.f32 0.0, %v2488
    %2490 = vmatmul.f32.gmra.mxu0 %v2451
    %v2491 = vpop.f32.mrf.mxu0
    %v2492 = vadd.f32 0.0, %v2491
    %2493 = vmatmul.f32.gmra.mxu0 %v2454
    %v2494 = vpop.f32.mrf.mxu0
    %v2495 = vadd.f32 0.0, %v2494
    %2496 = vmatmul.f32.gmra.mxu0 %v2457
    %v2497 = vpop.f32.mrf.mxu0
    %v2498 = vadd.f32 0.0, %v2497
    %2499 = vdwg.mxu0
    %vm2500 = vcmask 7168
    %2501 = vst.msk [vmem:[#allocation6] sm:$0xff] %vm2500, %v2477
    %2502 = vst.msk [vmem:[#allocation6 + $0x8] sm:$0xff] %vm2500, %v2480
    %2503 = vst.msk [vmem:[#allocation6 + $0x10] sm:$0xff] %vm2500, %v2483
    %2504 = vst.msk [vmem:[#allocation6 + $0x18] sm:$0xff] %vm2500, %v2486
    %2505 = vst.msk [vmem:[#allocation6 + $0x20] sm:$0xff] %vm2500, %v2489
    %2506 = vst.msk [vmem:[#allocation6 + $0x28] sm:$0xff] %vm2500, %v2492
    %2507 = vst.msk [vmem:[#allocation6 + $0x30] sm:$0xff] %vm2500, %v2495
    %2508 = vst.msk [vmem:[#allocation6 + $0x38] sm:$0xff] %vm2500, %v2498
    %v2509 = vld [vmem:[#allocation6] sm:$0xff]
    %s2510 = scalar_lea.vmem [#allocation6], 8
    %v2511 = vld [vmem:[%s2510] sm:$0xff]
    %v2512 = vmax.f32 %v2509, %v2511
    %s2513 = scalar_lea.vmem [#allocation6], 16
    %v2514 = vld [vmem:[%s2513] sm:$0xff]
    %v2515 = vmax.f32 %v2512, %v2514
    %s2516 = scalar_lea.vmem [#allocation6], 24
    %v2517 = vld [vmem:[%s2516] sm:$0xff]
    %v2518 = vmax.f32 %v2515, %v2517
    %s2519 = scalar_lea.vmem [#allocation6], 32
    %v2520 = vld [vmem:[%s2519] sm:$0xff]
    %v2521 = vmax.f32 %v2518, %v2520
    %s2522 = scalar_lea.vmem [#allocation6], 40
    %v2523 = vld [vmem:[%s2522] sm:$0xff]
    %v2524 = vmax.f32 %v2521, %v2523
    %s2525 = scalar_lea.vmem [#allocation6], 48
    %v2526 = vld [vmem:[%s2525] sm:$0xff]
    %v2527 = vmax.f32 %v2524, %v2526
    %s2528 = scalar_lea.vmem [#allocation6], 56
    %v2529 = vld [vmem:[%s2528] sm:$0xff]
    %v2530 = vmax.f32 %v2527, %v2529
    %v2531 = vsub.f32 %v2509, %v2530
    %v2532 = vmul.f32 %v2531, 1.442695
    %v2533 = vpow.pop %v2532
    %v2534 = vadd.f32 %v2533, 0.0
    %v2535 = vld [vmem:[#allocation5] sm:$0xff]
    %2537 = vset.pattern.permute.xlu0 0
    %2538 = vperm.xlu0 %2537, %v2533
    %v2539 = vpop.permute.xlu0 %2538
    %v2541 = vmul.f32 %v2539, %v2535
    %v2542 = vadd.f32 %v2541, 0.0
    %v2543 = vsub.f32 %v2511, %v2530
    %v2544 = vmul.f32 %v2543, 1.442695
    %v2545 = vpow.pop %v2544
    %v2546 = vadd.f32 %v2534, %v2545
    %v2547 = vld [vmem:[%s512] sm:$0xff]
    %2549 = vset.pattern.permute.xlu0 0
    %2550 = vperm.xlu0 %2549, %v2545
    %v2551 = vpop.permute.xlu0 %2550
    %v2553 = vmul.f32 %v2551, %v2547
    %v2554 = vadd.f32 %v2542, %v2553
    %v2555 = vsub.f32 %v2514, %v2530
    %v2556 = vmul.f32 %v2555, 1.442695
    %v2557 = vpow.pop %v2556
    %v2558 = vadd.f32 %v2546, %v2557
    %v2559 = vld [vmem:[%s629] sm:$0xff]
    %2561 = vset.pattern.permute.xlu0 0
    %2562 = vperm.xlu0 %2561, %v2557
    %v2563 = vpop.permute.xlu0 %2562
    %v2565 = vmul.f32 %v2563, %v2559
    %v2566 = vadd.f32 %v2554, %v2565
    %v2567 = vsub.f32 %v2517, %v2530
    %v2568 = vmul.f32 %v2567, 1.442695
    %v2569 = vpow.pop %v2568
    %v2570 = vadd.f32 %v2558, %v2569
    %v2571 = vld [vmem:[%s746] sm:$0xff]
    %2573 = vset.pattern.permute.xlu0 0
    %2574 = vperm.xlu0 %2573, %v2569
    %v2575 = vpop.permute.xlu0 %2574
    %v2577 = vmul.f32 %v2575, %v2571
    %v2578 = vadd.f32 %v2566, %v2577
    %v2579 = vsub.f32 %v2520, %v2530
    %v2580 = vmul.f32 %v2579, 1.442695
    %v2581 = vpow.pop %v2580
    %v2582 = vadd.f32 %v2570, %v2581
    %v2583 = vld [vmem:[%s863] sm:$0xff]
    %2585 = vset.pattern.permute.xlu0 0
    %2586 = vperm.xlu0 %2585, %v2581
    %v2587 = vpop.permute.xlu0 %2586
    %v2589 = vmul.f32 %v2587, %v2583
    %v2590 = vadd.f32 %v2578, %v2589
    %v2591 = vsub.f32 %v2523, %v2530
    %v2592 = vmul.f32 %v2591, 1.442695
    %v2593 = vpow.pop %v2592
    %v2594 = vadd.f32 %v2582, %v2593
    %v2595 = vld [vmem:[%s980] sm:$0xff]
    %2597 = vset.pattern.permute.xlu0 0
    %2598 = vperm.xlu0 %2597, %v2593
    %v2599 = vpop.permute.xlu0 %2598
    %v2601 = vmul.f32 %v2599, %v2595
    %v2602 = vadd.f32 %v2590, %v2601
    %v2603 = vsub.f32 %v2526, %v2530
    %v2604 = vmul.f32 %v2603, 1.442695
    %v2605 = vpow.pop %v2604
    %v2606 = vadd.f32 %v2594, %v2605
    %v2607 = vld [vmem:[%s1097] sm:$0xff]
    %2609 = vset.pattern.permute.xlu0 0
    %2610 = vperm.xlu0 %2609, %v2605
    %v2611 = vpop.permute.xlu0 %2610
    %v2613 = vmul.f32 %v2611, %v2607
    %v2614 = vadd.f32 %v2602, %v2613
    %v2615 = vsub.f32 %v2529, %v2530
    %v2616 = vmul.f32 %v2615, 1.442695
    %v2617 = vpow.pop %v2616
    %v2618 = vadd.f32 %v2606, %v2617
    %v2619 = vld [vmem:[%s1214] sm:$0xff]
    %2621 = vset.pattern.permute.xlu0 0
    %2622 = vperm.xlu0 %2621, %v2617
    %v2623 = vpop.permute.xlu0 %2622
    %v2625 = vmul.f32 %v2623, %v2619
    %v2626 = vadd.f32 %v2614, %v2625
    %2628 = vset.pattern.permute.xlu0 0
    %2629 = vperm.xlu0 %2628, %v2618
    %v2630 = vpop.permute.xlu0 %2629
    %v2632 = vrcp.pop %v2630
    %v2633 = vmul.f32 %v2630, %v2632
    %v2634 = vsub.f32 1.0, %v2633
    %v2635 = vmul.f32 %v2632, %v2634
    %v2636 = vadd.f32 %v2632, %v2635
    %vm2637 = vweird.f32 %v2630
    %vm2638 = vweird.f32 %v2632
    %vm2639 = vmor %vm2637, %vm2638
    %v2640 = vsel %vm2639, %v2632, %v2636
    %v2641 = vand.u32 2147483647, %v2630
    %vm2642 = vcmp.eq.f32.partialorder %v2641, 8.507059e+37
    %v2643 = vand.u32 %v2630, 2147483648
    %v2644 = vor.u32 1.1754944e-38, %v2643
    %v2645 = vsel %vm2642, %v2644, %v2640
    %v2646 = vmul.f32 %v2626, %v2645
    %v2647 = vld [vmem:[#allocation5 + $0x38] sm:$0xff]
    %v2648 = vld [vmem:[%s12] sm:$0xff]
    %v2649 = vld [vmem:[%s12 + $0x8] sm:$0xff]
    %v2650 = vld [vmem:[%s12 + $0x10] sm:$0xff]
    %v2651 = vld [vmem:[%s12 + $0x18] sm:$0xff]
    %s2652 = scalar_lea.vmem %s12, 32
    %v2653 = vld [vmem:[%s2652] sm:$0xff]
    %v2654 = vld [vmem:[%s2652 + $0x8] sm:$0xff]
    %v2655 = vld [vmem:[%s2652 + $0x10] sm:$0xff]
    %v2656 = vld [vmem:[%s2652 + $0x18] sm:$0xff]
    %v2658 = vsel %vm143, %v2646, 0
    %2660 = vmatpush.msra.mxu0 0.0
    %2661 = vmatpush.msra.mxu0 0.0
    %2662 = vmatpush.msra.mxu0 0.0
    %2663 = vmatpush.msra.mxu0 0.0
    %2664 = vmatpush.msra.mxu0 0.0
    %2665 = vmatpush.msra.mxu0 0.0
    %2666 = vmatpush.msra.mxu0 0.0
    %2667 = vmatpush.msra.mxu0 0.0
    %2668 = vmatpush.msra.mxu0 0.0
    %2669 = vmatpush.msra.mxu0 0.0
    %2670 = vmatpush.msra.mxu0 0.0
    %2671 = vmatpush.msra.mxu0 0.0
    %2672 = vmatpush.msra.mxu0 %v2656
    %2673 = vmatpush.msra.mxu0 %v2655
    %2674 = vmatpush.msra.mxu0 %v2654
    %2675 = vmatpush.msra.mxu0 %v2653
    %2676 = vmatmul.f32.gmra.mxu0 %v2658
    %v2677 = vpop.f32.mrf.mxu0
    %v2678 = vadd.f32 0.0, %v2677
    %2679 = vdwg.mxu0
    %v2681 = vsel %vm143, %v2647, 0
    %2683 = vmatpush.msra.mxu0 0.0
    %2684 = vmatpush.msra.mxu0 0.0
    %2685 = vmatpush.msra.mxu0 0.0
    %2686 = vmatpush.msra.mxu0 0.0
    %2687 = vmatpush.msra.mxu0 0.0
    %2688 = vmatpush.msra.mxu0 0.0
    %2689 = vmatpush.msra.mxu0 0.0
    %2690 = vmatpush.msra.mxu0 0.0
    %2691 = vmatpush.msra.mxu0 0.0
    %2692 = vmatpush.msra.mxu0 0.0
    %2693 = vmatpush.msra.mxu0 0.0
    %2694 = vmatpush.msra.mxu0 0.0
    %2695 = vmatpush.msra.mxu0 %v2651
    %2696 = vmatpush.msra.mxu0 %v2650
    %2697 = vmatpush.msra.mxu0 %v2649
    %2698 = vmatpush.msra.mxu0 %v2648
    %2699 = vmatmul.f32.gmra.mxu0 %v2681
    %v2700 = vpop.f32.mrf.mxu0
    %v2701 = vadd.f32 %v2678, %v2700
    %2702 = vdwg.mxu0
    %v2703 = vld [vmem:[%s13] sm:$0x1]
    %v2705 = vperm.slane %v2703, 0
    %v2707 = vadd.f32 %v2701, %v2705
    %2708 = vst [vmem:[%s14] sm:$0xff] %v2707
    // Predicated region
    $region62: #{gru_model_forward.1} parent=1 // pred_check
      _
    $region63: #{gru_model_forward.1} parent=1 // pred_check_branch
      %2710 = sbr.rel (0) target = $region65
    $region64: #{gru_model_forward.1} parent=1 // pred_region
      _
    $region65: #{gru_model_forward.1} parent=1 // pred_fallthru
      _
    // Predicated region
    $region66: #{gru_model_forward.1} parent=1 // pred_check
      _
    $region67: #{gru_model_forward.1} parent=1 // pred_check_branch
      %2712 = sbr.rel (0) target = $region69
    $region68: #{gru_model_forward.1} parent=1 // pred_region
      _
    $region69: #{gru_model_forward.1} parent=1 // pred_fallthru
      _
    %2713 = vsyncpa [#allocation8], 1

</llo_original>
